<compile_context>
chip_gen: v7x
topology: tpu7x:2x2x1
jax: 0.10.0
libtpu: 0.0.40
codegen_flags: <defaults>
</compile_context>

<pallas_src>
import functools

import jax
import jax.numpy as jnp
from jax.experimental import pallas as pl
from jax.experimental.pallas import tpu as pltpu


# ----------------------------------------------------------------------------
# helpers (XLA-side glue only ever touches 3/9-channel tensors)
# ----------------------------------------------------------------------------
def _round_up(n, m):
    return ((n + m - 1) // m) * m


def _row_tiling(n, max_tile=1024):
    tile = min(max_tile, _round_up(n, 8))
    return tile, _round_up(n, tile)


def avg_pool(x, k):
    B, H, W, C = x.shape
    return x.reshape(B, H // k, k, W // k, k, C).mean(axis=(2, 4))


def upsample_nearest(x, k):
    return jnp.repeat(jnp.repeat(x, k, axis=1), k, axis=2)


# ----------------------------------------------------------------------------
# Fused kernel: stem -> router -> grain select -> quant_conv -> VQ -> decoder
# ----------------------------------------------------------------------------
def _fused_kernel(x9_ref, ew_ref, eb_ref, rw_ref, rb_ref, qw_ref, qb_ref,
                  cbt_ref, e2_ref, cb_ref, dw_ref, db_ref, ow_ref, ob_ref,
                  dec_ref, gate_ref, idx_ref, loss_ref, *, beta, inv_denom):
    C = ew_ref.shape[1] // 3

    # --- encoder stem: one block-diagonal MXU pass computes all three grains
    h_all = jnp.dot(x9_ref[...], ew_ref[...],
                    preferred_element_type=jnp.float32) + eb_ref[...]
    h_all = h_all * jax.nn.sigmoid(h_all)                         # swish (f32)
    hf = h_all[:, 0:C]           # fine grain
    hm = h_all[:, C:2 * C]       # medium grain (replicated to fine grid)
    hc = h_all[:, 2 * C:3 * C]   # coarse grain (replicated to fine grid)
    h_mean = (hf + hm + hc) * (1.0 / 3.0)

    # --- router 1x1 conv -> softmax -> hard argmax (tie -> smallest index)
    logits = jnp.dot(h_mean.astype(jnp.bfloat16), rw_ref[...],
                     preferred_element_type=jnp.float32) + rb_ref[...]   # [T,3]
    m = jnp.max(logits, axis=-1, keepdims=True)
    ex = jnp.exp(logits - m)
    gate = ex * (1.0 / jnp.sum(ex, axis=-1, keepdims=True))
    gmax = jnp.max(gate, axis=-1, keepdims=True)
    giota = jax.lax.broadcasted_iota(jnp.int32, gate.shape, 1)
    gidx = jnp.min(jnp.where(gate >= gmax, giota, 3), axis=-1, keepdims=True)

    # column convention: 0 = coarse, 1 = medium, 2 = fine
    sel0 = (gidx == 0).astype(jnp.float32)
    sel1 = (gidx == 1).astype(jnp.float32)
    sel2 = (gidx == 2).astype(jnp.float32)
    h_triple = sel0 * hc + sel1 * hm + sel2 * hf
    cmask = 0.0625 * sel0 + 0.25 * sel1 + sel2                     # codebook_mask

    # --- quant_conv (1x1)
    z = jnp.dot(h_triple.astype(jnp.bfloat16), qw_ref[...],
                preferred_element_type=jnp.float32) + qb_ref[...]        # [T,D]

    # --- VQ: argmin_k (|e_k|^2 - 2 z.e_k); |e_k|^2 and codebook^T precomputed
    cross = jnp.dot(z.astype(jnp.bfloat16), cbt_ref[...],
                    preferred_element_type=jnp.float32)                  # [T,K]
    d = e2_ref[...] - 2.0 * cross
    K = d.shape[-1]
    dmin = jnp.min(d, axis=-1, keepdims=True)
    kiota = jax.lax.broadcasted_iota(jnp.int32, d.shape, 1)
    kidx = jnp.min(jnp.where(d <= dmin, kiota, K), axis=-1, keepdims=True)
    onehot = (kiota == kidx).astype(jnp.bfloat16)
    q = jnp.dot(onehot, cb_ref[...], preferred_element_type=jnp.float32) # [T,D]

    # --- masked (codebook + beta*commitment) loss, per-row partials
    diff2 = (q - z) ** 2
    loss_ref[...] = (cmask * jnp.sum(diff2, axis=-1, keepdims=True)
                     * ((1.0 + beta) * inv_denom))

    # --- decoder: (post_quant_conv ∘ dec1) pre-composed, swish, conv_out
    #     (straight-through: forward value == q)
    d1 = jnp.dot(q.astype(jnp.bfloat16), dw_ref[...],
                 preferred_element_type=jnp.float32) + db_ref[...]
    d1 = d1 * jax.nn.sigmoid(d1)
    dec = jnp.dot(d1.astype(jnp.bfloat16), ow_ref[...],
                  preferred_element_type=jnp.float32) + ob_ref[...]      # [T,3]

    dec_ref[...] = dec
    gate_ref[...] = gate
    idx_ref[...] = gidx


def triple_grain_fused(x9, params, beta=0.25, max_tile=1024):
    """x9: [N, 9] pyramid features (fine | medium-up | coarse-up), 3 ch each."""
    N = x9.shape[0]
    C = params["enc_w"].shape[1]             # quant_before width
    D = params["quant_conv_w"].shape[1]      # quant_after / codebook dim
    K = params["codebook"].shape[0]
    Co = params["dec_out_w"].shape[1]

    tile, Np = _row_tiling(N, max_tile)
    if Np != N:
        x9 = jnp.pad(x9, ((0, Np - N), (0, 0)))        # 9-channel pad only (tiny)
    x9 = x9.astype(jnp.bfloat16)

    # block-diagonal stem weight: one MXU pass covers all three grains
    ew = params["enc_w"]
    z3 = jnp.zeros_like(ew)
    enc_w9 = jnp.concatenate(
        [jnp.concatenate([ew, z3, z3], axis=1),
         jnp.concatenate([z3, ew, z3], axis=1),
         jnp.concatenate([z3, z3, ew], axis=1)], axis=0)             # [9, 3C]
    enc_b9 = jnp.tile(params["enc_b"].reshape(1, C), (1, 3))         # [1, 3C]

    # pre-composed post_quant_conv ∘ dec1 (no nonlinearity between them)
    pq_w = params["post_quant_conv_w"].astype(jnp.float32)
    d1_w = params["dec1_w"].astype(jnp.float32)
    dec_pd_w = jnp.dot(pq_w, d1_w).astype(jnp.bfloat16)
    dec_pd_b = (params["post_quant_conv_b"] @ d1_w + params["dec1_b"]).reshape(1, -1)

    # codebook: pre-transposed + precomputed squared norms (kept resident)
    cb = params["codebook"]
    cb_f = cb.astype(jnp.float32)
    cb_t = jnp.transpose(cb)                                          # [D, K]
    e2 = jnp.sum(cb_f * cb_f, axis=-1).reshape(1, K)                  # [1, K]

    rw = params["router_w"]
    rb = params["router_b"].reshape(1, 3)
    qw = params["quant_conv_w"]
    qb = params["quant_conv_b"].reshape(1, D)
    ow = params["dec_out_w"]
    ob = params["dec_out_b"].reshape(1, Co)

    def rows(c):
        return pl.BlockSpec((tile, c), lambda i: (i, 0))

    def res(a):
        return pl.BlockSpec(a.shape, lambda i: (0, 0))

    dec, gate, idx, rloss = pl.pallas_call(
        functools.partial(_fused_kernel, beta=beta, inv_denom=1.0 / float(N * D)),
        grid=(Np // tile,),
        out_shape=(
            jax.ShapeDtypeStruct((Np, Co), jnp.float32),
            jax.ShapeDtypeStruct((Np, 3), jnp.float32),
            jax.ShapeDtypeStruct((Np, 1), jnp.int32),
            jax.ShapeDtypeStruct((Np, 1), jnp.float32),
        ),
        in_specs=[
            rows(x9.shape[1]),
            res(enc_w9), res(enc_b9),
            res(rw), res(rb),
            res(qw), res(qb),
            res(cb_t), res(e2), res(cb),
            res(dec_pd_w), res(dec_pd_b),
            res(ow), res(ob),
        ],
        out_specs=(rows(Co), rows(3), rows(1), rows(1)),
        compiler_params=pltpu.CompilerParams(dimension_semantics=("parallel",)),
    )(x9, enc_w9, enc_b9, rw, rb, qw, qb, cb_t, e2, cb, dec_pd_w, dec_pd_b, ow, ob)

    return dec[:N], gate[:N], idx[:N, 0], jnp.sum(rloss[:N, 0])


# ----------------------------------------------------------------------------
# Parameters (bf16 weights on the MXU path, f32 biases)
# ----------------------------------------------------------------------------
def init_params(key, c_in=3, c_before=128, c_after=128, n_embed=256, c_dec=128):
    ks = jax.random.split(key, 8)
    s = 0.05

    def w(k, shape):
        return (s * jax.random.normal(k, shape, jnp.float32)).astype(jnp.bfloat16)

    return dict(
        enc_w=w(ks[0], (c_in, c_before)), enc_b=jnp.zeros((c_before,), jnp.float32),
        router_w=w(ks[1], (c_before, 3)), router_b=jnp.zeros((3,), jnp.float32),
        quant_conv_w=w(ks[2], (c_before, c_after)),
        quant_conv_b=jnp.zeros((c_after,), jnp.float32),
        codebook=w(ks[3], (n_embed, c_after)),
        post_quant_conv_w=w(ks[4], (c_after, c_before)),
        post_quant_conv_b=jnp.zeros((c_before,), jnp.float32),
        dec1_w=w(ks[5], (c_before, c_dec)), dec1_b=jnp.zeros((c_dec,), jnp.float32),
        dec_out_w=w(ks[6], (c_dec, c_in)), dec_out_b=jnp.zeros((c_in,), jnp.float32),
    )


# ----------------------------------------------------------------------------
# Forward: mirrors TripleGrainVQModel.forward -> (dec, diff, grain_indices, gate)
# ----------------------------------------------------------------------------
def triple_grain_vq_forward(params, x_nchw, quant_sample_temperature=0.0, beta=0.25):
    del quant_sample_temperature  # deterministic (hard) quantization path
    x = jnp.transpose(x_nchw, (0, 2, 3, 1)).astype(jnp.float32)   # NCHW -> NHWC
    B, H, W, Cin = x.shape
    h_, w_ = H // 2, W // 2
    N = B * h_ * w_

    # Triple-grain pyramid: pool, then nearest-upsample the coarser grains back
    # to the fine grid at 3 channels (1x1-conv stem commutes with nearest
    # upsample) — only tiny 3/9-channel tensors ever hit HBM outside the kernel.
    x_f = avg_pool(x, 2)
    x_m = upsample_nearest(avg_pool(x, 4), 2)
    x_c = upsample_nearest(avg_pool(x, 8), 4)
    x9 = jnp.concatenate([x_f, x_m, x_c], axis=-1).reshape(N, 3 * Cin)

    dec_low, gate_flat, idx_flat, emb_loss = triple_grain_fused(x9, params, beta=beta)

    gate = gate_flat.reshape(B, h_, w_, 3)
    grain_indices = idx_flat.reshape(B, h_, w_)
    # conv_out (1x1) commutes with the final nearest x2 upsample
    dec = upsample_nearest(dec_low.reshape(B, h_, w_, Cin), 2)      # [B, H, W, 3]

    return (jnp.transpose(dec, (0, 3, 1, 2)), emb_loss, grain_indices,
            jnp.transpose(gate, (0, 3, 1, 2)))


# ----------------------------------------------------------------------------
if __name__ == "__main__":
    key = jax.random.PRNGKey(0)
    pkey, xkey = jax.random.split(key)
    params = init_params(pkey)

    # small NCHW image batch, matching the PyTorch module's input convention
    x = jax.random.normal(xkey, (2, 3, 16, 16), jnp.float32)

    fwd = jax.jit(triple_grain_vq_forward)
    dec, diff, grain_indices, gate = fwd(params, x)
    jax.block_until_ready((dec, diff, grain_indices, gate))

    assert dec.shape == (2, 3, 16, 16)
    assert diff.shape == ()
    assert grain_indices.shape == (2, 8, 8)
    assert gate.shape == (2, 3, 8, 8)
    assert bool(jnp.isfinite(dec).all()) and bool(jnp.isfinite(diff))
    print("KERNEL_OK")
</pallas_src>

<mosaic_0001>
module attributes {stable_mosaic.version = 11 : i64} {
  func.func @_fused_kernel(%arg0: i32, %arg1: memref<128x9xbf16, #tpu.memory_space<vmem>>, %arg2: memref<9x384xbf16, #tpu.memory_space<vmem>>, %arg3: memref<1x384xf32, #tpu.memory_space<vmem>>, %arg4: memref<128x3xbf16, #tpu.memory_space<vmem>>, %arg5: memref<1x3xf32, #tpu.memory_space<vmem>>, %arg6: memref<128x128xbf16, #tpu.memory_space<vmem>>, %arg7: memref<1x128xf32, #tpu.memory_space<vmem>>, %arg8: memref<128x256xbf16, #tpu.memory_space<vmem>>, %arg9: memref<1x256xf32, #tpu.memory_space<vmem>>, %arg10: memref<256x128xbf16, #tpu.memory_space<vmem>>, %arg11: memref<128x128xbf16, #tpu.memory_space<vmem>>, %arg12: memref<1x128xf32, #tpu.memory_space<vmem>>, %arg13: memref<128x3xbf16, #tpu.memory_space<vmem>>, %arg14: memref<1x3xf32, #tpu.memory_space<vmem>>, %arg15: memref<128x3xf32, #tpu.memory_space<vmem>>, %arg16: memref<128x3xf32, #tpu.memory_space<vmem>>, %arg17: memref<128x1xi32, #tpu.memory_space<vmem>>, %arg18: memref<128x1xf32, #tpu.memory_space<vmem>>) attributes {dimension_semantics = [#tpu.dimension_semantics<parallel>], iteration_bounds = array<i64: 1>, scalar_prefetch = 0 : i64, scratch_operands = 0 : i64, tpu.core_type = #tpu.core_type<tc>, window_params = [{transform_indices = @transform_0, window_bounds = array<i64: 128, 9>}, {pipeline_mode = #tpu.pipeline_mode<synchronous>, transform_indices = @transform_1, window_bounds = array<i64: 9, 384>}, {pipeline_mode = #tpu.pipeline_mode<synchronous>, transform_indices = @transform_2, window_bounds = array<i64: 1, 384>}, {pipeline_mode = #tpu.pipeline_mode<synchronous>, transform_indices = @transform_3, window_bounds = array<i64: 128, 3>}, {pipeline_mode = #tpu.pipeline_mode<synchronous>, transform_indices = @transform_4, window_bounds = array<i64: 1, 3>}, {pipeline_mode = #tpu.pipeline_mode<synchronous>, transform_indices = @transform_5, window_bounds = array<i64: 128, 128>}, {pipeline_mode = #tpu.pipeline_mode<synchronous>, transform_indices = @transform_6, window_bounds = array<i64: 1, 128>}, {pipeline_mode = #tpu.pipeline_mode<synchronous>, transform_indices = @transform_7, window_bounds = array<i64: 128, 256>}, {pipeline_mode = #tpu.pipeline_mode<synchronous>, transform_indices = @transform_8, window_bounds = array<i64: 1, 256>}, {pipeline_mode = #tpu.pipeline_mode<synchronous>, transform_indices = @transform_9, window_bounds = array<i64: 256, 128>}, {pipeline_mode = #tpu.pipeline_mode<synchronous>, transform_indices = @transform_10, window_bounds = array<i64: 128, 128>}, {pipeline_mode = #tpu.pipeline_mode<synchronous>, transform_indices = @transform_11, window_bounds = array<i64: 1, 128>}, {pipeline_mode = #tpu.pipeline_mode<synchronous>, transform_indices = @transform_12, window_bounds = array<i64: 128, 3>}, {pipeline_mode = #tpu.pipeline_mode<synchronous>, transform_indices = @transform_13, window_bounds = array<i64: 1, 3>}, {transform_indices = @transform_14, window_bounds = array<i64: 128, 3>}, {transform_indices = @transform_15, window_bounds = array<i64: 128, 3>}, {transform_indices = @transform_16, window_bounds = array<i64: 128, 1>}, {transform_indices = @transform_17, window_bounds = array<i64: 128, 1>}]} {
    %c0 = arith.constant 0 : index
    %c0_0 = arith.constant 0 : index
    %0 = vector.load %arg1[%c0, %c0_0] : memref<128x9xbf16, #tpu.memory_space<vmem>>, vector<128x9xbf16>
    %c0_1 = arith.constant 0 : index
    %c0_2 = arith.constant 0 : index
    %1 = vector.load %arg2[%c0_1, %c0_2] : memref<9x384xbf16, #tpu.memory_space<vmem>>, vector<9x384xbf16>
    %cst = arith.constant dense<0.000000e+00> : vector<128x384xf32>
    %2 = tpu.matmul %0, %1, %cst {dimension_numbers = #tpu.dot_dimension_numbers<[1], [0], [0], [1], [0, 0, 1, 1], [], []>} : vector<128x9xbf16>, vector<9x384xbf16>, vector<128x384xf32> -> vector<128x384xf32>
    %c0_3 = arith.constant 0 : index
    %c0_4 = arith.constant 0 : index
    %3 = vector.load %arg3[%c0_3, %c0_4] : memref<1x384xf32, #tpu.memory_space<vmem>>, vector<1x384xf32>
    %4 = vector.broadcast %3 : vector<1x384xf32> to vector<128x384xf32>
    %5 = arith.addf %2, %4 : vector<128x384xf32>
    %6 = arith.negf %5 : vector<128x384xf32>
    %7 = math.exp %6 : vector<128x384xf32>
    %cst_5 = arith.constant 1.000000e+00 : f32
    %8 = vector.broadcast %cst_5 : f32 to vector<128x384xf32>
    %9 = arith.addf %8, %7 : vector<128x384xf32>
    %10 = arith.divf %8, %9 : vector<128x384xf32>
    %11 = arith.mulf %5, %10 : vector<128x384xf32>
    %12 = vector.extract_strided_slice %11 {offsets = [0, 0], sizes = [128, 128], strides = [1, 1]} : vector<128x384xf32> to vector<128x128xf32>
    %13 = vector.extract_strided_slice %11 {offsets = [0, 128], sizes = [128, 128], strides = [1, 1]} : vector<128x384xf32> to vector<128x128xf32>
    %14 = vector.extract_strided_slice %11 {offsets = [0, 256], sizes = [128, 128], strides = [1, 1]} : vector<128x384xf32> to vector<128x128xf32>
    %15 = arith.addf %12, %13 : vector<128x128xf32>
    %16 = arith.addf %15, %14 : vector<128x128xf32>
    %cst_6 = arith.constant 0.333333343 : f32
    %17 = vector.broadcast %cst_6 : f32 to vector<128x128xf32>
    %18 = arith.mulf %16, %17 : vector<128x128xf32>
    %19 = arith.truncf %18 : vector<128x128xf32> to vector<128x128xbf16>
    %c0_7 = arith.constant 0 : index
    %c0_8 = arith.constant 0 : index
    %20 = vector.load %arg4[%c0_7, %c0_8] : memref<128x3xbf16, #tpu.memory_space<vmem>>, vector<128x3xbf16>
    %cst_9 = arith.constant dense<0.000000e+00> : vector<128x3xf32>
    %21 = tpu.matmul %19, %20, %cst_9 {dimension_numbers = #tpu.dot_dimension_numbers<[1], [0], [0], [1], [0, 0, 1, 1], [], []>} : vector<128x128xbf16>, vector<128x3xbf16>, vector<128x3xf32> -> vector<128x3xf32>
    %c0_10 = arith.constant 0 : index
    %c0_11 = arith.constant 0 : index
    %22 = vector.load %arg5[%c0_10, %c0_11] : memref<1x3xf32, #tpu.memory_space<vmem>>, vector<1x3xf32>
    %23 = vector.broadcast %22 : vector<1x3xf32> to vector<128x3xf32>
    %24 = arith.addf %21, %23 : vector<128x3xf32>
    %cst_12 = arith.constant dense<0xFF800000> : vector<128xf32>
    %25 = vector.multi_reduction <maximumf>, %24, %cst_12 [1] : vector<128x3xf32> to vector<128xf32>
    %26 = vector.shape_cast %25 : vector<128xf32> to vector<128x1xf32>
    %27 = vector.broadcast %26 : vector<128x1xf32> to vector<128x3xf32>
    %28 = arith.subf %24, %27 : vector<128x3xf32>
    %29 = math.exp %28 : vector<128x3xf32>
    %cst_13 = arith.constant dense<0.000000e+00> : vector<128xf32>
    %30 = vector.multi_reduction <add>, %29, %cst_13 [1] : vector<128x3xf32> to vector<128xf32>
    %31 = vector.shape_cast %30 : vector<128xf32> to vector<128x1xf32>
    %cst_14 = arith.constant 1.000000e+00 : f32
    %32 = vector.broadcast %cst_14 : f32 to vector<128x1xf32>
    %33 = arith.divf %32, %31 : vector<128x1xf32>
    %34 = vector.broadcast %33 : vector<128x1xf32> to vector<128x3xf32>
    %35 = arith.mulf %29, %34 : vector<128x3xf32>
    %cst_15 = arith.constant dense<0xFF800000> : vector<128xf32>
    %36 = vector.multi_reduction <maximumf>, %35, %cst_15 [1] : vector<128x3xf32> to vector<128xf32>
    %37 = vector.shape_cast %36 : vector<128xf32> to vector<128x1xf32>
    %38 = tpu.iota {dimensions = array<i32: 1>} : vector<128x3xi32>
    %39 = vector.broadcast %37 : vector<128x1xf32> to vector<128x3xf32>
    %40 = arith.cmpf oge, %35, %39 : vector<128x3xf32>
    %c3_i32 = arith.constant 3 : i32
    %41 = vector.broadcast %c3_i32 : i32 to vector<128x3xi32>
    %42 = arith.select %40, %38, %41 : vector<128x3xi1>, vector<128x3xi32>
    %cst_16 = arith.constant dense<2147483647> : vector<128xi32>
    %43 = vector.multi_reduction <minsi>, %42, %cst_16 [1] : vector<128x3xi32> to vector<128xi32>
    %44 = vector.shape_cast %43 : vector<128xi32> to vector<128x1xi32>
    %c0_i32 = arith.constant 0 : i32
    %45 = vector.broadcast %c0_i32 : i32 to vector<128x1xi32>
    %46 = arith.cmpi eq, %44, %45 : vector<128x1xi32>
    %47 = arith.extui %46 : vector<128x1xi1> to vector<128x1xi32>
    %48 = arith.sitofp %47 : vector<128x1xi32> to vector<128x1xf32>
    %c1_i32 = arith.constant 1 : i32
    %49 = vector.broadcast %c1_i32 : i32 to vector<128x1xi32>
    %50 = arith.cmpi eq, %44, %49 : vector<128x1xi32>
    %51 = arith.extui %50 : vector<128x1xi1> to vector<128x1xi32>
    %52 = arith.sitofp %51 : vector<128x1xi32> to vector<128x1xf32>
    %c2_i32 = arith.constant 2 : i32
    %53 = vector.broadcast %c2_i32 : i32 to vector<128x1xi32>
    %54 = arith.cmpi eq, %44, %53 : vector<128x1xi32>
    %55 = arith.extui %54 : vector<128x1xi1> to vector<128x1xi32>
    %56 = arith.sitofp %55 : vector<128x1xi32> to vector<128x1xf32>
    %57 = vector.broadcast %48 : vector<128x1xf32> to vector<128x128xf32>
    %58 = arith.mulf %57, %14 : vector<128x128xf32>
    %59 = vector.broadcast %52 : vector<128x1xf32> to vector<128x128xf32>
    %60 = arith.mulf %59, %13 : vector<128x128xf32>
    %61 = arith.addf %58, %60 : vector<128x128xf32>
    %62 = vector.broadcast %56 : vector<128x1xf32> to vector<128x128xf32>
    %63 = arith.mulf %62, %12 : vector<128x128xf32>
    %64 = arith.addf %61, %63 : vector<128x128xf32>
    %cst_17 = arith.constant 6.250000e-02 : f32
    %65 = vector.broadcast %cst_17 : f32 to vector<128x1xf32>
    %66 = arith.mulf %65, %48 : vector<128x1xf32>
    %cst_18 = arith.constant 2.500000e-01 : f32
    %67 = vector.broadcast %cst_18 : f32 to vector<128x1xf32>
    %68 = arith.mulf %67, %52 : vector<128x1xf32>
    %69 = arith.addf %66, %68 : vector<128x1xf32>
    %70 = arith.addf %69, %56 : vector<128x1xf32>
    %71 = arith.truncf %64 : vector<128x128xf32> to vector<128x128xbf16>
    %c0_19 = arith.constant 0 : index
    %c0_20 = arith.constant 0 : index
    %72 = vector.load %arg6[%c0_19, %c0_20] : memref<128x128xbf16, #tpu.memory_space<vmem>>, vector<128x128xbf16>
    %cst_21 = arith.constant dense<0.000000e+00> : vector<128x128xf32>
    %73 = tpu.matmul %71, %72, %cst_21 {dimension_numbers = #tpu.dot_dimension_numbers<[1], [0], [0], [1], [0, 0, 1, 1], [], []>} : vector<128x128xbf16>, vector<128x128xbf16>, vector<128x128xf32> -> vector<128x128xf32>
    %c0_22 = arith.constant 0 : index
    %c0_23 = arith.constant 0 : index
    %74 = vector.load %arg7[%c0_22, %c0_23] : memref<1x128xf32, #tpu.memory_space<vmem>>, vector<1x128xf32>
    %75 = vector.broadcast %74 : vector<1x128xf32> to vector<128x128xf32>
    %76 = arith.addf %73, %75 : vector<128x128xf32>
    %77 = arith.truncf %76 : vector<128x128xf32> to vector<128x128xbf16>
    %c0_24 = arith.constant 0 : index
    %c0_25 = arith.constant 0 : index
    %78 = vector.load %arg8[%c0_24, %c0_25] : memref<128x256xbf16, #tpu.memory_space<vmem>>, vector<128x256xbf16>
    %cst_26 = arith.constant dense<0.000000e+00> : vector<128x256xf32>
    %79 = tpu.matmul %77, %78, %cst_26 {dimension_numbers = #tpu.dot_dimension_numbers<[1], [0], [0], [1], [0, 0, 1, 1], [], []>} : vector<128x128xbf16>, vector<128x256xbf16>, vector<128x256xf32> -> vector<128x256xf32>
    %c0_27 = arith.constant 0 : index
    %c0_28 = arith.constant 0 : index
    %80 = vector.load %arg9[%c0_27, %c0_28] : memref<1x256xf32, #tpu.memory_space<vmem>>, vector<1x256xf32>
    %cst_29 = arith.constant 2.000000e+00 : f32
    %81 = vector.broadcast %cst_29 : f32 to vector<128x256xf32>
    %82 = arith.mulf %81, %79 : vector<128x256xf32>
    %83 = vector.broadcast %80 : vector<1x256xf32> to vector<128x256xf32>
    %84 = arith.subf %83, %82 : vector<128x256xf32>
    %cst_30 = arith.constant dense<0x7F800000> : vector<128xf32>
    %85 = vector.multi_reduction <minimumf>, %84, %cst_30 [1] : vector<128x256xf32> to vector<128xf32>
    %86 = vector.shape_cast %85 : vector<128xf32> to vector<128x1xf32>
    %87 = tpu.iota {dimensions = array<i32: 1>} : vector<128x256xi32>
    %88 = vector.broadcast %86 : vector<128x1xf32> to vector<128x256xf32>
    %89 = arith.cmpf ole, %84, %88 : vector<128x256xf32>
    %c256_i32 = arith.constant 256 : i32
    %90 = vector.broadcast %c256_i32 : i32 to vector<128x256xi32>
    %91 = arith.select %89, %87, %90 : vector<128x256xi1>, vector<128x256xi32>
    %cst_31 = arith.constant dense<2147483647> : vector<128xi32>
    %92 = vector.multi_reduction <minsi>, %91, %cst_31 [1] : vector<128x256xi32> to vector<128xi32>
    %93 = vector.shape_cast %92 : vector<128xi32> to vector<128x1xi32>
    %94 = vector.broadcast %93 : vector<128x1xi32> to vector<128x256xi32>
    %95 = arith.cmpi eq, %87, %94 : vector<128x256xi32>
    %96 = arith.extui %95 : vector<128x256xi1> to vector<128x256xi32>
    %97 = arith.sitofp %96 : vector<128x256xi32> to vector<128x256xf32>
    %98 = arith.truncf %97 : vector<128x256xf32> to vector<128x256xbf16>
    %c0_32 = arith.constant 0 : index
    %c0_33 = arith.constant 0 : index
    %99 = vector.load %arg10[%c0_32, %c0_33] : memref<256x128xbf16, #tpu.memory_space<vmem>>, vector<256x128xbf16>
    %cst_34 = arith.constant dense<0.000000e+00> : vector<128x128xf32>
    %100 = tpu.matmul %98, %99, %cst_34 {dimension_numbers = #tpu.dot_dimension_numbers<[1], [0], [0], [1], [0, 0, 1, 1], [], []>} : vector<128x256xbf16>, vector<256x128xbf16>, vector<128x128xf32> -> vector<128x128xf32>
    %101 = arith.subf %100, %76 : vector<128x128xf32>
    %102 = arith.mulf %101, %101 : vector<128x128xf32>
    %cst_35 = arith.constant dense<0.000000e+00> : vector<128xf32>
    %103 = vector.multi_reduction <add>, %102, %cst_35 [1] : vector<128x128xf32> to vector<128xf32>
    %104 = vector.shape_cast %103 : vector<128xf32> to vector<128x1xf32>
    %105 = arith.mulf %70, %104 : vector<128x1xf32>
    %cst_36 = arith.constant 7.62939453E-5 : f32
    %106 = vector.broadcast %cst_36 : f32 to vector<128x1xf32>
    %107 = arith.mulf %105, %106 : vector<128x1xf32>
    %c0_37 = arith.constant 0 : index
    %c0_38 = arith.constant 0 : index
    %108 = vector.load %arg18[%c0_37, %c0_38] : memref<128x1xf32, #tpu.memory_space<vmem>>, vector<128x1xf32>
    tpu.vector_store %arg18[%c0_37, %c0_38], %107 {strides = array<i32>} : memref<128x1xf32, #tpu.memory_space<vmem>>, vector<128x1xf32>,
    %109 = arith.truncf %100 : vector<128x128xf32> to vector<128x128xbf16>
    %c0_39 = arith.constant 0 : index
    %c0_40 = arith.constant 0 : index
    %110 = vector.load %arg11[%c0_39, %c0_40] : memref<128x128xbf16, #tpu.memory_space<vmem>>, vector<128x128xbf16>
    %cst_41 = arith.constant dense<0.000000e+00> : vector<128x128xf32>
    %111 = tpu.matmul %109, %110, %cst_41 {dimension_numbers = #tpu.dot_dimension_numbers<[1], [0], [0], [1], [0, 0, 1, 1], [], []>} : vector<128x128xbf16>, vector<128x128xbf16>, vector<128x128xf32> -> vector<128x128xf32>
    %c0_42 = arith.constant 0 : index
    %c0_43 = arith.constant 0 : index
    %112 = vector.load %arg12[%c0_42, %c0_43] : memref<1x128xf32, #tpu.memory_space<vmem>>, vector<1x128xf32>
    %113 = vector.broadcast %112 : vector<1x128xf32> to vector<128x128xf32>
    %114 = arith.addf %111, %113 : vector<128x128xf32>
    %115 = arith.negf %114 : vector<128x128xf32>
    %116 = math.exp %115 : vector<128x128xf32>
    %cst_44 = arith.constant 1.000000e+00 : f32
    %117 = vector.broadcast %cst_44 : f32 to vector<128x128xf32>
    %118 = arith.addf %117, %116 : vector<128x128xf32>
    %119 = arith.divf %117, %118 : vector<128x128xf32>
    %120 = arith.mulf %114, %119 : vector<128x128xf32>
    %121 = arith.truncf %120 : vector<128x128xf32> to vector<128x128xbf16>
    %c0_45 = arith.constant 0 : index
    %c0_46 = arith.constant 0 : index
    %122 = vector.load %arg13[%c0_45, %c0_46] : memref<128x3xbf16, #tpu.memory_space<vmem>>, vector<128x3xbf16>
    %cst_47 = arith.constant dense<0.000000e+00> : vector<128x3xf32>
    %123 = tpu.matmul %121, %122, %cst_47 {dimension_numbers = #tpu.dot_dimension_numbers<[1], [0], [0], [1], [0, 0, 1, 1], [], []>} : vector<128x128xbf16>, vector<128x3xbf16>, vector<128x3xf32> -> vector<128x3xf32>
    %c0_48 = arith.constant 0 : index
    %c0_49 = arith.constant 0 : index
    %124 = vector.load %arg14[%c0_48, %c0_49] : memref<1x3xf32, #tpu.memory_space<vmem>>, vector<1x3xf32>
    %125 = vector.broadcast %124 : vector<1x3xf32> to vector<128x3xf32>
    %126 = arith.addf %123, %125 : vector<128x3xf32>
    %c0_50 = arith.constant 0 : index
    %c0_51 = arith.constant 0 : index
    %127 = vector.load %arg15[%c0_50, %c0_51] : memref<128x3xf32, #tpu.memory_space<vmem>>, vector<128x3xf32>
    tpu.vector_store %arg15[%c0_50, %c0_51], %126 {strides = array<i32>} : memref<128x3xf32, #tpu.memory_space<vmem>>, vector<128x3xf32>,
    %c0_52 = arith.constant 0 : index
    %c0_53 = arith.constant 0 : index
    %128 = vector.load %arg16[%c0_52, %c0_53] : memref<128x3xf32, #tpu.memory_space<vmem>>, vector<128x3xf32>
    tpu.vector_store %arg16[%c0_52, %c0_53], %35 {strides = array<i32>} : memref<128x3xf32, #tpu.memory_space<vmem>>, vector<128x3xf32>,
    %c0_54 = arith.constant 0 : index
    %c0_55 = arith.constant 0 : index
    %129 = vector.load %arg17[%c0_54, %c0_55] : memref<128x1xi32, #tpu.memory_space<vmem>>, vector<128x1xi32>
    tpu.vector_store %arg17[%c0_54, %c0_55], %44 {strides = array<i32>} : memref<128x1xi32, #tpu.memory_space<vmem>>, vector<128x1xi32>,
    return
  }
  func.func @transform_0(%arg0: i32) -> (i32, i32) {
    %c0_i32 = arith.constant 0 : i32
    %c0_i32_0 = arith.constant 0 : i32
    return %arg0, %c0_i32 : i32, i32
  }
  func.func @transform_1(%arg0: i32) -> (i32, i32) {
    %c0_i32 = arith.constant 0 : i32
    %c0_i32_0 = arith.constant 0 : i32
    %c0_i32_1 = arith.constant 0 : i32
    return %c0_i32, %c0_i32_0 : i32, i32
  }
  func.func @transform_2(%arg0: i32) -> (i32, i32) {
    %c0_i32 = arith.constant 0 : i32
    %c0_i32_0 = arith.constant 0 : i32
    %c0_i32_1 = arith.constant 0 : i32
    return %c0_i32, %c0_i32_0 : i32, i32
  }
  func.func @transform_3(%arg0: i32) -> (i32, i32) {
    %c0_i32 = arith.constant 0 : i32
    %c0_i32_0 = arith.constant 0 : i32
    %c0_i32_1 = arith.constant 0 : i32
    return %c0_i32, %c0_i32_0 : i32, i32
  }
  func.func @transform_4(%arg0: i32) -> (i32, i32) {
    %c0_i32 = arith.constant 0 : i32
    %c0_i32_0 = arith.constant 0 : i32
    %c0_i32_1 = arith.constant 0 : i32
    return %c0_i32, %c0_i32_0 : i32, i32
  }
  func.func @transform_5(%arg0: i32) -> (i32, i32) {
    %c0_i32 = arith.constant 0 : i32
    %c0_i32_0 = arith.constant 0 : i32
    %c0_i32_1 = arith.constant 0 : i32
    return %c0_i32, %c0_i32_0 : i32, i32
  }
  func.func @transform_6(%arg0: i32) -> (i32, i32) {
    %c0_i32 = arith.constant 0 : i32
    %c0_i32_0 = arith.constant 0 : i32
    %c0_i32_1 = arith.constant 0 : i32
    return %c0_i32, %c0_i32_0 : i32, i32
  }
  func.func @transform_7(%arg0: i32) -> (i32, i32) {
    %c0_i32 = arith.constant 0 : i32
    %c0_i32_0 = arith.constant 0 : i32
    %c0_i32_1 = arith.constant 0 : i32
    return %c0_i32, %c0_i32_0 : i32, i32
  }
  func.func @transform_8(%arg0: i32) -> (i32, i32) {
    %c0_i32 = arith.constant 0 : i32
    %c0_i32_0 = arith.constant 0 : i32
    %c0_i32_1 = arith.constant 0 : i32
    return %c0_i32, %c0_i32_0 : i32, i32
  }
  func.func @transform_9(%arg0: i32) -> (i32, i32) {
    %c0_i32 = arith.constant 0 : i32
    %c0_i32_0 = arith.constant 0 : i32
    %c0_i32_1 = arith.constant 0 : i32
    return %c0_i32, %c0_i32_0 : i32, i32
  }
  func.func @transform_10(%arg0: i32) -> (i32, i32) {
    %c0_i32 = arith.constant 0 : i32
    %c0_i32_0 = arith.constant 0 : i32
    %c0_i32_1 = arith.constant 0 : i32
    return %c0_i32, %c0_i32_0 : i32, i32
  }
  func.func @transform_11(%arg0: i32) -> (i32, i32) {
    %c0_i32 = arith.constant 0 : i32
    %c0_i32_0 = arith.constant 0 : i32
    %c0_i32_1 = arith.constant 0 : i32
    return %c0_i32, %c0_i32_0 : i32, i32
  }
  func.func @transform_12(%arg0: i32) -> (i32, i32) {
    %c0_i32 = arith.constant 0 : i32
    %c0_i32_0 = arith.constant 0 : i32
    %c0_i32_1 = arith.constant 0 : i32
    return %c0_i32, %c0_i32_0 : i32, i32
  }
  func.func @transform_13(%arg0: i32) -> (i32, i32) {
    %c0_i32 = arith.constant 0 : i32
    %c0_i32_0 = arith.constant 0 : i32
    %c0_i32_1 = arith.constant 0 : i32
    return %c0_i32, %c0_i32_0 : i32, i32
  }
  func.func @transform_14(%arg0: i32) -> (i32, i32) {
    %c0_i32 = arith.constant 0 : i32
    %c0_i32_0 = arith.constant 0 : i32
    return %arg0, %c0_i32 : i32, i32
  }
  func.func @transform_15(%arg0: i32) -> (i32, i32) {
    %c0_i32 = arith.constant 0 : i32
    %c0_i32_0 = arith.constant 0 : i32
    return %arg0, %c0_i32 : i32, i32
  }
  func.func @transform_16(%arg0: i32) -> (i32, i32) {
    %c0_i32 = arith.constant 0 : i32
    %c0_i32_0 = arith.constant 0 : i32
    return %arg0, %c0_i32 : i32, i32
  }
  func.func @transform_17(%arg0: i32) -> (i32, i32) {
    %c0_i32 = arith.constant 0 : i32
    %c0_i32_0 = arith.constant 0 : i32
    return %arg0, %c0_i32 : i32, i32
  }
}

</mosaic_0001>

<llo_original>
// kernel: squeeze.3
$region0: #{squeeze.3}
  %s0 = inlined_call_operand.vmem [shape: s32[128], index: 0, kind: input, shape index: {}]
  %s1 = inlined_call_operand.hbm [shape: s32[2,8,8], index: 1, kind: output, shape index: {}]
  $region1: #{squeeze.3} parent=0
    #allocation0 [shape = 'u8[8192]{0}', space=vmem, size = 0x2000, scoped, tag = 'operand span for operand 1']
    #allocation1 [shape = 's32[1]{0}', space=sflag, size = 0x4, scoped, tag = 'scoped memory for squeeze.3']
    #allocation2 [shape = 'u8[4096]{0}', space=vmem, size = 0x1000, scoped, tag = 'scoped mem for input reshape']
    %2 = vsyncpa [#allocation1], 0
    %s4 = sshllo.u32 0, 1
    %v5 = vld [vmem:[%s0] sm:%s4]
    %6 = vst [vmem:[#allocation2] sm:%s4] %v5
    %v7 = vld [vmem:[#allocation2] sm:$0x1]
    %vm8 = vcmask 64512
    %9 = vst.msk [vmem:[#allocation0] sm:$0x1] %vm8, %v7
    %v10 = vld [vmem:[#allocation2] sm:$0x1]
    %11 = vrot.lane.b32.xlu0 %v10, 120
    %v12 = vpop.permute.xlu0 %11
    %vm13 = vcmask 64512
    %s14 = scalar_lea.vmem [#allocation0], 1
    %15 = vst.msk [vmem:[%s14] sm:$0x1] %vm13, %v12
    %v16 = vld [vmem:[#allocation2] sm:$0x1]
    %17 = vrot.lane.b32.xlu0 %v16, 112
    %v18 = vpop.permute.xlu0 %17
    %vm19 = vcmask 64512
    %s20 = scalar_lea.vmem [#allocation0], 2
    %21 = vst.msk [vmem:[%s20] sm:$0x1] %vm19, %v18
    %v22 = vld [vmem:[#allocation2] sm:$0x1]
    %23 = vrot.lane.b32.xlu0 %v22, 104
    %v24 = vpop.permute.xlu0 %23
    %vm25 = vcmask 64512
    %s26 = scalar_lea.vmem [#allocation0], 3
    %27 = vst.msk [vmem:[%s26] sm:$0x1] %vm25, %v24
    %v28 = vld [vmem:[#allocation2] sm:$0x1]
    %29 = vrot.lane.b32.xlu0 %v28, 96
    %v30 = vpop.permute.xlu0 %29
    %vm31 = vcmask 64512
    %s32 = scalar_lea.vmem [#allocation0], 4
    %33 = vst.msk [vmem:[%s32] sm:$0x1] %vm31, %v30
    %v34 = vld [vmem:[#allocation2] sm:$0x1]
    %35 = vrot.lane.b32.xlu0 %v34, 88
    %v36 = vpop.permute.xlu0 %35
    %vm37 = vcmask 64512
    %s38 = scalar_lea.vmem [#allocation0], 5
    %39 = vst.msk [vmem:[%s38] sm:$0x1] %vm37, %v36
    %v40 = vld [vmem:[#allocation2] sm:$0x1]
    %41 = vrot.lane.b32.xlu0 %v40, 80
    %v42 = vpop.permute.xlu0 %41
    %vm43 = vcmask 64512
    %s44 = scalar_lea.vmem [#allocation0], 6
    %45 = vst.msk [vmem:[%s44] sm:$0x1] %vm43, %v42
    %v46 = vld [vmem:[#allocation2] sm:$0x1]
    %47 = vrot.lane.b32.xlu0 %v46, 72
    %v48 = vpop.permute.xlu0 %47
    %vm49 = vcmask 64512
    %s50 = scalar_lea.vmem [#allocation0], 7
    %51 = vst.msk [vmem:[%s50] sm:$0x1] %vm49, %v48
    %v52 = vld [vmem:[#allocation2] sm:$0x1]
    %53 = vrot.lane.b32.xlu0 %v52, 64
    %v54 = vpop.permute.xlu0 %53
    %vm55 = vcmask 64512
    %s56 = scalar_lea.vmem [#allocation0], 8
    %57 = vst.msk [vmem:[%s56] sm:$0x1] %vm55, %v54
    %v58 = vld [vmem:[#allocation2] sm:$0x1]
    %59 = vrot.lane.b32.xlu0 %v58, 56
    %v60 = vpop.permute.xlu0 %59
    %vm61 = vcmask 64512
    %s62 = scalar_lea.vmem [#allocation0], 9
    %63 = vst.msk [vmem:[%s62] sm:$0x1] %vm61, %v60
    %v64 = vld [vmem:[#allocation2] sm:$0x1]
    %65 = vrot.lane.b32.xlu0 %v64, 48
    %v66 = vpop.permute.xlu0 %65
    %vm67 = vcmask 64512
    %s68 = scalar_lea.vmem [#allocation0], 10
    %69 = vst.msk [vmem:[%s68] sm:$0x1] %vm67, %v66
    %v70 = vld [vmem:[#allocation2] sm:$0x1]
    %71 = vrot.lane.b32.xlu0 %v70, 40
    %v72 = vpop.permute.xlu0 %71
    %vm73 = vcmask 64512
    %s74 = scalar_lea.vmem [#allocation0], 11
    %75 = vst.msk [vmem:[%s74] sm:$0x1] %vm73, %v72
    %v76 = vld [vmem:[#allocation2] sm:$0x1]
    %77 = vrot.lane.b32.xlu0 %v76, 32
    %v78 = vpop.permute.xlu0 %77
    %vm79 = vcmask 64512
    %s80 = scalar_lea.vmem [#allocation0], 12
    %81 = vst.msk [vmem:[%s80] sm:$0x1] %vm79, %v78
    %v82 = vld [vmem:[#allocation2] sm:$0x1]
    %83 = vrot.lane.b32.xlu0 %v82, 24
    %v84 = vpop.permute.xlu0 %83
    %vm85 = vcmask 64512
    %s86 = scalar_lea.vmem [#allocation0], 13
    %87 = vst.msk [vmem:[%s86] sm:$0x1] %vm85, %v84
    %v88 = vld [vmem:[#allocation2] sm:$0x1]
    %89 = vrot.lane.b32.xlu0 %v88, 16
    %v90 = vpop.permute.xlu0 %89
    %vm91 = vcmask 64512
    %s92 = scalar_lea.vmem [#allocation0], 14
    %93 = vst.msk [vmem:[%s92] sm:$0x1] %vm91, %v90
    %v94 = vld [vmem:[#allocation2] sm:$0x1]
    %95 = vrot.lane.b32.xlu0 %v94, 8
    %v96 = vpop.permute.xlu0 %95
    %vm97 = vcmask 64512
    %s98 = scalar_lea.vmem [#allocation0], 15
    %99 = vst.msk [vmem:[%s98] sm:$0x1] %vm97, %v96
    %s101 = ssub.s32 256, 256
    %102 = vsyncadd [#allocation1], %s101
    %s104 = sshll.u32 [#allocation0], 4
    %s105 = int_to_ptr.vmem [resolvable:$true] %s104
    %107 = dma.vmem_to_hbm [thread:$0]  %s105, 256, %s1, [#allocation1]
    %108 = dma.done [#allocation1], 256
    %109 = vsyncpa [#allocation1], 1

// kernel: triple_grain_vq_forward.1
$region0: #{triple_grain_vq_forward.1}
  #allocation0 [shape = 'u32[]', space=smem, size = 0x4, offset = 0x4, fixed_abs, tag = 'smem constant byte address 0x4 - core index']
  #allocation1 [shape = 'u32[144,128]{1,0:T(1,128)}', space=vmem, size = 0x12000, scoped, tag = 'internal scratch']
  %s0 = inlined_call_operand.vmem [shape: bf16[128,9], index: 0, kind: input, shape index: {}]
  %s1 = inlined_call_operand.vmem [shape: bf16[9,384], index: 1, kind: input, shape index: {}]
  %s2 = inlined_call_operand.vmem [shape: f32[1,384], index: 2, kind: input, shape index: {}]
  %s3 = inlined_call_operand.vmem [shape: bf16[128,3], index: 3, kind: input, shape index: {}]
  %s4 = inlined_call_operand.vmem [shape: f32[1,3], index: 4, kind: input, shape index: {}]
  %s5 = inlined_call_operand.vmem [shape: bf16[128,128], index: 5, kind: input, shape index: {}]
  %s6 = inlined_call_operand.vmem [shape: f32[1,128], index: 6, kind: input, shape index: {}]
  %s7 = inlined_call_operand.vmem [shape: bf16[128,256], index: 7, kind: input, shape index: {}]
  %s8 = inlined_call_operand.vmem [shape: f32[1,256], index: 8, kind: input, shape index: {}]
  %s9 = inlined_call_operand.vmem [shape: bf16[256,128], index: 9, kind: input, shape index: {}]
  %s10 = inlined_call_operand.vmem [shape: bf16[128,128], index: 10, kind: input, shape index: {}]
  %s11 = inlined_call_operand.vmem [shape: f32[1,128], index: 11, kind: input, shape index: {}]
  %s12 = inlined_call_operand.vmem [shape: bf16[128,3], index: 12, kind: input, shape index: {}]
  %s13 = inlined_call_operand.vmem [shape: f32[1,3], index: 13, kind: input, shape index: {}]
  %s14 = inlined_call_operand.vmem [shape: f32[128,3], index: 14, kind: output, shape index: {0}]
  %s15 = inlined_call_operand.vmem [shape: f32[128,3], index: 15, kind: output, shape index: {1}]
  %s16 = inlined_call_operand.vmem [shape: s32[128,1], index: 16, kind: output, shape index: {2}]
  %s17 = inlined_call_operand.vmem [shape: f32[128,1], index: 17, kind: output, shape index: {3}]
  %18 = xla_tuple %s14, %s15, %s16, %s17
  %s19 = sld [smem:[#allocation0]]
  $region90: #{triple_grain_vq_forward.1} parent=0
    _
  %s21 = ssub.s32 1, %s19
  %s22 = scalar_select 0, %s21, %s19
  // Predicated region
  $region2: #{triple_grain_vq_forward.1} parent=0 // pred_check
    _
  $region3: #{triple_grain_vq_forward.1} parent=0 // pred_check_branch
    %24 = sbr.rel (0) target = $region5
  $region4: #{triple_grain_vq_forward.1} parent=0 // pred_region
    _
  $region5: #{triple_grain_vq_forward.1} parent=0 // pred_fallthru
    _
  // Predicated region
  $region6: #{triple_grain_vq_forward.1} parent=0 // pred_check
    _
  $region7: #{triple_grain_vq_forward.1} parent=0 // pred_check_branch
    %26 = sbr.rel (0) target = $region9
  $region8: #{triple_grain_vq_forward.1} parent=0 // pred_region
    _
  $region9: #{triple_grain_vq_forward.1} parent=0 // pred_fallthru
    _
  // Predicated region
  $region10: #{triple_grain_vq_forward.1} parent=0 // pred_check
    _
  $region11: #{triple_grain_vq_forward.1} parent=0 // pred_check_branch
    %28 = sbr.rel (0) target = $region13
  $region12: #{triple_grain_vq_forward.1} parent=0 // pred_region
    _
  $region13: #{triple_grain_vq_forward.1} parent=0 // pred_fallthru
    _
  // Predicated region
  $region14: #{triple_grain_vq_forward.1} parent=0 // pred_check
    _
  $region15: #{triple_grain_vq_forward.1} parent=0 // pred_check_branch
    %30 = sbr.rel (0) target = $region17
  $region16: #{triple_grain_vq_forward.1} parent=0 // pred_region
    _
  $region17: #{triple_grain_vq_forward.1} parent=0 // pred_fallthru
    _
  // Predicated region
  $region18: #{triple_grain_vq_forward.1} parent=0 // pred_check
    _
  $region19: #{triple_grain_vq_forward.1} parent=0 // pred_check_branch
    %32 = sbr.rel (0) target = $region21
  $region20: #{triple_grain_vq_forward.1} parent=0 // pred_region
    _
  $region21: #{triple_grain_vq_forward.1} parent=0 // pred_fallthru
    _
  // Predicated region
  $region22: #{triple_grain_vq_forward.1} parent=0 // pred_check
    _
  $region23: #{triple_grain_vq_forward.1} parent=0 // pred_check_branch
    %34 = sbr.rel (0) target = $region25
  $region24: #{triple_grain_vq_forward.1} parent=0 // pred_region
    _
  $region25: #{triple_grain_vq_forward.1} parent=0 // pred_fallthru
    _
  // Predicated region
  $region26: #{triple_grain_vq_forward.1} parent=0 // pred_check
    _
  $region27: #{triple_grain_vq_forward.1} parent=0 // pred_check_branch
    %36 = sbr.rel (0) target = $region29
  $region28: #{triple_grain_vq_forward.1} parent=0 // pred_region
    _
  $region29: #{triple_grain_vq_forward.1} parent=0 // pred_fallthru
    _
  // Predicated region
  $region30: #{triple_grain_vq_forward.1} parent=0 // pred_check
    _
  $region31: #{triple_grain_vq_forward.1} parent=0 // pred_check_branch
    %38 = sbr.rel (0) target = $region33
  $region32: #{triple_grain_vq_forward.1} parent=0 // pred_region
    _
  $region33: #{triple_grain_vq_forward.1} parent=0 // pred_fallthru
    _
  // Predicated region
  $region34: #{triple_grain_vq_forward.1} parent=0 // pred_check
    _
  $region35: #{triple_grain_vq_forward.1} parent=0 // pred_check_branch
    %40 = sbr.rel (0) target = $region37
  $region36: #{triple_grain_vq_forward.1} parent=0 // pred_region
    _
  $region37: #{triple_grain_vq_forward.1} parent=0 // pred_fallthru
    _
  // Predicated region
  $region38: #{triple_grain_vq_forward.1} parent=0 // pred_check
    _
  $region39: #{triple_grain_vq_forward.1} parent=0 // pred_check_branch
    %42 = sbr.rel (0) target = $region41
  $region40: #{triple_grain_vq_forward.1} parent=0 // pred_region
    _
  $region41: #{triple_grain_vq_forward.1} parent=0 // pred_fallthru
    _
  // Predicated region
  $region42: #{triple_grain_vq_forward.1} parent=0 // pred_check
    _
  $region43: #{triple_grain_vq_forward.1} parent=0 // pred_check_branch
    %44 = sbr.rel (0) target = $region45
  $region44: #{triple_grain_vq_forward.1} parent=0 // pred_region
    _
  $region45: #{triple_grain_vq_forward.1} parent=0 // pred_fallthru
    _
  // Predicated region
  $region46: #{triple_grain_vq_forward.1} parent=0 // pred_check
    _
  $region47: #{triple_grain_vq_forward.1} parent=0 // pred_check_branch
    %46 = sbr.rel (0) target = $region49
  $region48: #{triple_grain_vq_forward.1} parent=0 // pred_region
    _
  $region49: #{triple_grain_vq_forward.1} parent=0 // pred_fallthru
    _
  // Predicated region
  $region50: #{triple_grain_vq_forward.1} parent=0 // pred_check
    _
  $region51: #{triple_grain_vq_forward.1} parent=0 // pred_check_branch
    %48 = sbr.rel (0) target = $region53
  $region52: #{triple_grain_vq_forward.1} parent=0 // pred_region
    _
  $region53: #{triple_grain_vq_forward.1} parent=0 // pred_fallthru
    _
  // Predicated region
  $region54: #{triple_grain_vq_forward.1} parent=0 // pred_check
    _
  $region55: #{triple_grain_vq_forward.1} parent=0 // pred_check_branch
    %50 = sbr.rel (0) target = $region57
  $region56: #{triple_grain_vq_forward.1} parent=0 // pred_region
    _
  $region57: #{triple_grain_vq_forward.1} parent=0 // pred_fallthru
    _
  %v52 = vld [vmem:[%s0] sm:$0xf]
  %v53 = vld [vmem:[%s0 + $0x4] sm:$0xf]
  %v54 = vld [vmem:[%s0 + $0x8] sm:$0xf]
  %v55 = vld [vmem:[%s0 + $0xc] sm:$0xf]
  %v56 = vld [vmem:[%s0 + $0x10] sm:$0xf]
  %v57 = vld [vmem:[%s0 + $0x14] sm:$0xf]
  %v58 = vld [vmem:[%s0 + $0x18] sm:$0xf]
  %v59 = vld [vmem:[%s0 + $0x1c] sm:$0xf]
  %v60 = vld [vmem:[%s0 + $0x20] sm:$0xf]
  %v61 = vld [vmem:[%s0 + $0x24] sm:$0xf]
  %v62 = vld [vmem:[%s0 + $0x28] sm:$0xf]
  %v63 = vld [vmem:[%s0 + $0x2c] sm:$0xf]
  %v64 = vld [vmem:[%s0 + $0x30] sm:$0xf]
  %v65 = vld [vmem:[%s0 + $0x34] sm:$0xf]
  %v66 = vld [vmem:[%s0 + $0x38] sm:$0xf]
  %v67 = vld [vmem:[%s0 + $0x3c] sm:$0xf]
  %v68 = vld [vmem:[%s1] sm:$0xff]
  %v69 = vld [vmem:[%s1 + $0x8] sm:$0xf]
  %v70 = vld [vmem:[%s1 + $0xc] sm:$0x11]
  %v71 = vld [vmem:[%s1 + $0x14] sm:$0x1]
  %v72 = vld [vmem:[%s2] sm:$0x7]
  %v74 = vlaneseq
  %v75 = vshrl.u32 %v74, 7
  %v76 = vsub.s32 0, %v75
  %v77 = vrot.slane %v72, %v76
  %v78 = vlaneseq
  %v79 = vshrl.u32 %v78, 7
  %v80 = vsub.s32 1, %v79
  %v81 = vrot.slane %v72, %v80
  %v82 = vlaneseq
  %v83 = vshrl.u32 %v82, 7
  %v84 = vsub.s32 2, %v83
  %v85 = vrot.slane %v72, %v84
  %v105 = vunpack.c.l.b16 %v52
  %v106 = vunpack.c.l.b16 %v53
  %v107 = vunpack.c.l.b16 %v54
  %v108 = vunpack.c.l.b16 %v55
  %v109 = vunpack.c.l.b16 %v56
  %v110 = vunpack.c.l.b16 %v57
  %v111 = vunpack.c.l.b16 %v58
  %v112 = vunpack.c.l.b16 %v59
  %v113 = vunpack.c.l.b16 %v60
  %v114 = vunpack.c.l.b16 %v61
  %v115 = vunpack.c.l.b16 %v62
  %v116 = vunpack.c.l.b16 %v63
  %v117 = vunpack.c.l.b16 %v64
  %v118 = vunpack.c.l.b16 %v65
  %v119 = vunpack.c.l.b16 %v66
  %v120 = vunpack.c.l.b16 %v67
  %v121 = vpack.c.b16 %v106, %v105
  %v122 = vpack.c.b16 %v108, %v107
  %v123 = vpack.c.b16 %v110, %v109
  %v124 = vpack.c.b16 %v112, %v111
  %v125 = vpack.c.b16 %v114, %v113
  %v126 = vpack.c.b16 %v116, %v115
  %v127 = vpack.c.b16 %v118, %v117
  %v128 = vpack.c.b16 %v120, %v119
  %v133 = vunpack.c.l.b16 %v68
  %v134 = vunpack.c.h.b16 %v68
  %v135 = vunpack.c.l.b16 %v69
  %v136 = vunpack.c.l.b16 %v70
  %v137 = vunpack.c.h.b16 %v70
  %v138 = vunpack.c.l.b16 %v71
  %v139 = vpack.c.b16 %v136, %v133
  %v140 = vpack.c.b16 %v137, %v134
  %v141 = vpack.c.b16 %v138, %v135
  %vm142 = vcmask 72704
  %v144 = vsel %vm142, %v121, 0
  %v147 = vsel %vm142, %v122, 0
  %v150 = vsel %vm142, %v123, 0
  %v153 = vsel %vm142, %v124, 0
  %v156 = vsel %vm142, %v125, 0
  %v159 = vsel %vm142, %v126, 0
  %v162 = vsel %vm142, %v127, 0
  %v165 = vsel %vm142, %v128, 0
  %vm167 = vcmask 1043456
  %vm168 = vcmask 1044480
  %v169 = vsel %vm167, 4294967295, 65535
  %v170 = vsel %vm168, %v169, 0
  %v172 = vand.u32 %v139, %v170
  %v175 = vand.u32 %v140, %v170
  %v178 = vand.u32 %v141, %v170
  %180 = vmatprep.subr.bf16.mxu0 %v175
  %181 = vmatpush1.bf16.msra.mxu0 %v172
  %182 = vmatprep.subr.bf16.mxu0 0
  %183 = vmatpush1.bf16.msra.mxu0 0
  %184 = vmatprep.subr.bf16.mxu0 0
  %185 = vmatpush1.bf16.msra.mxu0 0
  %186 = vmatprep.subr.bf16.mxu0 0
  %187 = vmatpush1.bf16.msra.mxu0 0
  %188 = vmatprep.subr.bf16.mxu0 0
  %189 = vmatpush1.bf16.msra.mxu0 0
  %190 = vmatprep.subr.bf16.mxu0 0
  %191 = vmatpush1.bf16.msra.mxu0 0
  %192 = vmatprep.subr.bf16.mxu0 0
  %193 = vmatpush1.bf16.msra.mxu0 0
  %194 = vmatprep.subr.bf16.mxu0 0
  %195 = vmatpush1.bf16.msra.mxu0 0
  %196 = vmatprep.subr.bf16.mxu0 0
  %197 = vmatpush1.bf16.msra.mxu0 0
  %198 = vmatprep.subr.bf16.mxu0 0
  %199 = vmatpush1.bf16.msra.mxu0 0
  %200 = vmatprep.subr.bf16.mxu0 0
  %201 = vmatpush1.bf16.msra.mxu0 0
  %202 = vmatprep.subr.bf16.mxu0 0
  %203 = vmatpush1.bf16.msra.mxu0 0
  %204 = vmatprep.subr.bf16.mxu0 0
  %205 = vmatpush1.bf16.msra.mxu0 0
  %206 = vmatprep.subr.bf16.mxu0 0
  %207 = vmatpush1.bf16.msra.mxu0 0
  %208 = vmatprep.subr.bf16.mxu0 0
  %209 = vmatpush1.bf16.msra.mxu0 0
  %210 = vmatprep.subr.bf16.mxu0 0
  %211 = vmatpush1.bf16.msra.mxu0 0
  %212 = vmatprep.mubr.bf16.mxu0 0
  %213 = vmatmul.mubr.bf16.gmra.mrb[0].mxu0 %v144
  %v214 = vpop.f32.mrb[0].mxu0
  %v215 = vadd.f32 %v77, %v214
  %v216 = vpop.f32.mrb[0].mxu0
  %v217 = vadd.f32 %v81, %v216
  %v218 = vpop.f32.mrb[0].mxu0
  %v219 = vadd.f32 %v77, %v218
  %v220 = vpop.f32.mrb[0].mxu0
  %v221 = vadd.f32 %v81, %v220
  %222 = vmatprep.mubr.bf16.mxu0 0
  %223 = vmatmul.mubr.bf16.gmra.mrb[0].mxu0 %v147
  %v224 = vpop.f32.mrb[0].mxu0
  %v225 = vadd.f32 %v77, %v224
  %v226 = vpop.f32.mrb[0].mxu0
  %v227 = vadd.f32 %v81, %v226
  %v228 = vpop.f32.mrb[0].mxu0
  %v229 = vadd.f32 %v77, %v228
  %v230 = vpop.f32.mrb[0].mxu0
  %v231 = vadd.f32 %v81, %v230
  %232 = vmatprep.mubr.bf16.mxu0 0
  %233 = vmatmul.mubr.bf16.gmra.mrb[0].mxu0 %v150
  %v234 = vpop.f32.mrb[0].mxu0
  %v235 = vadd.f32 %v77, %v234
  %v236 = vpop.f32.mrb[0].mxu0
  %v237 = vadd.f32 %v81, %v236
  %v238 = vpop.f32.mrb[0].mxu0
  %v239 = vadd.f32 %v77, %v238
  %v240 = vpop.f32.mrb[0].mxu0
  %v241 = vadd.f32 %v81, %v240
  %242 = vmatprep.mubr.bf16.mxu0 0
  %243 = vmatmul.mubr.bf16.gmra.mrb[0].mxu0 %v153
  %v244 = vpop.f32.mrb[0].mxu0
  %v245 = vadd.f32 %v77, %v244
  %v246 = vpop.f32.mrb[0].mxu0
  %v247 = vadd.f32 %v81, %v246
  %v248 = vpop.f32.mrb[0].mxu0
  %v249 = vadd.f32 %v77, %v248
  %v250 = vpop.f32.mrb[0].mxu0
  %v251 = vadd.f32 %v81, %v250
  %252 = vmatprep.mubr.bf16.mxu0 0
  %253 = vmatmul.mubr.bf16.gmra.mrb[0].mxu0 %v156
  %v254 = vpop.f32.mrb[0].mxu0
  %v255 = vadd.f32 %v77, %v254
  %v256 = vpop.f32.mrb[0].mxu0
  %v257 = vadd.f32 %v81, %v256
  %v258 = vpop.f32.mrb[0].mxu0
  %v259 = vadd.f32 %v77, %v258
  %v260 = vpop.f32.mrb[0].mxu0
  %v261 = vadd.f32 %v81, %v260
  %262 = vmatprep.mubr.bf16.mxu0 0
  %263 = vmatmul.mubr.bf16.gmra.mrb[0].mxu0 %v159
  %v264 = vpop.f32.mrb[0].mxu0
  %v265 = vadd.f32 %v77, %v264
  %v266 = vpop.f32.mrb[0].mxu0
  %v267 = vadd.f32 %v81, %v266
  %v268 = vpop.f32.mrb[0].mxu0
  %v269 = vadd.f32 %v77, %v268
  %v270 = vpop.f32.mrb[0].mxu0
  %v271 = vadd.f32 %v81, %v270
  %272 = vmatprep.mubr.bf16.mxu0 0
  %273 = vmatmul.mubr.bf16.gmra.mrb[0].mxu0 %v162
  %v274 = vpop.f32.mrb[0].mxu0
  %v275 = vadd.f32 %v77, %v274
  %v276 = vpop.f32.mrb[0].mxu0
  %v277 = vadd.f32 %v81, %v276
  %v278 = vpop.f32.mrb[0].mxu0
  %v279 = vadd.f32 %v77, %v278
  %v280 = vpop.f32.mrb[0].mxu0
  %v281 = vadd.f32 %v81, %v280
  %282 = vmatprep.mubr.bf16.mxu0 0
  %283 = vmatmul.mubr.bf16.gmra.mrb[0].mxu0 %v165
  %v284 = vpop.f32.mrb[0].mxu0
  %v285 = vadd.f32 %v77, %v284
  %v286 = vpop.f32.mrb[0].mxu0
  %v287 = vadd.f32 %v81, %v286
  %v288 = vpop.f32.mrb[0].mxu0
  %v289 = vadd.f32 %v77, %v288
  %v290 = vpop.f32.mrb[0].mxu0
  %v291 = vadd.f32 %v81, %v290
  %292 = vdwg.mxu0
  %293 = vmatprep.subr.bf16.mxu0 0
  %294 = vmatpush1.bf16.msra.mxu0 %v178
  %295 = vmatprep.subr.bf16.mxu0 0
  %296 = vmatpush1.bf16.msra.mxu0 0
  %297 = vmatprep.subr.bf16.mxu0 0
  %298 = vmatpush1.bf16.msra.mxu0 0
  %299 = vmatprep.subr.bf16.mxu0 0
  %300 = vmatpush1.bf16.msra.mxu0 0
  %301 = vmatprep.subr.bf16.mxu0 0
  %302 = vmatpush1.bf16.msra.mxu0 0
  %303 = vmatprep.subr.bf16.mxu0 0
  %304 = vmatpush1.bf16.msra.mxu0 0
  %305 = vmatprep.subr.bf16.mxu0 0
  %306 = vmatpush1.bf16.msra.mxu0 0
  %307 = vmatprep.subr.bf16.mxu0 0
  %308 = vmatpush1.bf16.msra.mxu0 0
  %309 = vmatprep.subr.bf16.mxu0 0
  %310 = vmatpush1.bf16.msra.mxu0 0
  %311 = vmatprep.subr.bf16.mxu0 0
  %312 = vmatpush1.bf16.msra.mxu0 0
  %313 = vmatprep.subr.bf16.mxu0 0
  %314 = vmatpush1.bf16.msra.mxu0 0
  %315 = vmatprep.subr.bf16.mxu0 0
  %316 = vmatpush1.bf16.msra.mxu0 0
  %317 = vmatprep.subr.bf16.mxu0 0
  %318 = vmatpush1.bf16.msra.mxu0 0
  %319 = vmatprep.subr.bf16.mxu0 0
  %320 = vmatpush1.bf16.msra.mxu0 0
  %321 = vmatprep.subr.bf16.mxu0 0
  %322 = vmatpush1.bf16.msra.mxu0 0
  %323 = vmatprep.subr.bf16.mxu0 0
  %324 = vmatpush1.bf16.msra.mxu0 0
  %325 = vmatprep.mubr.bf16.mxu0 0
  %326 = vmatmul.mubr.bf16.gmra.mrb[0].mxu0 %v144
  %v327 = vpop.f32.mrb[0].mxu0
  %v328 = vadd.f32 %v85, %v327
  %v329 = vpop.f32.mrb[0].mxu0
  %v330 = vpop.f32.mrb[0].mxu0
  %v331 = vadd.f32 %v85, %v330
  %v332 = vpop.f32.mrb[0].mxu0
  %333 = vmatprep.mubr.bf16.mxu0 0
  %334 = vmatmul.mubr.bf16.gmra.mrb[0].mxu0 %v147
  %v335 = vpop.f32.mrb[0].mxu0
  %v336 = vadd.f32 %v85, %v335
  %v337 = vpop.f32.mrb[0].mxu0
  %v338 = vpop.f32.mrb[0].mxu0
  %v339 = vadd.f32 %v85, %v338
  %v340 = vpop.f32.mrb[0].mxu0
  %341 = vmatprep.mubr.bf16.mxu0 0
  %342 = vmatmul.mubr.bf16.gmra.mrb[0].mxu0 %v150
  %v343 = vpop.f32.mrb[0].mxu0
  %v344 = vadd.f32 %v85, %v343
  %v345 = vpop.f32.mrb[0].mxu0
  %v346 = vpop.f32.mrb[0].mxu0
  %v347 = vadd.f32 %v85, %v346
  %v348 = vpop.f32.mrb[0].mxu0
  %349 = vmatprep.mubr.bf16.mxu0 0
  %350 = vmatmul.mubr.bf16.gmra.mrb[0].mxu0 %v153
  %v351 = vpop.f32.mrb[0].mxu0
  %v352 = vadd.f32 %v85, %v351
  %v353 = vpop.f32.mrb[0].mxu0
  %v354 = vpop.f32.mrb[0].mxu0
  %v355 = vadd.f32 %v85, %v354
  %v356 = vpop.f32.mrb[0].mxu0
  %357 = vmatprep.mubr.bf16.mxu0 0
  %358 = vmatmul.mubr.bf16.gmra.mrb[0].mxu0 %v156
  %v359 = vpop.f32.mrb[0].mxu0
  %v360 = vadd.f32 %v85, %v359
  %v361 = vpop.f32.mrb[0].mxu0
  %v362 = vpop.f32.mrb[0].mxu0
  %v363 = vadd.f32 %v85, %v362
  %v364 = vpop.f32.mrb[0].mxu0
  %365 = vmatprep.mubr.bf16.mxu0 0
  %366 = vmatmul.mubr.bf16.gmra.mrb[0].mxu0 %v159
  %v367 = vpop.f32.mrb[0].mxu0
  %v368 = vadd.f32 %v85, %v367
  %v369 = vpop.f32.mrb[0].mxu0
  %v370 = vpop.f32.mrb[0].mxu0
  %v371 = vadd.f32 %v85, %v370
  %v372 = vpop.f32.mrb[0].mxu0
  %373 = vmatprep.mubr.bf16.mxu0 0
  %374 = vmatmul.mubr.bf16.gmra.mrb[0].mxu0 %v162
  %v375 = vpop.f32.mrb[0].mxu0
  %v376 = vadd.f32 %v85, %v375
  %v377 = vpop.f32.mrb[0].mxu0
  %v378 = vpop.f32.mrb[0].mxu0
  %v379 = vadd.f32 %v85, %v378
  %v380 = vpop.f32.mrb[0].mxu0
  %381 = vmatprep.mubr.bf16.mxu0 0
  %382 = vmatmul.mubr.bf16.gmra.mrb[0].mxu0 %v165
  %v383 = vpop.f32.mrb[0].mxu0
  %v384 = vadd.f32 %v85, %v383
  %v385 = vpop.f32.mrb[0].mxu0
  %v386 = vpop.f32.mrb[0].mxu0
  %v387 = vadd.f32 %v85, %v386
  %v388 = vpop.f32.mrb[0].mxu0
  %389 = vdwg.mxu0
  %v390 = vxor.u32 %v215, 2147483648
  %v391 = vxor.u32 %v217, 2147483648
  %v392 = vxor.u32 %v328, 2147483648
  %v393 = vxor.u32 %v219, 2147483648
  %v394 = vxor.u32 %v221, 2147483648
  %v395 = vxor.u32 %v331, 2147483648
  %v396 = vxor.u32 %v225, 2147483648
  %v397 = vxor.u32 %v227, 2147483648
  %v398 = vxor.u32 %v336, 2147483648
  %v399 = vxor.u32 %v229, 2147483648
  %v400 = vxor.u32 %v231, 2147483648
  %v401 = vxor.u32 %v339, 2147483648
  %v402 = vxor.u32 %v235, 2147483648
  %v403 = vxor.u32 %v237, 2147483648
  %v404 = vxor.u32 %v344, 2147483648
  %v405 = vxor.u32 %v239, 2147483648
  %v406 = vxor.u32 %v241, 2147483648
  %v407 = vxor.u32 %v347, 2147483648
  %v408 = vxor.u32 %v245, 2147483648
  %v409 = vxor.u32 %v247, 2147483648
  %v410 = vxor.u32 %v352, 2147483648
  %v411 = vxor.u32 %v249, 2147483648
  %v412 = vxor.u32 %v251, 2147483648
  %v413 = vxor.u32 %v355, 2147483648
  %v414 = vxor.u32 %v255, 2147483648
  %v415 = vxor.u32 %v257, 2147483648
  %v416 = vxor.u32 %v360, 2147483648
  %v417 = vxor.u32 %v259, 2147483648
  %v418 = vxor.u32 %v261, 2147483648
  %v419 = vxor.u32 %v363, 2147483648
  %v420 = vxor.u32 %v265, 2147483648
  %v421 = vxor.u32 %v267, 2147483648
  %v422 = vxor.u32 %v368, 2147483648
  %v423 = vxor.u32 %v269, 2147483648
  %v424 = vxor.u32 %v271, 2147483648
  %v425 = vxor.u32 %v371, 2147483648
  %v426 = vxor.u32 %v275, 2147483648
  %v427 = vxor.u32 %v277, 2147483648
  %v428 = vxor.u32 %v376, 2147483648
  %v429 = vxor.u32 %v279, 2147483648
  %v430 = vxor.u32 %v281, 2147483648
  %v431 = vxor.u32 %v379, 2147483648
  %v432 = vxor.u32 %v285, 2147483648
  %v433 = vxor.u32 %v287, 2147483648
  %v434 = vxor.u32 %v384, 2147483648
  %v435 = vxor.u32 %v289, 2147483648
  %v436 = vxor.u32 %v291, 2147483648
  %v437 = vxor.u32 %v387, 2147483648
  %v438 = vmul.f32 %v390, 1.442695
  %v439 = vpow.pop %v438
  %v440 = vmul.f32 %v391, 1.442695
  %v441 = vpow.pop %v440
  %v442 = vmul.f32 %v392, 1.442695
  %v443 = vpow.pop %v442
  %v444 = vmul.f32 %v393, 1.442695
  %v445 = vpow.pop %v444
  %v446 = vmul.f32 %v394, 1.442695
  %v447 = vpow.pop %v446
  %v448 = vmul.f32 %v395, 1.442695
  %v449 = vpow.pop %v448
  %v450 = vmul.f32 %v396, 1.442695
  %v451 = vpow.pop %v450
  %v452 = vmul.f32 %v397, 1.442695
  %v453 = vpow.pop %v452
  %v454 = vmul.f32 %v398, 1.442695
  %v455 = vpow.pop %v454
  %v456 = vmul.f32 %v399, 1.442695
  %v457 = vpow.pop %v456
  %v458 = vmul.f32 %v400, 1.442695
  %v459 = vpow.pop %v458
  %v460 = vmul.f32 %v401, 1.442695
  %v461 = vpow.pop %v460
  %v462 = vmul.f32 %v402, 1.442695
  %v463 = vpow.pop %v462
  %v464 = vmul.f32 %v403, 1.442695
  %v465 = vpow.pop %v464
  %v466 = vmul.f32 %v404, 1.442695
  %v467 = vpow.pop %v466
  %v468 = vmul.f32 %v405, 1.442695
  %v469 = vpow.pop %v468
  %v470 = vmul.f32 %v406, 1.442695
  %v471 = vpow.pop %v470
  %v472 = vmul.f32 %v407, 1.442695
  %v473 = vpow.pop %v472
  %v474 = vmul.f32 %v408, 1.442695
  %v475 = vpow.pop %v474
  %v476 = vmul.f32 %v409, 1.442695
  %v477 = vpow.pop %v476
  %v478 = vmul.f32 %v410, 1.442695
  %v479 = vpow.pop %v478
  %v480 = vmul.f32 %v411, 1.442695
  %v481 = vpow.pop %v480
  %v482 = vmul.f32 %v412, 1.442695
  %v483 = vpow.pop %v482
  %v484 = vmul.f32 %v413, 1.442695
  %v485 = vpow.pop %v484
  %v486 = vmul.f32 %v414, 1.442695
  %v487 = vpow.pop %v486
  %v488 = vmul.f32 %v415, 1.442695
  %v489 = vpow.pop %v488
  %v490 = vmul.f32 %v416, 1.442695
  %v491 = vpow.pop %v490
  %v492 = vmul.f32 %v417, 1.442695
  %v493 = vpow.pop %v492
  %v494 = vmul.f32 %v418, 1.442695
  %v495 = vpow.pop %v494
  %v496 = vmul.f32 %v419, 1.442695
  %v497 = vpow.pop %v496
  %v498 = vmul.f32 %v420, 1.442695
  %v499 = vpow.pop %v498
  %v500 = vmul.f32 %v421, 1.442695
  %v501 = vpow.pop %v500
  %v502 = vmul.f32 %v422, 1.442695
  %v503 = vpow.pop %v502
  %v504 = vmul.f32 %v423, 1.442695
  %v505 = vpow.pop %v504
  %v506 = vmul.f32 %v424, 1.442695
  %v507 = vpow.pop %v506
  %v508 = vmul.f32 %v425, 1.442695
  %v509 = vpow.pop %v508
  %v510 = vmul.f32 %v426, 1.442695
  %v511 = vpow.pop %v510
  %v512 = vmul.f32 %v427, 1.442695
  %v513 = vpow.pop %v512
  %v514 = vmul.f32 %v428, 1.442695
  %v515 = vpow.pop %v514
  %v516 = vmul.f32 %v429, 1.442695
  %v517 = vpow.pop %v516
  %v518 = vmul.f32 %v430, 1.442695
  %v519 = vpow.pop %v518
  %v520 = vmul.f32 %v431, 1.442695
  %v521 = vpow.pop %v520
  %v522 = vmul.f32 %v432, 1.442695
  %v523 = vpow.pop %v522
  %v524 = vmul.f32 %v433, 1.442695
  %v525 = vpow.pop %v524
  %v526 = vmul.f32 %v434, 1.442695
  %v527 = vpow.pop %v526
  %v528 = vmul.f32 %v435, 1.442695
  %v529 = vpow.pop %v528
  %v530 = vmul.f32 %v436, 1.442695
  %v531 = vpow.pop %v530
  %v532 = vmul.f32 %v437, 1.442695
  %v533 = vpow.pop %v532
  %v534 = vadd.f32 %v439, 1.0
  %v535 = vadd.f32 %v441, 1.0
  %v536 = vadd.f32 %v443, 1.0
  %v537 = vadd.f32 %v445, 1.0
  %v538 = vadd.f32 %v447, 1.0
  %v539 = vadd.f32 %v449, 1.0
  %v540 = vadd.f32 %v451, 1.0
  %v541 = vadd.f32 %v453, 1.0
  %v542 = vadd.f32 %v455, 1.0
  %v543 = vadd.f32 %v457, 1.0
  %v544 = vadd.f32 %v459, 1.0
  %v545 = vadd.f32 %v461, 1.0
  %v546 = vadd.f32 %v463, 1.0
  %v547 = vadd.f32 %v465, 1.0
  %v548 = vadd.f32 %v467, 1.0
  %v549 = vadd.f32 %v469, 1.0
  %v550 = vadd.f32 %v471, 1.0
  %v551 = vadd.f32 %v473, 1.0
  %v552 = vadd.f32 %v475, 1.0
  %v553 = vadd.f32 %v477, 1.0
  %v554 = vadd.f32 %v479, 1.0
  %v555 = vadd.f32 %v481, 1.0
  %v556 = vadd.f32 %v483, 1.0
  %v557 = vadd.f32 %v485, 1.0
  %v558 = vadd.f32 %v487, 1.0
  %v559 = vadd.f32 %v489, 1.0
  %v560 = vadd.f32 %v491, 1.0
  %v561 = vadd.f32 %v493, 1.0
  %v562 = vadd.f32 %v495, 1.0
  %v563 = vadd.f32 %v497, 1.0
  %v564 = vadd.f32 %v499, 1.0
  %v565 = vadd.f32 %v501, 1.0
  %v566 = vadd.f32 %v503, 1.0
  %v567 = vadd.f32 %v505, 1.0
  %v568 = vadd.f32 %v507, 1.0
  %v569 = vadd.f32 %v509, 1.0
  %v570 = vadd.f32 %v511, 1.0
  %v571 = vadd.f32 %v513, 1.0
  %v572 = vadd.f32 %v515, 1.0
  %v573 = vadd.f32 %v517, 1.0
  %v574 = vadd.f32 %v519, 1.0
  %v575 = vadd.f32 %v521, 1.0
  %v576 = vadd.f32 %v523, 1.0
  %v577 = vadd.f32 %v525, 1.0
  %v578 = vadd.f32 %v527, 1.0
  %v579 = vadd.f32 %v529, 1.0
  %v580 = vadd.f32 %v531, 1.0
  %v581 = vadd.f32 %v533, 1.0
  %v582 = vrcp.pop %v534
  %v583 = vmul.f32 1.0, %v582
  %v584 = vrcp.pop %v535
  %v585 = vmul.f32 1.0, %v584
  %v586 = vrcp.pop %v536
  %v587 = vmul.f32 1.0, %v586
  %v588 = vrcp.pop %v537
  %v589 = vmul.f32 1.0, %v588
  %v590 = vrcp.pop %v538
  %v591 = vmul.f32 1.0, %v590
  %v592 = vrcp.pop %v539
  %v593 = vmul.f32 1.0, %v592
  %v594 = vrcp.pop %v540
  %v595 = vmul.f32 1.0, %v594
  %v596 = vrcp.pop %v541
  %v597 = vmul.f32 1.0, %v596
  %v598 = vrcp.pop %v542
  %v599 = vmul.f32 1.0, %v598
  %v600 = vrcp.pop %v543
  %v601 = vmul.f32 1.0, %v600
  %v602 = vrcp.pop %v544
  %v603 = vmul.f32 1.0, %v602
  %v604 = vrcp.pop %v545
  %v605 = vmul.f32 1.0, %v604
  %v606 = vrcp.pop %v546
  %v607 = vmul.f32 1.0, %v606
  %v608 = vrcp.pop %v547
  %v609 = vmul.f32 1.0, %v608
  %v610 = vrcp.pop %v548
  %v611 = vmul.f32 1.0, %v610
  %v612 = vrcp.pop %v549
  %v613 = vmul.f32 1.0, %v612
  %v614 = vrcp.pop %v550
  %v615 = vmul.f32 1.0, %v614
  %v616 = vrcp.pop %v551
  %v617 = vmul.f32 1.0, %v616
  %v618 = vrcp.pop %v552
  %v619 = vmul.f32 1.0, %v618
  %v620 = vrcp.pop %v553
  %v621 = vmul.f32 1.0, %v620
  %v622 = vrcp.pop %v554
  %v623 = vmul.f32 1.0, %v622
  %v624 = vrcp.pop %v555
  %v625 = vmul.f32 1.0, %v624
  %v626 = vrcp.pop %v556
  %v627 = vmul.f32 1.0, %v626
  %v628 = vrcp.pop %v557
  %v629 = vmul.f32 1.0, %v628
  %v630 = vrcp.pop %v558
  %v631 = vmul.f32 1.0, %v630
  %v632 = vrcp.pop %v559
  %v633 = vmul.f32 1.0, %v632
  %v634 = vrcp.pop %v560
  %v635 = vmul.f32 1.0, %v634
  %v636 = vrcp.pop %v561
  %v637 = vmul.f32 1.0, %v636
  %v638 = vrcp.pop %v562
  %v639 = vmul.f32 1.0, %v638
  %v640 = vrcp.pop %v563
  %v641 = vmul.f32 1.0, %v640
  %v642 = vrcp.pop %v564
  %v643 = vmul.f32 1.0, %v642
  %v644 = vrcp.pop %v565
  %v645 = vmul.f32 1.0, %v644
  %v646 = vrcp.pop %v566
  %v647 = vmul.f32 1.0, %v646
  %v648 = vrcp.pop %v567
  %v649 = vmul.f32 1.0, %v648
  %v650 = vrcp.pop %v568
  %v651 = vmul.f32 1.0, %v650
  %v652 = vrcp.pop %v569
  %v653 = vmul.f32 1.0, %v652
  %v654 = vrcp.pop %v570
  %v655 = vmul.f32 1.0, %v654
  %v656 = vrcp.pop %v571
  %v657 = vmul.f32 1.0, %v656
  %v658 = vrcp.pop %v572
  %v659 = vmul.f32 1.0, %v658
  %v660 = vrcp.pop %v573
  %v661 = vmul.f32 1.0, %v660
  %v662 = vrcp.pop %v574
  %v663 = vmul.f32 1.0, %v662
  %v664 = vrcp.pop %v575
  %v665 = vmul.f32 1.0, %v664
  %v666 = vrcp.pop %v576
  %v667 = vmul.f32 1.0, %v666
  %v668 = vrcp.pop %v577
  %v669 = vmul.f32 1.0, %v668
  %v670 = vrcp.pop %v578
  %v671 = vmul.f32 1.0, %v670
  %v672 = vrcp.pop %v579
  %v673 = vmul.f32 1.0, %v672
  %v674 = vrcp.pop %v580
  %v675 = vmul.f32 1.0, %v674
  %v676 = vrcp.pop %v581
  %v677 = vmul.f32 1.0, %v676
  %v678 = vmul.f32 %v215, %v583
  %v679 = vmul.f32 %v217, %v585
  %v680 = vmul.f32 %v328, %v587
  %v681 = vmul.f32 %v219, %v589
  %v682 = vmul.f32 %v221, %v591
  %v683 = vmul.f32 %v331, %v593
  %v684 = vmul.f32 %v225, %v595
  %v685 = vmul.f32 %v227, %v597
  %v686 = vmul.f32 %v336, %v599
  %v687 = vmul.f32 %v229, %v601
  %v688 = vmul.f32 %v231, %v603
  %v689 = vmul.f32 %v339, %v605
  %v690 = vmul.f32 %v235, %v607
  %v691 = vmul.f32 %v237, %v609
  %v692 = vmul.f32 %v344, %v611
  %v693 = vmul.f32 %v239, %v613
  %v694 = vmul.f32 %v241, %v615
  %v695 = vmul.f32 %v347, %v617
  %v696 = vmul.f32 %v245, %v619
  %v697 = vmul.f32 %v247, %v621
  %v698 = vmul.f32 %v352, %v623
  %v699 = vmul.f32 %v249, %v625
  %v700 = vmul.f32 %v251, %v627
  %v701 = vmul.f32 %v355, %v629
  %v702 = vmul.f32 %v255, %v631
  %v703 = vmul.f32 %v257, %v633
  %v704 = vmul.f32 %v360, %v635
  %v705 = vmul.f32 %v259, %v637
  %v706 = vmul.f32 %v261, %v639
  %v707 = vmul.f32 %v363, %v641
  %v708 = vmul.f32 %v265, %v643
  %v709 = vmul.f32 %v267, %v645
  %v710 = vmul.f32 %v368, %v647
  %v711 = vmul.f32 %v269, %v649
  %v712 = vmul.f32 %v271, %v651
  %v713 = vmul.f32 %v371, %v653
  %v714 = vmul.f32 %v275, %v655
  %v715 = vmul.f32 %v277, %v657
  %v716 = vmul.f32 %v376, %v659
  %v717 = vmul.f32 %v279, %v661
  %v718 = vmul.f32 %v281, %v663
  %v719 = vmul.f32 %v379, %v665
  %v720 = vmul.f32 %v285, %v667
  %v721 = vmul.f32 %v287, %v669
  %v722 = vmul.f32 %v384, %v671
  %v723 = vmul.f32 %v289, %v673
  %v724 = vmul.f32 %v291, %v675
  %v725 = vmul.f32 %v387, %v677
  %v726 = vadd.f32 %v678, %v679
  %v727 = vadd.f32 %v681, %v682
  %v728 = vadd.f32 %v684, %v685
  %v729 = vadd.f32 %v687, %v688
  %v730 = vadd.f32 %v690, %v691
  %v731 = vadd.f32 %v693, %v694
  %v732 = vadd.f32 %v696, %v697
  %v733 = vadd.f32 %v699, %v700
  %v734 = vadd.f32 %v702, %v703
  %v735 = vadd.f32 %v705, %v706
  %v736 = vadd.f32 %v708, %v709
  %v737 = vadd.f32 %v711, %v712
  %v738 = vadd.f32 %v714, %v715
  %v739 = vadd.f32 %v717, %v718
  %v740 = vadd.f32 %v720, %v721
  %v741 = vadd.f32 %v723, %v724
  %v742 = vadd.f32 %v726, %v680
  %v743 = vadd.f32 %v727, %v683
  %v744 = vadd.f32 %v728, %v686
  %v745 = vadd.f32 %v729, %v689
  %v746 = vadd.f32 %v730, %v692
  %v747 = vadd.f32 %v731, %v695
  %v748 = vadd.f32 %v732, %v698
  %v749 = vadd.f32 %v733, %v701
  %v750 = vadd.f32 %v734, %v704
  %v751 = vadd.f32 %v735, %v707
  %v752 = vadd.f32 %v736, %v710
  %v753 = vadd.f32 %v737, %v713
  %v754 = vadd.f32 %v738, %v716
  %v755 = vadd.f32 %v739, %v719
  %v756 = vadd.f32 %v740, %v722
  %v757 = vadd.f32 %v741, %v725
  %v758 = vmul.f32 %v742, 0.33333334
  %v759 = vmul.f32 %v743, 0.33333334
  %v760 = vmul.f32 %v744, 0.33333334
  %v761 = vmul.f32 %v745, 0.33333334
  %v762 = vmul.f32 %v746, 0.33333334
  %v763 = vmul.f32 %v747, 0.33333334
  %v764 = vmul.f32 %v748, 0.33333334
  %v765 = vmul.f32 %v749, 0.33333334
  %v766 = vmul.f32 %v750, 0.33333334
  %v767 = vmul.f32 %v751, 0.33333334
  %v768 = vmul.f32 %v752, 0.33333334
  %v769 = vmul.f32 %v753, 0.33333334
  %v770 = vmul.f32 %v754, 0.33333334
  %v771 = vmul.f32 %v755, 0.33333334
  %v772 = vmul.f32 %v756, 0.33333334
  %v773 = vmul.f32 %v757, 0.33333334
  %v774 = vpack.c.bf16 %v759, %v758
  %v775 = vpack.c.bf16 %v761, %v760
  %v776 = vpack.c.bf16 %v763, %v762
  %v777 = vpack.c.bf16 %v765, %v764
  %v778 = vpack.c.bf16 %v767, %v766
  %v779 = vpack.c.bf16 %v769, %v768
  %v780 = vpack.c.bf16 %v771, %v770
  %v781 = vpack.c.bf16 %v773, %v772
  %v782 = vld [vmem:[%s3] sm:$0xf]
  %v783 = vld [vmem:[%s3 + $0x4] sm:$0xf]
  %v784 = vld [vmem:[%s3 + $0x8] sm:$0xf]
  %v785 = vld [vmem:[%s3 + $0xc] sm:$0xf]
  %v786 = vld [vmem:[%s3 + $0x10] sm:$0xf]
  %v787 = vld [vmem:[%s3 + $0x14] sm:$0xf]
  %v788 = vld [vmem:[%s3 + $0x18] sm:$0xf]
  %v789 = vld [vmem:[%s3 + $0x1c] sm:$0xf]
  %v790 = vld [vmem:[%s3 + $0x20] sm:$0xf]
  %v791 = vld [vmem:[%s3 + $0x24] sm:$0xf]
  %v792 = vld [vmem:[%s3 + $0x28] sm:$0xf]
  %v793 = vld [vmem:[%s3 + $0x2c] sm:$0xf]
  %v794 = vld [vmem:[%s3 + $0x30] sm:$0xf]
  %v795 = vld [vmem:[%s3 + $0x34] sm:$0xf]
  %v796 = vld [vmem:[%s3 + $0x38] sm:$0xf]
  %v797 = vld [vmem:[%s3 + $0x3c] sm:$0xf]
  %v798 = vld [vmem:[%s4] sm:$0x1]
  %v800 = vlaneseq
  %v801 = vshrl.u32 %v800, 7
  %v802 = vsub.s32 0, %v801
  %v803 = vrot.slane %v798, %v802
  %v821 = vunpack.c.l.b16 %v782
  %v822 = vunpack.c.l.b16 %v783
  %v823 = vunpack.c.l.b16 %v784
  %v824 = vunpack.c.l.b16 %v785
  %v825 = vunpack.c.l.b16 %v786
  %v826 = vunpack.c.l.b16 %v787
  %v827 = vunpack.c.l.b16 %v788
  %v828 = vunpack.c.l.b16 %v789
  %v829 = vunpack.c.l.b16 %v790
  %v830 = vunpack.c.l.b16 %v791
  %v831 = vunpack.c.l.b16 %v792
  %v832 = vunpack.c.l.b16 %v793
  %v833 = vunpack.c.l.b16 %v794
  %v834 = vunpack.c.l.b16 %v795
  %v835 = vunpack.c.l.b16 %v796
  %v836 = vunpack.c.l.b16 %v797
  %v837 = vpack.c.b16 %v822, %v821
  %v838 = vpack.c.b16 %v824, %v823
  %v839 = vpack.c.b16 %v826, %v825
  %v840 = vpack.c.b16 %v828, %v827
  %v841 = vpack.c.b16 %v830, %v829
  %v842 = vpack.c.b16 %v832, %v831
  %v843 = vpack.c.b16 %v834, %v833
  %v844 = vpack.c.b16 %v836, %v835
  %853 = vmatprep.subr.bf16.mxu0 0
  %854 = vmatpush1.bf16.msra.mxu0 %v837
  %855 = vmatprep.subr.bf16.mxu0 0
  %856 = vmatpush1.bf16.msra.mxu0 %v838
  %857 = vmatprep.subr.bf16.mxu0 0
  %858 = vmatpush1.bf16.msra.mxu0 %v839
  %859 = vmatprep.subr.bf16.mxu0 0
  %860 = vmatpush1.bf16.msra.mxu0 %v840
  %861 = vmatprep.subr.bf16.mxu0 0
  %862 = vmatpush1.bf16.msra.mxu0 %v841
  %863 = vmatprep.subr.bf16.mxu0 0
  %864 = vmatpush1.bf16.msra.mxu0 %v842
  %865 = vmatprep.subr.bf16.mxu0 0
  %866 = vmatpush1.bf16.msra.mxu0 %v843
  %867 = vmatprep.subr.bf16.mxu0 0
  %868 = vmatpush1.bf16.msra.mxu0 %v844
  %869 = vmatprep.subr.bf16.mxu0 0
  %870 = vmatpush1.bf16.msra.mxu0 0
  %871 = vmatprep.subr.bf16.mxu0 0
  %872 = vmatpush1.bf16.msra.mxu0 0
  %873 = vmatprep.subr.bf16.mxu0 0
  %874 = vmatpush1.bf16.msra.mxu0 0
  %875 = vmatprep.subr.bf16.mxu0 0
  %876 = vmatpush1.bf16.msra.mxu0 0
  %877 = vmatprep.subr.bf16.mxu0 0
  %878 = vmatpush1.bf16.msra.mxu0 0
  %879 = vmatprep.subr.bf16.mxu0 0
  %880 = vmatpush1.bf16.msra.mxu0 0
  %881 = vmatprep.subr.bf16.mxu0 0
  %882 = vmatpush1.bf16.msra.mxu0 0
  %883 = vmatprep.subr.bf16.mxu0 0
  %884 = vmatpush1.bf16.msra.mxu0 0
  %885 = vmatprep.mubr.bf16.mxu0 0
  %886 = vmatmul.mubr.bf16.gmra.mrb[0].mxu0 %v774
  %v887 = vpop.f32.mrb[0].mxu0
  %v888 = vadd.f32 %v803, %v887
  %v889 = vpop.f32.mrb[0].mxu0
  %v890 = vpop.f32.mrb[0].mxu0
  %v891 = vadd.f32 %v803, %v890
  %v892 = vpop.f32.mrb[0].mxu0
  %893 = vmatprep.mubr.bf16.mxu0 0
  %894 = vmatmul.mubr.bf16.gmra.mrb[0].mxu0 %v775
  %v895 = vpop.f32.mrb[0].mxu0
  %v896 = vadd.f32 %v803, %v895
  %v897 = vpop.f32.mrb[0].mxu0
  %v898 = vpop.f32.mrb[0].mxu0
  %v899 = vadd.f32 %v803, %v898
  %v900 = vpop.f32.mrb[0].mxu0
  %901 = vmatprep.mubr.bf16.mxu0 0
  %902 = vmatmul.mubr.bf16.gmra.mrb[0].mxu0 %v776
  %v903 = vpop.f32.mrb[0].mxu0
  %v904 = vadd.f32 %v803, %v903
  %v905 = vpop.f32.mrb[0].mxu0
  %v906 = vpop.f32.mrb[0].mxu0
  %v907 = vadd.f32 %v803, %v906
  %v908 = vpop.f32.mrb[0].mxu0
  %909 = vmatprep.mubr.bf16.mxu0 0
  %910 = vmatmul.mubr.bf16.gmra.mrb[0].mxu0 %v777
  %v911 = vpop.f32.mrb[0].mxu0
  %v912 = vadd.f32 %v803, %v911
  %v913 = vpop.f32.mrb[0].mxu0
  %v914 = vpop.f32.mrb[0].mxu0
  %v915 = vadd.f32 %v803, %v914
  %v916 = vpop.f32.mrb[0].mxu0
  %917 = vmatprep.mubr.bf16.mxu0 0
  %918 = vmatmul.mubr.bf16.gmra.mrb[0].mxu0 %v778
  %v919 = vpop.f32.mrb[0].mxu0
  %v920 = vadd.f32 %v803, %v919
  %v921 = vpop.f32.mrb[0].mxu0
  %v922 = vpop.f32.mrb[0].mxu0
  %v923 = vadd.f32 %v803, %v922
  %v924 = vpop.f32.mrb[0].mxu0
  %925 = vmatprep.mubr.bf16.mxu0 0
  %926 = vmatmul.mubr.bf16.gmra.mrb[0].mxu0 %v779
  %v927 = vpop.f32.mrb[0].mxu0
  %v928 = vadd.f32 %v803, %v927
  %v929 = vpop.f32.mrb[0].mxu0
  %v930 = vpop.f32.mrb[0].mxu0
  %v931 = vadd.f32 %v803, %v930
  %v932 = vpop.f32.mrb[0].mxu0
  %933 = vmatprep.mubr.bf16.mxu0 0
  %934 = vmatmul.mubr.bf16.gmra.mrb[0].mxu0 %v780
  %v935 = vpop.f32.mrb[0].mxu0
  %v936 = vadd.f32 %v803, %v935
  %v937 = vpop.f32.mrb[0].mxu0
  %v938 = vpop.f32.mrb[0].mxu0
  %v939 = vadd.f32 %v803, %v938
  %v940 = vpop.f32.mrb[0].mxu0
  %941 = vmatprep.mubr.bf16.mxu0 0
  %942 = vmatmul.mubr.bf16.gmra.mrb[0].mxu0 %v781
  %v943 = vpop.f32.mrb[0].mxu0
  %v944 = vadd.f32 %v803, %v943
  %v945 = vpop.f32.mrb[0].mxu0
  %v946 = vpop.f32.mrb[0].mxu0
  %v947 = vadd.f32 %v803, %v946
  %v948 = vpop.f32.mrb[0].mxu0
  %949 = vdwg.mxu0
  %vm950 = vcmask 23552
  %v951 = vsel %vm950, %v888, -inf
  %952 = vmax.xlane.f32.xlu0 %v951
  %v953 = vpop.xlane.xlu0 %952
  %v954 = vsel %vm950, %v891, -inf
  %955 = vmax.xlane.f32.xlu0 %v954
  %v956 = vpop.xlane.xlu0 %955
  %v957 = vsel %vm950, %v896, -inf
  %958 = vmax.xlane.f32.xlu0 %v957
  %v959 = vpop.xlane.xlu0 %958
  %v960 = vsel %vm950, %v899, -inf
  %961 = vmax.xlane.f32.xlu0 %v960
  %v962 = vpop.xlane.xlu0 %961
  %v963 = vsel %vm950, %v904, -inf
  %964 = vmax.xlane.f32.xlu0 %v963
  %v965 = vpop.xlane.xlu0 %964
  %v966 = vsel %vm950, %v907, -inf
  %967 = vmax.xlane.f32.xlu0 %v966
  %v968 = vpop.xlane.xlu0 %967
  %v969 = vsel %vm950, %v912, -inf
  %970 = vmax.xlane.f32.xlu0 %v969
  %v971 = vpop.xlane.xlu0 %970
  %v972 = vsel %vm950, %v915, -inf
  %973 = vmax.xlane.f32.xlu0 %v972
  %v974 = vpop.xlane.xlu0 %973
  %v975 = vsel %vm950, %v920, -inf
  %976 = vmax.xlane.f32.xlu0 %v975
  %v977 = vpop.xlane.xlu0 %976
  %v978 = vsel %vm950, %v923, -inf
  %979 = vmax.xlane.f32.xlu0 %v978
  %v980 = vpop.xlane.xlu0 %979
  %v981 = vsel %vm950, %v928, -inf
  %982 = vmax.xlane.f32.xlu0 %v981
  %v983 = vpop.xlane.xlu0 %982
  %v984 = vsel %vm950, %v931, -inf
  %985 = vmax.xlane.f32.xlu0 %v984
  %v986 = vpop.xlane.xlu0 %985
  %v987 = vsel %vm950, %v936, -inf
  %988 = vmax.xlane.f32.xlu0 %v987
  %v989 = vpop.xlane.xlu0 %988
  %v990 = vsel %vm950, %v939, -inf
  %991 = vmax.xlane.f32.xlu0 %v990
  %v992 = vpop.xlane.xlu0 %991
  %v993 = vsel %vm950, %v944, -inf
  %994 = vmax.xlane.f32.xlu0 %v993
  %v995 = vpop.xlane.xlu0 %994
  %v996 = vsel %vm950, %v947, -inf
  %997 = vmax.xlane.f32.xlu0 %v996
  %v998 = vpop.xlane.xlu0 %997
  %v999 = vsub.f32 %v888, %v953
  %v1000 = vsub.f32 %v891, %v956
  %v1001 = vsub.f32 %v896, %v959
  %v1002 = vsub.f32 %v899, %v962
  %v1003 = vsub.f32 %v904, %v965
  %v1004 = vsub.f32 %v907, %v968
  %v1005 = vsub.f32 %v912, %v971
  %v1006 = vsub.f32 %v915, %v974
  %v1007 = vsub.f32 %v920, %v977
  %v1008 = vsub.f32 %v923, %v980
  %v1009 = vsub.f32 %v928, %v983
  %v1010 = vsub.f32 %v931, %v986
  %v1011 = vsub.f32 %v936, %v989
  %v1012 = vsub.f32 %v939, %v992
  %v1013 = vsub.f32 %v944, %v995
  %v1014 = vsub.f32 %v947, %v998
  %v1015 = vmul.f32 %v999, 1.442695
  %v1016 = vpow.pop %v1015
  %v1017 = vmul.f32 %v1000, 1.442695
  %v1018 = vpow.pop %v1017
  %v1019 = vmul.f32 %v1001, 1.442695
  %v1020 = vpow.pop %v1019
  %v1021 = vmul.f32 %v1002, 1.442695
  %v1022 = vpow.pop %v1021
  %v1023 = vmul.f32 %v1003, 1.442695
  %v1024 = vpow.pop %v1023
  %v1025 = vmul.f32 %v1004, 1.442695
  %v1026 = vpow.pop %v1025
  %v1027 = vmul.f32 %v1005, 1.442695
  %v1028 = vpow.pop %v1027
  %v1029 = vmul.f32 %v1006, 1.442695
  %v1030 = vpow.pop %v1029
  %v1031 = vmul.f32 %v1007, 1.442695
  %v1032 = vpow.pop %v1031
  %v1033 = vmul.f32 %v1008, 1.442695
  %v1034 = vpow.pop %v1033
  %v1035 = vmul.f32 %v1009, 1.442695
  %v1036 = vpow.pop %v1035
  %v1037 = vmul.f32 %v1010, 1.442695
  %v1038 = vpow.pop %v1037
  %v1039 = vmul.f32 %v1011, 1.442695
  %v1040 = vpow.pop %v1039
  %v1041 = vmul.f32 %v1012, 1.442695
  %v1042 = vpow.pop %v1041
  %v1043 = vmul.f32 %v1013, 1.442695
  %v1044 = vpow.pop %v1043
  %v1045 = vmul.f32 %v1014, 1.442695
  %v1046 = vpow.pop %v1045
  %v1047 = vsel %vm950, %v1016, 0.0
  %1048 = vadd.xlane.f32.xlu0 %v1047
  %v1049 = vpop.xlane.xlu0 %1048
  %v1050 = vsel %vm950, %v1018, 0.0
  %1051 = vadd.xlane.f32.xlu0 %v1050
  %v1052 = vpop.xlane.xlu0 %1051
  %v1053 = vsel %vm950, %v1020, 0.0
  %1054 = vadd.xlane.f32.xlu0 %v1053
  %v1055 = vpop.xlane.xlu0 %1054
  %v1056 = vsel %vm950, %v1022, 0.0
  %1057 = vadd.xlane.f32.xlu0 %v1056
  %v1058 = vpop.xlane.xlu0 %1057
  %v1059 = vsel %vm950, %v1024, 0.0
  %1060 = vadd.xlane.f32.xlu0 %v1059
  %v1061 = vpop.xlane.xlu0 %1060
  %v1062 = vsel %vm950, %v1026, 0.0
  %1063 = vadd.xlane.f32.xlu0 %v1062
  %v1064 = vpop.xlane.xlu0 %1063
  %v1065 = vsel %vm950, %v1028, 0.0
  %1066 = vadd.xlane.f32.xlu0 %v1065
  %v1067 = vpop.xlane.xlu0 %1066
  %v1068 = vsel %vm950, %v1030, 0.0
  %1069 = vadd.xlane.f32.xlu0 %v1068
  %v1070 = vpop.xlane.xlu0 %1069
  %v1071 = vsel %vm950, %v1032, 0.0
  %1072 = vadd.xlane.f32.xlu0 %v1071
  %v1073 = vpop.xlane.xlu0 %1072
  %v1074 = vsel %vm950, %v1034, 0.0
  %1075 = vadd.xlane.f32.xlu0 %v1074
  %v1076 = vpop.xlane.xlu0 %1075
  %v1077 = vsel %vm950, %v1036, 0.0
  %1078 = vadd.xlane.f32.xlu0 %v1077
  %v1079 = vpop.xlane.xlu0 %1078
  %v1080 = vsel %vm950, %v1038, 0.0
  %1081 = vadd.xlane.f32.xlu0 %v1080
  %v1082 = vpop.xlane.xlu0 %1081
  %v1083 = vsel %vm950, %v1040, 0.0
  %1084 = vadd.xlane.f32.xlu0 %v1083
  %v1085 = vpop.xlane.xlu0 %1084
  %v1086 = vsel %vm950, %v1042, 0.0
  %1087 = vadd.xlane.f32.xlu0 %v1086
  %v1088 = vpop.xlane.xlu0 %1087
  %v1089 = vsel %vm950, %v1044, 0.0
  %1090 = vadd.xlane.f32.xlu0 %v1089
  %v1091 = vpop.xlane.xlu0 %1090
  %v1092 = vsel %vm950, %v1046, 0.0
  %1093 = vadd.xlane.f32.xlu0 %v1092
  %v1094 = vpop.xlane.xlu0 %1093
  %v1095 = vrcp.pop %v1049
  %v1096 = vmul.f32 1.0, %v1095
  %v1097 = vrcp.pop %v1052
  %v1098 = vmul.f32 1.0, %v1097
  %v1099 = vrcp.pop %v1055
  %v1100 = vmul.f32 1.0, %v1099
  %v1101 = vrcp.pop %v1058
  %v1102 = vmul.f32 1.0, %v1101
  %v1103 = vrcp.pop %v1061
  %v1104 = vmul.f32 1.0, %v1103
  %v1105 = vrcp.pop %v1064
  %v1106 = vmul.f32 1.0, %v1105
  %v1107 = vrcp.pop %v1067
  %v1108 = vmul.f32 1.0, %v1107
  %v1109 = vrcp.pop %v1070
  %v1110 = vmul.f32 1.0, %v1109
  %v1111 = vrcp.pop %v1073
  %v1112 = vmul.f32 1.0, %v1111
  %v1113 = vrcp.pop %v1076
  %v1114 = vmul.f32 1.0, %v1113
  %v1115 = vrcp.pop %v1079
  %v1116 = vmul.f32 1.0, %v1115
  %v1117 = vrcp.pop %v1082
  %v1118 = vmul.f32 1.0, %v1117
  %v1119 = vrcp.pop %v1085
  %v1120 = vmul.f32 1.0, %v1119
  %v1121 = vrcp.pop %v1088
  %v1122 = vmul.f32 1.0, %v1121
  %v1123 = vrcp.pop %v1091
  %v1124 = vmul.f32 1.0, %v1123
  %v1125 = vrcp.pop %v1094
  %v1126 = vmul.f32 1.0, %v1125
  %v1127 = vmul.f32 %v1016, %v1096
  %v1128 = vmul.f32 %v1018, %v1098
  %v1129 = vmul.f32 %v1020, %v1100
  %v1130 = vmul.f32 %v1022, %v1102
  %v1131 = vmul.f32 %v1024, %v1104
  %v1132 = vmul.f32 %v1026, %v1106
  %v1133 = vmul.f32 %v1028, %v1108
  %v1134 = vmul.f32 %v1030, %v1110
  %v1135 = vmul.f32 %v1032, %v1112
  %v1136 = vmul.f32 %v1034, %v1114
  %v1137 = vmul.f32 %v1036, %v1116
  %v1138 = vmul.f32 %v1038, %v1118
  %v1139 = vmul.f32 %v1040, %v1120
  %v1140 = vmul.f32 %v1042, %v1122
  %v1141 = vmul.f32 %v1044, %v1124
  %v1142 = vmul.f32 %v1046, %v1126
  %v1143 = vsel %vm950, %v1127, -inf
  %1144 = vmax.xlane.f32.xlu0 %v1143
  %v1145 = vpop.xlane.xlu0 %1144
  %v1146 = vsel %vm950, %v1128, -inf
  %1147 = vmax.xlane.f32.xlu0 %v1146
  %v1148 = vpop.xlane.xlu0 %1147
  %v1149 = vsel %vm950, %v1129, -inf
  %1150 = vmax.xlane.f32.xlu0 %v1149
  %v1151 = vpop.xlane.xlu0 %1150
  %v1152 = vsel %vm950, %v1130, -inf
  %1153 = vmax.xlane.f32.xlu0 %v1152
  %v1154 = vpop.xlane.xlu0 %1153
  %v1155 = vsel %vm950, %v1131, -inf
  %1156 = vmax.xlane.f32.xlu0 %v1155
  %v1157 = vpop.xlane.xlu0 %1156
  %v1158 = vsel %vm950, %v1132, -inf
  %1159 = vmax.xlane.f32.xlu0 %v1158
  %v1160 = vpop.xlane.xlu0 %1159
  %v1161 = vsel %vm950, %v1133, -inf
  %1162 = vmax.xlane.f32.xlu0 %v1161
  %v1163 = vpop.xlane.xlu0 %1162
  %v1164 = vsel %vm950, %v1134, -inf
  %1165 = vmax.xlane.f32.xlu0 %v1164
  %v1166 = vpop.xlane.xlu0 %1165
  %v1167 = vsel %vm950, %v1135, -inf
  %1168 = vmax.xlane.f32.xlu0 %v1167
  %v1169 = vpop.xlane.xlu0 %1168
  %v1170 = vsel %vm950, %v1136, -inf
  %1171 = vmax.xlane.f32.xlu0 %v1170
  %v1172 = vpop.xlane.xlu0 %1171
  %v1173 = vsel %vm950, %v1137, -inf
  %1174 = vmax.xlane.f32.xlu0 %v1173
  %v1175 = vpop.xlane.xlu0 %1174
  %v1176 = vsel %vm950, %v1138, -inf
  %1177 = vmax.xlane.f32.xlu0 %v1176
  %v1178 = vpop.xlane.xlu0 %1177
  %v1179 = vsel %vm950, %v1139, -inf
  %1180 = vmax.xlane.f32.xlu0 %v1179
  %v1181 = vpop.xlane.xlu0 %1180
  %v1182 = vsel %vm950, %v1140, -inf
  %1183 = vmax.xlane.f32.xlu0 %v1182
  %v1184 = vpop.xlane.xlu0 %1183
  %v1185 = vsel %vm950, %v1141, -inf
  %1186 = vmax.xlane.f32.xlu0 %v1185
  %v1187 = vpop.xlane.xlu0 %1186
  %v1188 = vsel %vm950, %v1142, -inf
  %1189 = vmax.xlane.f32.xlu0 %v1188
  %v1190 = vpop.xlane.xlu0 %1189
  %v1191 = vlaneseq
  %v1192 = vand.u32 %v1191, 127
  %vm1193 = vcmp.ge.f32.partialorder %v1127, %v1145
  %vm1194 = vcmp.ge.f32.partialorder %v1128, %v1148
  %vm1195 = vcmp.ge.f32.partialorder %v1129, %v1151
  %vm1196 = vcmp.ge.f32.partialorder %v1130, %v1154
  %vm1197 = vcmp.ge.f32.partialorder %v1131, %v1157
  %vm1198 = vcmp.ge.f32.partialorder %v1132, %v1160
  %vm1199 = vcmp.ge.f32.partialorder %v1133, %v1163
  %vm1200 = vcmp.ge.f32.partialorder %v1134, %v1166
  %vm1201 = vcmp.ge.f32.partialorder %v1135, %v1169
  %vm1202 = vcmp.ge.f32.partialorder %v1136, %v1172
  %vm1203 = vcmp.ge.f32.partialorder %v1137, %v1175
  %vm1204 = vcmp.ge.f32.partialorder %v1138, %v1178
  %vm1205 = vcmp.ge.f32.partialorder %v1139, %v1181
  %vm1206 = vcmp.ge.f32.partialorder %v1140, %v1184
  %vm1207 = vcmp.ge.f32.partialorder %v1141, %v1187
  %vm1208 = vcmp.ge.f32.partialorder %v1142, %v1190
  %v1209 = vsel %vm1193, %v1192, 3
  %v1210 = vsel %vm1194, %v1192, 3
  %v1211 = vsel %vm1195, %v1192, 3
  %v1212 = vsel %vm1196, %v1192, 3
  %v1213 = vsel %vm1197, %v1192, 3
  %v1214 = vsel %vm1198, %v1192, 3
  %v1215 = vsel %vm1199, %v1192, 3
  %v1216 = vsel %vm1200, %v1192, 3
  %v1217 = vsel %vm1201, %v1192, 3
  %v1218 = vsel %vm1202, %v1192, 3
  %v1219 = vsel %vm1203, %v1192, 3
  %v1220 = vsel %vm1204, %v1192, 3
  %v1221 = vsel %vm1205, %v1192, 3
  %v1222 = vsel %vm1206, %v1192, 3
  %v1223 = vsel %vm1207, %v1192, 3
  %v1224 = vsel %vm1208, %v1192, 3
  %v1225 = vsel %vm950, %v1209, 2147483647
  %v1226 = vand.u32 %v1225, 65535
  %v1227 = vshra.s32 %v1225, 16
  %v1228 = vcvt.s32.f32 %v1226
  %v1229 = vcvt.s32.f32 %v1227
  %1230 = vmin.xlane.f32.xlu0 %v1229
  %v1231 = vpop.xlane.xlu0 %1230
  %vm1232 = vcmp.eq.f32.partialorder %v1229, %v1231
  %v1233 = vsel %vm1232, %v1228, inf
  %1234 = vmin.xlane.f32.xlu0 %v1233
  %v1235 = vpop.xlane.xlu0 %1234
  %v1236 = vcvt.f32.s32 %v1235
  %v1237 = vcvt.f32.s32 %v1231
  %v1238 = vshll.u32 %v1237, 16
  %v1239 = vadd.s32 %v1238, %v1236
  %v1240 = vsel %vm950, %v1210, 2147483647
  %v1241 = vand.u32 %v1240, 65535
  %v1242 = vshra.s32 %v1240, 16
  %v1243 = vcvt.s32.f32 %v1241
  %v1244 = vcvt.s32.f32 %v1242
  %1245 = vmin.xlane.f32.xlu0 %v1244
  %v1246 = vpop.xlane.xlu0 %1245
  %vm1247 = vcmp.eq.f32.partialorder %v1244, %v1246
  %v1248 = vsel %vm1247, %v1243, inf
  %1249 = vmin.xlane.f32.xlu0 %v1248
  %v1250 = vpop.xlane.xlu0 %1249
  %v1251 = vcvt.f32.s32 %v1250
  %v1252 = vcvt.f32.s32 %v1246
  %v1253 = vshll.u32 %v1252, 16
  %v1254 = vadd.s32 %v1253, %v1251
  %v1255 = vsel %vm950, %v1211, 2147483647
  %v1256 = vand.u32 %v1255, 65535
  %v1257 = vshra.s32 %v1255, 16
  %v1258 = vcvt.s32.f32 %v1256
  %v1259 = vcvt.s32.f32 %v1257
  %1260 = vmin.xlane.f32.xlu0 %v1259
  %v1261 = vpop.xlane.xlu0 %1260
  %vm1262 = vcmp.eq.f32.partialorder %v1259, %v1261
  %v1263 = vsel %vm1262, %v1258, inf
  %1264 = vmin.xlane.f32.xlu0 %v1263
  %v1265 = vpop.xlane.xlu0 %1264
  %v1266 = vcvt.f32.s32 %v1265
  %v1267 = vcvt.f32.s32 %v1261
  %v1268 = vshll.u32 %v1267, 16
  %v1269 = vadd.s32 %v1268, %v1266
  %v1270 = vsel %vm950, %v1212, 2147483647
  %v1271 = vand.u32 %v1270, 65535
  %v1272 = vshra.s32 %v1270, 16
  %v1273 = vcvt.s32.f32 %v1271
  %v1274 = vcvt.s32.f32 %v1272
  %1275 = vmin.xlane.f32.xlu0 %v1274
  %v1276 = vpop.xlane.xlu0 %1275
  %vm1277 = vcmp.eq.f32.partialorder %v1274, %v1276
  %v1278 = vsel %vm1277, %v1273, inf
  %1279 = vmin.xlane.f32.xlu0 %v1278
  %v1280 = vpop.xlane.xlu0 %1279
  %v1281 = vcvt.f32.s32 %v1280
  %v1282 = vcvt.f32.s32 %v1276
  %v1283 = vshll.u32 %v1282, 16
  %v1284 = vadd.s32 %v1283, %v1281
  %v1285 = vsel %vm950, %v1213, 2147483647
  %v1286 = vand.u32 %v1285, 65535
  %v1287 = vshra.s32 %v1285, 16
  %v1288 = vcvt.s32.f32 %v1286
  %v1289 = vcvt.s32.f32 %v1287
  %1290 = vmin.xlane.f32.xlu0 %v1289
  %v1291 = vpop.xlane.xlu0 %1290
  %vm1292 = vcmp.eq.f32.partialorder %v1289, %v1291
  %v1293 = vsel %vm1292, %v1288, inf
  %1294 = vmin.xlane.f32.xlu0 %v1293
  %v1295 = vpop.xlane.xlu0 %1294
  %v1296 = vcvt.f32.s32 %v1295
  %v1297 = vcvt.f32.s32 %v1291
  %v1298 = vshll.u32 %v1297, 16
  %v1299 = vadd.s32 %v1298, %v1296
  %v1300 = vsel %vm950, %v1214, 2147483647
  %v1301 = vand.u32 %v1300, 65535
  %v1302 = vshra.s32 %v1300, 16
  %v1303 = vcvt.s32.f32 %v1301
  %v1304 = vcvt.s32.f32 %v1302
  %1305 = vmin.xlane.f32.xlu0 %v1304
  %v1306 = vpop.xlane.xlu0 %1305
  %vm1307 = vcmp.eq.f32.partialorder %v1304, %v1306
  %v1308 = vsel %vm1307, %v1303, inf
  %1309 = vmin.xlane.f32.xlu0 %v1308
  %v1310 = vpop.xlane.xlu0 %1309
  %v1311 = vcvt.f32.s32 %v1310
  %v1312 = vcvt.f32.s32 %v1306
  %v1313 = vshll.u32 %v1312, 16
  %v1314 = vadd.s32 %v1313, %v1311
  %v1315 = vsel %vm950, %v1215, 2147483647
  %v1316 = vand.u32 %v1315, 65535
  %v1317 = vshra.s32 %v1315, 16
  %v1318 = vcvt.s32.f32 %v1316
  %v1319 = vcvt.s32.f32 %v1317
  %1320 = vmin.xlane.f32.xlu0 %v1319
  %v1321 = vpop.xlane.xlu0 %1320
  %vm1322 = vcmp.eq.f32.partialorder %v1319, %v1321
  %v1323 = vsel %vm1322, %v1318, inf
  %1324 = vmin.xlane.f32.xlu0 %v1323
  %v1325 = vpop.xlane.xlu0 %1324
  %v1326 = vcvt.f32.s32 %v1325
  %v1327 = vcvt.f32.s32 %v1321
  %v1328 = vshll.u32 %v1327, 16
  %v1329 = vadd.s32 %v1328, %v1326
  %v1330 = vsel %vm950, %v1216, 2147483647
  %v1331 = vand.u32 %v1330, 65535
  %v1332 = vshra.s32 %v1330, 16
  %v1333 = vcvt.s32.f32 %v1331
  %v1334 = vcvt.s32.f32 %v1332
  %1335 = vmin.xlane.f32.xlu0 %v1334
  %v1336 = vpop.xlane.xlu0 %1335
  %vm1337 = vcmp.eq.f32.partialorder %v1334, %v1336
  %v1338 = vsel %vm1337, %v1333, inf
  %1339 = vmin.xlane.f32.xlu0 %v1338
  %v1340 = vpop.xlane.xlu0 %1339
  %v1341 = vcvt.f32.s32 %v1340
  %v1342 = vcvt.f32.s32 %v1336
  %v1343 = vshll.u32 %v1342, 16
  %v1344 = vadd.s32 %v1343, %v1341
  %v1345 = vsel %vm950, %v1217, 2147483647
  %v1346 = vand.u32 %v1345, 65535
  %v1347 = vshra.s32 %v1345, 16
  %v1348 = vcvt.s32.f32 %v1346
  %v1349 = vcvt.s32.f32 %v1347
  %1350 = vmin.xlane.f32.xlu0 %v1349
  %v1351 = vpop.xlane.xlu0 %1350
  %vm1352 = vcmp.eq.f32.partialorder %v1349, %v1351
  %v1353 = vsel %vm1352, %v1348, inf
  %1354 = vmin.xlane.f32.xlu0 %v1353
  %v1355 = vpop.xlane.xlu0 %1354
  %v1356 = vcvt.f32.s32 %v1355
  %v1357 = vcvt.f32.s32 %v1351
  %v1358 = vshll.u32 %v1357, 16
  %v1359 = vadd.s32 %v1358, %v1356
  %v1360 = vsel %vm950, %v1218, 2147483647
  %v1361 = vand.u32 %v1360, 65535
  %v1362 = vshra.s32 %v1360, 16
  %v1363 = vcvt.s32.f32 %v1361
  %v1364 = vcvt.s32.f32 %v1362
  %1365 = vmin.xlane.f32.xlu0 %v1364
  %v1366 = vpop.xlane.xlu0 %1365
  %vm1367 = vcmp.eq.f32.partialorder %v1364, %v1366
  %v1368 = vsel %vm1367, %v1363, inf
  %1369 = vmin.xlane.f32.xlu0 %v1368
  %v1370 = vpop.xlane.xlu0 %1369
  %v1371 = vcvt.f32.s32 %v1370
  %v1372 = vcvt.f32.s32 %v1366
  %v1373 = vshll.u32 %v1372, 16
  %v1374 = vadd.s32 %v1373, %v1371
  %v1375 = vsel %vm950, %v1219, 2147483647
  %v1376 = vand.u32 %v1375, 65535
  %v1377 = vshra.s32 %v1375, 16
  %v1378 = vcvt.s32.f32 %v1376
  %v1379 = vcvt.s32.f32 %v1377
  %1380 = vmin.xlane.f32.xlu0 %v1379
  %v1381 = vpop.xlane.xlu0 %1380
  %vm1382 = vcmp.eq.f32.partialorder %v1379, %v1381
  %v1383 = vsel %vm1382, %v1378, inf
  %1384 = vmin.xlane.f32.xlu0 %v1383
  %v1385 = vpop.xlane.xlu0 %1384
  %v1386 = vcvt.f32.s32 %v1385
  %v1387 = vcvt.f32.s32 %v1381
  %v1388 = vshll.u32 %v1387, 16
  %v1389 = vadd.s32 %v1388, %v1386
  %v1390 = vsel %vm950, %v1220, 2147483647
  %v1391 = vand.u32 %v1390, 65535
  %v1392 = vshra.s32 %v1390, 16
  %v1393 = vcvt.s32.f32 %v1391
  %v1394 = vcvt.s32.f32 %v1392
  %1395 = vmin.xlane.f32.xlu0 %v1394
  %v1396 = vpop.xlane.xlu0 %1395
  %vm1397 = vcmp.eq.f32.partialorder %v1394, %v1396
  %v1398 = vsel %vm1397, %v1393, inf
  %1399 = vmin.xlane.f32.xlu0 %v1398
  %v1400 = vpop.xlane.xlu0 %1399
  %v1401 = vcvt.f32.s32 %v1400
  %v1402 = vcvt.f32.s32 %v1396
  %v1403 = vshll.u32 %v1402, 16
  %v1404 = vadd.s32 %v1403, %v1401
  %v1405 = vsel %vm950, %v1221, 2147483647
  %v1406 = vand.u32 %v1405, 65535
  %v1407 = vshra.s32 %v1405, 16
  %v1408 = vcvt.s32.f32 %v1406
  %v1409 = vcvt.s32.f32 %v1407
  %1410 = vmin.xlane.f32.xlu0 %v1409
  %v1411 = vpop.xlane.xlu0 %1410
  %vm1412 = vcmp.eq.f32.partialorder %v1409, %v1411
  %v1413 = vsel %vm1412, %v1408, inf
  %1414 = vmin.xlane.f32.xlu0 %v1413
  %v1415 = vpop.xlane.xlu0 %1414
  %v1416 = vcvt.f32.s32 %v1415
  %v1417 = vcvt.f32.s32 %v1411
  %v1418 = vshll.u32 %v1417, 16
  %v1419 = vadd.s32 %v1418, %v1416
  %v1420 = vsel %vm950, %v1222, 2147483647
  %v1421 = vand.u32 %v1420, 65535
  %v1422 = vshra.s32 %v1420, 16
  %v1423 = vcvt.s32.f32 %v1421
  %v1424 = vcvt.s32.f32 %v1422
  %1425 = vmin.xlane.f32.xlu0 %v1424
  %v1426 = vpop.xlane.xlu0 %1425
  %vm1427 = vcmp.eq.f32.partialorder %v1424, %v1426
  %v1428 = vsel %vm1427, %v1423, inf
  %1429 = vmin.xlane.f32.xlu0 %v1428
  %v1430 = vpop.xlane.xlu0 %1429
  %v1431 = vcvt.f32.s32 %v1430
  %v1432 = vcvt.f32.s32 %v1426
  %v1433 = vshll.u32 %v1432, 16
  %v1434 = vadd.s32 %v1433, %v1431
  %v1435 = vsel %vm950, %v1223, 2147483647
  %v1436 = vand.u32 %v1435, 65535
  %v1437 = vshra.s32 %v1435, 16
  %v1438 = vcvt.s32.f32 %v1436
  %v1439 = vcvt.s32.f32 %v1437
  %1440 = vmin.xlane.f32.xlu0 %v1439
  %v1441 = vpop.xlane.xlu0 %1440
  %vm1442 = vcmp.eq.f32.partialorder %v1439, %v1441
  %v1443 = vsel %vm1442, %v1438, inf
  %1444 = vmin.xlane.f32.xlu0 %v1443
  %v1445 = vpop.xlane.xlu0 %1444
  %v1446 = vcvt.f32.s32 %v1445
  %v1447 = vcvt.f32.s32 %v1441
  %v1448 = vshll.u32 %v1447, 16
  %v1449 = vadd.s32 %v1448, %v1446
  %v1450 = vsel %vm950, %v1224, 2147483647
  %v1451 = vand.u32 %v1450, 65535
  %v1452 = vshra.s32 %v1450, 16
  %v1453 = vcvt.s32.f32 %v1451
  %v1454 = vcvt.s32.f32 %v1452
  %1455 = vmin.xlane.f32.xlu0 %v1454
  %v1456 = vpop.xlane.xlu0 %1455
  %vm1457 = vcmp.eq.f32.partialorder %v1454, %v1456
  %v1458 = vsel %vm1457, %v1453, inf
  %1459 = vmin.xlane.f32.xlu0 %v1458
  %v1460 = vpop.xlane.xlu0 %1459
  %v1461 = vcvt.f32.s32 %v1460
  %v1462 = vcvt.f32.s32 %v1456
  %v1463 = vshll.u32 %v1462, 16
  %v1464 = vadd.s32 %v1463, %v1461
  %vm1465 = vcmp.eq.s32.totalorder %v1239, 0
  %vm1466 = vcmp.eq.s32.totalorder %v1254, 0
  %vm1467 = vcmp.eq.s32.totalorder %v1269, 0
  %vm1468 = vcmp.eq.s32.totalorder %v1284, 0
  %vm1469 = vcmp.eq.s32.totalorder %v1299, 0
  %vm1470 = vcmp.eq.s32.totalorder %v1314, 0
  %vm1471 = vcmp.eq.s32.totalorder %v1329, 0
  %vm1472 = vcmp.eq.s32.totalorder %v1344, 0
  %vm1473 = vcmp.eq.s32.totalorder %v1359, 0
  %vm1474 = vcmp.eq.s32.totalorder %v1374, 0
  %vm1475 = vcmp.eq.s32.totalorder %v1389, 0
  %vm1476 = vcmp.eq.s32.totalorder %v1404, 0
  %vm1477 = vcmp.eq.s32.totalorder %v1419, 0
  %vm1478 = vcmp.eq.s32.totalorder %v1434, 0
  %vm1479 = vcmp.eq.s32.totalorder %v1449, 0
  %vm1480 = vcmp.eq.s32.totalorder %v1464, 0
  %v1481 = vsel %vm1465, 1, 0
  %v1482 = vsel %vm1466, 1, 0
  %v1483 = vsel %vm1467, 1, 0
  %v1484 = vsel %vm1468, 1, 0
  %v1485 = vsel %vm1469, 1, 0
  %v1486 = vsel %vm1470, 1, 0
  %v1487 = vsel %vm1471, 1, 0
  %v1488 = vsel %vm1472, 1, 0
  %v1489 = vsel %vm1473, 1, 0
  %v1490 = vsel %vm1474, 1, 0
  %v1491 = vsel %vm1475, 1, 0
  %v1492 = vsel %vm1476, 1, 0
  %v1493 = vsel %vm1477, 1, 0
  %v1494 = vsel %vm1478, 1, 0
  %v1495 = vsel %vm1479, 1, 0
  %v1496 = vsel %vm1480, 1, 0
  %v1497 = vcvt.s32.f32 %v1481
  %v1498 = vcvt.s32.f32 %v1482
  %v1499 = vcvt.s32.f32 %v1483
  %v1500 = vcvt.s32.f32 %v1484
  %v1501 = vcvt.s32.f32 %v1485
  %v1502 = vcvt.s32.f32 %v1486
  %v1503 = vcvt.s32.f32 %v1487
  %v1504 = vcvt.s32.f32 %v1488
  %v1505 = vcvt.s32.f32 %v1489
  %v1506 = vcvt.s32.f32 %v1490
  %v1507 = vcvt.s32.f32 %v1491
  %v1508 = vcvt.s32.f32 %v1492
  %v1509 = vcvt.s32.f32 %v1493
  %v1510 = vcvt.s32.f32 %v1494
  %v1511 = vcvt.s32.f32 %v1495
  %v1512 = vcvt.s32.f32 %v1496
  %vm1513 = vcmp.eq.s32.totalorder %v1239, 1
  %vm1514 = vcmp.eq.s32.totalorder %v1254, 1
  %vm1515 = vcmp.eq.s32.totalorder %v1269, 1
  %vm1516 = vcmp.eq.s32.totalorder %v1284, 1
  %vm1517 = vcmp.eq.s32.totalorder %v1299, 1
  %vm1518 = vcmp.eq.s32.totalorder %v1314, 1
  %vm1519 = vcmp.eq.s32.totalorder %v1329, 1
  %vm1520 = vcmp.eq.s32.totalorder %v1344, 1
  %vm1521 = vcmp.eq.s32.totalorder %v1359, 1
  %vm1522 = vcmp.eq.s32.totalorder %v1374, 1
  %vm1523 = vcmp.eq.s32.totalorder %v1389, 1
  %vm1524 = vcmp.eq.s32.totalorder %v1404, 1
  %vm1525 = vcmp.eq.s32.totalorder %v1419, 1
  %vm1526 = vcmp.eq.s32.totalorder %v1434, 1
  %vm1527 = vcmp.eq.s32.totalorder %v1449, 1
  %vm1528 = vcmp.eq.s32.totalorder %v1464, 1
  %v1529 = vsel %vm1513, 1, 0
  %v1530 = vsel %vm1514, 1, 0
  %v1531 = vsel %vm1515, 1, 0
  %v1532 = vsel %vm1516, 1, 0
  %v1533 = vsel %vm1517, 1, 0
  %v1534 = vsel %vm1518, 1, 0
  %v1535 = vsel %vm1519, 1, 0
  %v1536 = vsel %vm1520, 1, 0
  %v1537 = vsel %vm1521, 1, 0
  %v1538 = vsel %vm1522, 1, 0
  %v1539 = vsel %vm1523, 1, 0
  %v1540 = vsel %vm1524, 1, 0
  %v1541 = vsel %vm1525, 1, 0
  %v1542 = vsel %vm1526, 1, 0
  %v1543 = vsel %vm1527, 1, 0
  %v1544 = vsel %vm1528, 1, 0
  %v1545 = vcvt.s32.f32 %v1529
  %v1546 = vcvt.s32.f32 %v1530
  %v1547 = vcvt.s32.f32 %v1531
  %v1548 = vcvt.s32.f32 %v1532
  %v1549 = vcvt.s32.f32 %v1533
  %v1550 = vcvt.s32.f32 %v1534
  %v1551 = vcvt.s32.f32 %v1535
  %v1552 = vcvt.s32.f32 %v1536
  %v1553 = vcvt.s32.f32 %v1537
  %v1554 = vcvt.s32.f32 %v1538
  %v1555 = vcvt.s32.f32 %v1539
  %v1556 = vcvt.s32.f32 %v1540
  %v1557 = vcvt.s32.f32 %v1541
  %v1558 = vcvt.s32.f32 %v1542
  %v1559 = vcvt.s32.f32 %v1543
  %v1560 = vcvt.s32.f32 %v1544
  %vm1561 = vcmp.eq.s32.totalorder %v1239, 2
  %vm1562 = vcmp.eq.s32.totalorder %v1254, 2
  %vm1563 = vcmp.eq.s32.totalorder %v1269, 2
  %vm1564 = vcmp.eq.s32.totalorder %v1284, 2
  %vm1565 = vcmp.eq.s32.totalorder %v1299, 2
  %vm1566 = vcmp.eq.s32.totalorder %v1314, 2
  %vm1567 = vcmp.eq.s32.totalorder %v1329, 2
  %vm1568 = vcmp.eq.s32.totalorder %v1344, 2
  %vm1569 = vcmp.eq.s32.totalorder %v1359, 2
  %vm1570 = vcmp.eq.s32.totalorder %v1374, 2
  %vm1571 = vcmp.eq.s32.totalorder %v1389, 2
  %vm1572 = vcmp.eq.s32.totalorder %v1404, 2
  %vm1573 = vcmp.eq.s32.totalorder %v1419, 2
  %vm1574 = vcmp.eq.s32.totalorder %v1434, 2
  %vm1575 = vcmp.eq.s32.totalorder %v1449, 2
  %vm1576 = vcmp.eq.s32.totalorder %v1464, 2
  %v1577 = vsel %vm1561, 1, 0
  %v1578 = vsel %vm1562, 1, 0
  %v1579 = vsel %vm1563, 1, 0
  %v1580 = vsel %vm1564, 1, 0
  %v1581 = vsel %vm1565, 1, 0
  %v1582 = vsel %vm1566, 1, 0
  %v1583 = vsel %vm1567, 1, 0
  %v1584 = vsel %vm1568, 1, 0
  %v1585 = vsel %vm1569, 1, 0
  %v1586 = vsel %vm1570, 1, 0
  %v1587 = vsel %vm1571, 1, 0
  %v1588 = vsel %vm1572, 1, 0
  %v1589 = vsel %vm1573, 1, 0
  %v1590 = vsel %vm1574, 1, 0
  %v1591 = vsel %vm1575, 1, 0
  %v1592 = vsel %vm1576, 1, 0
  %v1593 = vcvt.s32.f32 %v1577
  %v1594 = vcvt.s32.f32 %v1578
  %v1595 = vcvt.s32.f32 %v1579
  %v1596 = vcvt.s32.f32 %v1580
  %v1597 = vcvt.s32.f32 %v1581
  %v1598 = vcvt.s32.f32 %v1582
  %v1599 = vcvt.s32.f32 %v1583
  %v1600 = vcvt.s32.f32 %v1584
  %v1601 = vcvt.s32.f32 %v1585
  %v1602 = vcvt.s32.f32 %v1586
  %v1603 = vcvt.s32.f32 %v1587
  %v1604 = vcvt.s32.f32 %v1588
  %v1605 = vcvt.s32.f32 %v1589
  %v1606 = vcvt.s32.f32 %v1590
  %v1607 = vcvt.s32.f32 %v1591
  %v1608 = vcvt.s32.f32 %v1592
  %v1609 = vmul.f32 %v1497, %v680
  %v1610 = vmul.f32 %v1498, %v683
  %v1611 = vmul.f32 %v1499, %v686
  %v1612 = vmul.f32 %v1500, %v689
  %v1613 = vmul.f32 %v1501, %v692
  %v1614 = vmul.f32 %v1502, %v695
  %v1615 = vmul.f32 %v1503, %v698
  %v1616 = vmul.f32 %v1504, %v701
  %v1617 = vmul.f32 %v1505, %v704
  %v1618 = vmul.f32 %v1506, %v707
  %v1619 = vmul.f32 %v1507, %v710
  %v1620 = vmul.f32 %v1508, %v713
  %v1621 = vmul.f32 %v1509, %v716
  %v1622 = vmul.f32 %v1510, %v719
  %v1623 = vmul.f32 %v1511, %v722
  %v1624 = vmul.f32 %v1512, %v725
  %v1625 = vmul.f32 %v1545, %v679
  %v1626 = vmul.f32 %v1546, %v682
  %v1627 = vmul.f32 %v1547, %v685
  %v1628 = vmul.f32 %v1548, %v688
  %v1629 = vmul.f32 %v1549, %v691
  %v1630 = vmul.f32 %v1550, %v694
  %v1631 = vmul.f32 %v1551, %v697
  %v1632 = vmul.f32 %v1552, %v700
  %v1633 = vmul.f32 %v1553, %v703
  %v1634 = vmul.f32 %v1554, %v706
  %v1635 = vmul.f32 %v1555, %v709
  %v1636 = vmul.f32 %v1556, %v712
  %v1637 = vmul.f32 %v1557, %v715
  %v1638 = vmul.f32 %v1558, %v718
  %v1639 = vmul.f32 %v1559, %v721
  %v1640 = vmul.f32 %v1560, %v724
  %v1641 = vadd.f32 %v1609, %v1625
  %v1642 = vadd.f32 %v1610, %v1626
  %v1643 = vadd.f32 %v1611, %v1627
  %v1644 = vadd.f32 %v1612, %v1628
  %v1645 = vadd.f32 %v1613, %v1629
  %v1646 = vadd.f32 %v1614, %v1630
  %v1647 = vadd.f32 %v1615, %v1631
  %v1648 = vadd.f32 %v1616, %v1632
  %v1649 = vadd.f32 %v1617, %v1633
  %v1650 = vadd.f32 %v1618, %v1634
  %v1651 = vadd.f32 %v1619, %v1635
  %v1652 = vadd.f32 %v1620, %v1636
  %v1653 = vadd.f32 %v1621, %v1637
  %v1654 = vadd.f32 %v1622, %v1638
  %v1655 = vadd.f32 %v1623, %v1639
  %v1656 = vadd.f32 %v1624, %v1640
  %v1657 = vmul.f32 %v1593, %v678
  %v1658 = vmul.f32 %v1594, %v681
  %v1659 = vmul.f32 %v1595, %v684
  %v1660 = vmul.f32 %v1596, %v687
  %v1661 = vmul.f32 %v1597, %v690
  %v1662 = vmul.f32 %v1598, %v693
  %v1663 = vmul.f32 %v1599, %v696
  %v1664 = vmul.f32 %v1600, %v699
  %v1665 = vmul.f32 %v1601, %v702
  %v1666 = vmul.f32 %v1602, %v705
  %v1667 = vmul.f32 %v1603, %v708
  %v1668 = vmul.f32 %v1604, %v711
  %v1669 = vmul.f32 %v1605, %v714
  %v1670 = vmul.f32 %v1606, %v717
  %v1671 = vmul.f32 %v1607, %v720
  %v1672 = vmul.f32 %v1608, %v723
  %v1673 = vadd.f32 %v1641, %v1657
  %v1674 = vadd.f32 %v1642, %v1658
  %v1675 = vadd.f32 %v1643, %v1659
  %v1676 = vadd.f32 %v1644, %v1660
  %v1677 = vadd.f32 %v1645, %v1661
  %v1678 = vadd.f32 %v1646, %v1662
  %v1679 = vadd.f32 %v1647, %v1663
  %v1680 = vadd.f32 %v1648, %v1664
  %v1681 = vadd.f32 %v1649, %v1665
  %v1682 = vadd.f32 %v1650, %v1666
  %v1683 = vadd.f32 %v1651, %v1667
  %v1684 = vadd.f32 %v1652, %v1668
  %v1685 = vadd.f32 %v1653, %v1669
  %v1686 = vadd.f32 %v1654, %v1670
  %v1687 = vadd.f32 %v1655, %v1671
  %v1688 = vadd.f32 %v1656, %v1672
  %v1689 = vmul.f32 %v1497, 0.0625
  %v1690 = vmul.f32 %v1498, 0.0625
  %v1691 = vmul.f32 %v1499, 0.0625
  %v1692 = vmul.f32 %v1500, 0.0625
  %v1693 = vmul.f32 %v1501, 0.0625
  %v1694 = vmul.f32 %v1502, 0.0625
  %v1695 = vmul.f32 %v1503, 0.0625
  %v1696 = vmul.f32 %v1504, 0.0625
  %v1697 = vmul.f32 %v1505, 0.0625
  %v1698 = vmul.f32 %v1506, 0.0625
  %v1699 = vmul.f32 %v1507, 0.0625
  %v1700 = vmul.f32 %v1508, 0.0625
  %v1701 = vmul.f32 %v1509, 0.0625
  %v1702 = vmul.f32 %v1510, 0.0625
  %v1703 = vmul.f32 %v1511, 0.0625
  %v1704 = vmul.f32 %v1512, 0.0625
  %v1705 = vmul.f32 %v1545, 0.25
  %v1706 = vmul.f32 %v1546, 0.25
  %v1707 = vmul.f32 %v1547, 0.25
  %v1708 = vmul.f32 %v1548, 0.25
  %v1709 = vmul.f32 %v1549, 0.25
  %v1710 = vmul.f32 %v1550, 0.25
  %v1711 = vmul.f32 %v1551, 0.25
  %v1712 = vmul.f32 %v1552, 0.25
  %v1713 = vmul.f32 %v1553, 0.25
  %v1714 = vmul.f32 %v1554, 0.25
  %v1715 = vmul.f32 %v1555, 0.25
  %v1716 = vmul.f32 %v1556, 0.25
  %v1717 = vmul.f32 %v1557, 0.25
  %v1718 = vmul.f32 %v1558, 0.25
  %v1719 = vmul.f32 %v1559, 0.25
  %v1720 = vmul.f32 %v1560, 0.25
  %v1721 = vadd.f32 %v1689, %v1705
  %v1722 = vadd.f32 %v1690, %v1706
  %v1723 = vadd.f32 %v1691, %v1707
  %v1724 = vadd.f32 %v1692, %v1708
  %v1725 = vadd.f32 %v1693, %v1709
  %v1726 = vadd.f32 %v1694, %v1710
  %v1727 = vadd.f32 %v1695, %v1711
  %v1728 = vadd.f32 %v1696, %v1712
  %v1729 = vadd.f32 %v1697, %v1713
  %v1730 = vadd.f32 %v1698, %v1714
  %v1731 = vadd.f32 %v1699, %v1715
  %v1732 = vadd.f32 %v1700, %v1716
  %v1733 = vadd.f32 %v1701, %v1717
  %v1734 = vadd.f32 %v1702, %v1718
  %v1735 = vadd.f32 %v1703, %v1719
  %v1736 = vadd.f32 %v1704, %v1720
  %v1737 = vadd.f32 %v1721, %v1593
  %v1738 = vadd.f32 %v1722, %v1594
  %v1739 = vadd.f32 %v1723, %v1595
  %v1740 = vadd.f32 %v1724, %v1596
  %v1741 = vadd.f32 %v1725, %v1597
  %v1742 = vadd.f32 %v1726, %v1598
  %v1743 = vadd.f32 %v1727, %v1599
  %v1744 = vadd.f32 %v1728, %v1600
  %v1745 = vadd.f32 %v1729, %v1601
  %v1746 = vadd.f32 %v1730, %v1602
  %v1747 = vadd.f32 %v1731, %v1603
  %v1748 = vadd.f32 %v1732, %v1604
  %v1749 = vadd.f32 %v1733, %v1605
  %v1750 = vadd.f32 %v1734, %v1606
  %v1751 = vadd.f32 %v1735, %v1607
  %v1752 = vadd.f32 %v1736, %v1608
  %v1753 = vpack.c.bf16 %v1674, %v1673
  %v1754 = vpack.c.bf16 %v1676, %v1675
  %v1755 = vpack.c.bf16 %v1678, %v1677
  %v1756 = vpack.c.bf16 %v1680, %v1679
  %v1757 = vpack.c.bf16 %v1682, %v1681
  %v1758 = vpack.c.bf16 %v1684, %v1683
  %v1759 = vpack.c.bf16 %v1686, %v1685
  %v1760 = vpack.c.bf16 %v1688, %v1687
  %v1761 = vld [vmem:[%s5] sm:$0xf]
  %v1762 = vld [vmem:[%s5 + $0x4] sm:$0xf]
  %v1763 = vld [vmem:[%s5 + $0x8] sm:$0xf]
  %v1764 = vld [vmem:[%s5 + $0xc] sm:$0xf]
  %v1765 = vld [vmem:[%s5 + $0x10] sm:$0xf]
  %v1766 = vld [vmem:[%s5 + $0x14] sm:$0xf]
  %v1767 = vld [vmem:[%s5 + $0x18] sm:$0xf]
  %v1768 = vld [vmem:[%s5 + $0x1c] sm:$0xf]
  %v1769 = vld [vmem:[%s5 + $0x20] sm:$0xf]
  %v1770 = vld [vmem:[%s5 + $0x24] sm:$0xf]
  %v1771 = vld [vmem:[%s5 + $0x28] sm:$0xf]
  %v1772 = vld [vmem:[%s5 + $0x2c] sm:$0xf]
  %v1773 = vld [vmem:[%s5 + $0x30] sm:$0xf]
  %v1774 = vld [vmem:[%s5 + $0x34] sm:$0xf]
  %v1775 = vld [vmem:[%s5 + $0x38] sm:$0xf]
  %v1776 = vld [vmem:[%s5 + $0x3c] sm:$0xf]
  %v1777 = vld [vmem:[%s6] sm:$0x1]
  %v1779 = vlaneseq
  %v1780 = vshrl.u32 %v1779, 7
  %v1781 = vsub.s32 0, %v1780
  %v1782 = vrot.slane %v1777, %v1781
  %v1800 = vunpack.c.l.b16 %v1761
  %v1801 = vunpack.c.l.b16 %v1762
  %v1802 = vunpack.c.l.b16 %v1763
  %v1803 = vunpack.c.l.b16 %v1764
  %v1804 = vunpack.c.l.b16 %v1765
  %v1805 = vunpack.c.l.b16 %v1766
  %v1806 = vunpack.c.l.b16 %v1767
  %v1807 = vunpack.c.l.b16 %v1768
  %v1808 = vunpack.c.l.b16 %v1769
  %v1809 = vunpack.c.l.b16 %v1770
  %v1810 = vunpack.c.l.b16 %v1771
  %v1811 = vunpack.c.l.b16 %v1772
  %v1812 = vunpack.c.l.b16 %v1773
  %v1813 = vunpack.c.l.b16 %v1774
  %v1814 = vunpack.c.l.b16 %v1775
  %v1815 = vunpack.c.l.b16 %v1776
  %v1816 = vpack.c.b16 %v1801, %v1800
  %v1817 = vpack.c.b16 %v1803, %v1802
  %v1818 = vpack.c.b16 %v1805, %v1804
  %v1819 = vpack.c.b16 %v1807, %v1806
  %v1820 = vpack.c.b16 %v1809, %v1808
  %v1821 = vpack.c.b16 %v1811, %v1810
  %v1822 = vpack.c.b16 %v1813, %v1812
  %v1823 = vpack.c.b16 %v1815, %v1814
  %1832 = vmatprep.subr.bf16.mxu0 0
  %1833 = vmatpush1.bf16.msra.mxu0 %v1816
  %1834 = vmatprep.subr.bf16.mxu0 0
  %1835 = vmatpush1.bf16.msra.mxu0 %v1817
  %1836 = vmatprep.subr.bf16.mxu0 0
  %1837 = vmatpush1.bf16.msra.mxu0 %v1818
  %1838 = vmatprep.subr.bf16.mxu0 0
  %1839 = vmatpush1.bf16.msra.mxu0 %v1819
  %1840 = vmatprep.subr.bf16.mxu0 0
  %1841 = vmatpush1.bf16.msra.mxu0 %v1820
  %1842 = vmatprep.subr.bf16.mxu0 0
  %1843 = vmatpush1.bf16.msra.mxu0 %v1821
  %1844 = vmatprep.subr.bf16.mxu0 0
  %1845 = vmatpush1.bf16.msra.mxu0 %v1822
  %1846 = vmatprep.subr.bf16.mxu0 0
  %1847 = vmatpush1.bf16.msra.mxu0 %v1823
  %1848 = vmatprep.subr.bf16.mxu0 0
  %1849 = vmatpush1.bf16.msra.mxu0 0
  %1850 = vmatprep.subr.bf16.mxu0 0
  %1851 = vmatpush1.bf16.msra.mxu0 0
  %1852 = vmatprep.subr.bf16.mxu0 0
  %1853 = vmatpush1.bf16.msra.mxu0 0
  %1854 = vmatprep.subr.bf16.mxu0 0
  %1855 = vmatpush1.bf16.msra.mxu0 0
  %1856 = vmatprep.subr.bf16.mxu0 0
  %1857 = vmatpush1.bf16.msra.mxu0 0
  %1858 = vmatprep.subr.bf16.mxu0 0
  %1859 = vmatpush1.bf16.msra.mxu0 0
  %1860 = vmatprep.subr.bf16.mxu0 0
  %1861 = vmatpush1.bf16.msra.mxu0 0
  %1862 = vmatprep.subr.bf16.mxu0 0
  %1863 = vmatpush1.bf16.msra.mxu0 0
  %1864 = vmatprep.mubr.bf16.mxu0 0
  %1865 = vmatmul.mubr.bf16.gmra.mrb[0].mxu0 %v1753
  %v1866 = vpop.f32.mrb[0].mxu0
  %v1867 = vadd.f32 %v1782, %v1866
  %v1868 = vpop.f32.mrb[0].mxu0
  %v1869 = vpop.f32.mrb[0].mxu0
  %v1870 = vadd.f32 %v1782, %v1869
  %v1871 = vpop.f32.mrb[0].mxu0
  %1872 = vmatprep.mubr.bf16.mxu0 0
  %1873 = vmatmul.mubr.bf16.gmra.mrb[0].mxu0 %v1754
  %v1874 = vpop.f32.mrb[0].mxu0
  %v1875 = vadd.f32 %v1782, %v1874
  %v1876 = vpop.f32.mrb[0].mxu0
  %v1877 = vpop.f32.mrb[0].mxu0
  %v1878 = vadd.f32 %v1782, %v1877
  %v1879 = vpop.f32.mrb[0].mxu0
  %1880 = vmatprep.mubr.bf16.mxu0 0
  %1881 = vmatmul.mubr.bf16.gmra.mrb[0].mxu0 %v1755
  %v1882 = vpop.f32.mrb[0].mxu0
  %v1883 = vadd.f32 %v1782, %v1882
  %v1884 = vpop.f32.mrb[0].mxu0
  %v1885 = vpop.f32.mrb[0].mxu0
  %v1886 = vadd.f32 %v1782, %v1885
  %v1887 = vpop.f32.mrb[0].mxu0
  %1888 = vmatprep.mubr.bf16.mxu0 0
  %1889 = vmatmul.mubr.bf16.gmra.mrb[0].mxu0 %v1756
  %v1890 = vpop.f32.mrb[0].mxu0
  %v1891 = vadd.f32 %v1782, %v1890
  %v1892 = vpop.f32.mrb[0].mxu0
  %v1893 = vpop.f32.mrb[0].mxu0
  %v1894 = vadd.f32 %v1782, %v1893
  %v1895 = vpop.f32.mrb[0].mxu0
  %1896 = vmatprep.mubr.bf16.mxu0 0
  %1897 = vmatmul.mubr.bf16.gmra.mrb[0].mxu0 %v1757
  %v1898 = vpop.f32.mrb[0].mxu0
  %v1899 = vadd.f32 %v1782, %v1898
  %v1900 = vpop.f32.mrb[0].mxu0
  %v1901 = vpop.f32.mrb[0].mxu0
  %v1902 = vadd.f32 %v1782, %v1901
  %v1903 = vpop.f32.mrb[0].mxu0
  %1904 = vmatprep.mubr.bf16.mxu0 0
  %1905 = vmatmul.mubr.bf16.gmra.mrb[0].mxu0 %v1758
  %v1906 = vpop.f32.mrb[0].mxu0
  %v1907 = vadd.f32 %v1782, %v1906
  %v1908 = vpop.f32.mrb[0].mxu0
  %v1909 = vpop.f32.mrb[0].mxu0
  %v1910 = vadd.f32 %v1782, %v1909
  %v1911 = vpop.f32.mrb[0].mxu0
  %1912 = vmatprep.mubr.bf16.mxu0 0
  %1913 = vmatmul.mubr.bf16.gmra.mrb[0].mxu0 %v1759
  %v1914 = vpop.f32.mrb[0].mxu0
  %v1915 = vadd.f32 %v1782, %v1914
  %v1916 = vpop.f32.mrb[0].mxu0
  %v1917 = vpop.f32.mrb[0].mxu0
  %v1918 = vadd.f32 %v1782, %v1917
  %v1919 = vpop.f32.mrb[0].mxu0
  %1920 = vmatprep.mubr.bf16.mxu0 0
  %1921 = vmatmul.mubr.bf16.gmra.mrb[0].mxu0 %v1760
  %v1922 = vpop.f32.mrb[0].mxu0
  %v1923 = vadd.f32 %v1782, %v1922
  %v1924 = vpop.f32.mrb[0].mxu0
  %v1925 = vpop.f32.mrb[0].mxu0
  %v1926 = vadd.f32 %v1782, %v1925
  %v1927 = vpop.f32.mrb[0].mxu0
  %1928 = vdwg.mxu0
  %v1929 = vpack.c.bf16 %v1870, %v1867
  %v1930 = vpack.c.bf16 %v1878, %v1875
  %v1931 = vpack.c.bf16 %v1886, %v1883
  %v1932 = vpack.c.bf16 %v1894, %v1891
  %v1933 = vpack.c.bf16 %v1902, %v1899
  %v1934 = vpack.c.bf16 %v1910, %v1907
  %v1935 = vpack.c.bf16 %v1918, %v1915
  %v1936 = vpack.c.bf16 %v1926, %v1923
  %v1937 = vld [vmem:[%s7] sm:$0xff]
  %v1938 = vld [vmem:[%s7 + $0x8] sm:$0xff]
  %v1939 = vld [vmem:[%s7 + $0x10] sm:$0xff]
  %v1940 = vld [vmem:[%s7 + $0x18] sm:$0xff]
  %v1941 = vld [vmem:[%s7 + $0x20] sm:$0xff]
  %v1942 = vld [vmem:[%s7 + $0x28] sm:$0xff]
  %v1943 = vld [vmem:[%s7 + $0x30] sm:$0xff]
  %v1944 = vld [vmem:[%s7 + $0x38] sm:$0xff]
  %v1945 = vld [vmem:[%s7 + $0x40] sm:$0xff]
  %v1946 = vld [vmem:[%s7 + $0x48] sm:$0xff]
  %v1947 = vld [vmem:[%s7 + $0x50] sm:$0xff]
  %v1948 = vld [vmem:[%s7 + $0x58] sm:$0xff]
  %v1949 = vld [vmem:[%s7 + $0x60] sm:$0xff]
  %v1950 = vld [vmem:[%s7 + $0x68] sm:$0xff]
  %v1951 = vld [vmem:[%s7 + $0x70] sm:$0xff]
  %v1952 = vld [vmem:[%s7 + $0x78] sm:$0xff]
  %v1969 = vunpack.c.l.b16 %v1937
  %v1970 = vunpack.c.h.b16 %v1937
  %v1971 = vunpack.c.l.b16 %v1938
  %v1972 = vunpack.c.h.b16 %v1938
  %v1973 = vunpack.c.l.b16 %v1939
  %v1974 = vunpack.c.h.b16 %v1939
  %v1975 = vunpack.c.l.b16 %v1940
  %v1976 = vunpack.c.h.b16 %v1940
  %v1977 = vunpack.c.l.b16 %v1941
  %v1978 = vunpack.c.h.b16 %v1941
  %v1979 = vunpack.c.l.b16 %v1942
  %v1980 = vunpack.c.h.b16 %v1942
  %v1981 = vunpack.c.l.b16 %v1943
  %v1982 = vunpack.c.h.b16 %v1943
  %v1983 = vunpack.c.l.b16 %v1944
  %v1984 = vunpack.c.h.b16 %v1944
  %v1985 = vunpack.c.l.b16 %v1945
  %v1986 = vunpack.c.h.b16 %v1945
  %v1987 = vunpack.c.l.b16 %v1946
  %v1988 = vunpack.c.h.b16 %v1946
  %v1989 = vunpack.c.l.b16 %v1947
  %v1990 = vunpack.c.h.b16 %v1947
  %v1991 = vunpack.c.l.b16 %v1948
  %v1992 = vunpack.c.h.b16 %v1948
  %v1993 = vunpack.c.l.b16 %v1949
  %v1994 = vunpack.c.h.b16 %v1949
  %v1995 = vunpack.c.l.b16 %v1950
  %v1996 = vunpack.c.h.b16 %v1950
  %v1997 = vunpack.c.l.b16 %v1951
  %v1998 = vunpack.c.h.b16 %v1951
  %v1999 = vunpack.c.l.b16 %v1952
  %v2000 = vunpack.c.h.b16 %v1952
  %v2001 = vpack.c.b16 %v1971, %v1969
  %v2002 = vpack.c.b16 %v1972, %v1970
  %v2003 = vpack.c.b16 %v1975, %v1973
  %v2004 = vpack.c.b16 %v1976, %v1974
  %v2005 = vpack.c.b16 %v1979, %v1977
  %v2006 = vpack.c.b16 %v1980, %v1978
  %v2007 = vpack.c.b16 %v1983, %v1981
  %v2008 = vpack.c.b16 %v1984, %v1982
  %v2009 = vpack.c.b16 %v1987, %v1985
  %v2010 = vpack.c.b16 %v1988, %v1986
  %v2011 = vpack.c.b16 %v1991, %v1989
  %v2012 = vpack.c.b16 %v1992, %v1990
  %v2013 = vpack.c.b16 %v1995, %v1993
  %v2014 = vpack.c.b16 %v1996, %v1994
  %v2015 = vpack.c.b16 %v1999, %v1997
  %v2016 = vpack.c.b16 %v2000, %v1998
  %2033 = vmatprep.subr.bf16.mxu0 %v2002
  %2034 = vmatpush1.bf16.msra.mxu0 %v2001
  %2035 = vmatprep.subr.bf16.mxu0 %v2004
  %2036 = vmatpush1.bf16.msra.mxu0 %v2003
  %2037 = vmatprep.subr.bf16.mxu0 %v2006
  %2038 = vmatpush1.bf16.msra.mxu0 %v2005
  %2039 = vmatprep.subr.bf16.mxu0 %v2008
  %2040 = vmatpush1.bf16.msra.mxu0 %v2007
  %2041 = vmatprep.subr.bf16.mxu0 %v2010
  %2042 = vmatpush1.bf16.msra.mxu0 %v2009
  %2043 = vmatprep.subr.bf16.mxu0 %v2012
  %2044 = vmatpush1.bf16.msra.mxu0 %v2011
  %2045 = vmatprep.subr.bf16.mxu0 %v2014
  %2046 = vmatpush1.bf16.msra.mxu0 %v2013
  %2047 = vmatprep.subr.bf16.mxu0 %v2016
  %2048 = vmatpush1.bf16.msra.mxu0 %v2015
  %2049 = vmatprep.subr.bf16.mxu0 0
  %2050 = vmatpush1.bf16.msra.mxu0 0
  %2051 = vmatprep.subr.bf16.mxu0 0
  %2052 = vmatpush1.bf16.msra.mxu0 0
  %2053 = vmatprep.subr.bf16.mxu0 0
  %2054 = vmatpush1.bf16.msra.mxu0 0
  %2055 = vmatprep.subr.bf16.mxu0 0
  %2056 = vmatpush1.bf16.msra.mxu0 0
  %2057 = vmatprep.subr.bf16.mxu0 0
  %2058 = vmatpush1.bf16.msra.mxu0 0
  %2059 = vmatprep.subr.bf16.mxu0 0
  %2060 = vmatpush1.bf16.msra.mxu0 0
  %2061 = vmatprep.subr.bf16.mxu0 0
  %2062 = vmatpush1.bf16.msra.mxu0 0
  %2063 = vmatprep.subr.bf16.mxu0 0
  %2064 = vmatpush1.bf16.msra.mxu0 0
  %2065 = vmatprep.mubr.bf16.mxu0 0
  %2066 = vmatmul.mubr.bf16.gmra.mrb[0].mxu0 %v1929
  %v2067 = vpop.f32.mrb[0].mxu0
  %v2068 = vadd.f32 0.0, %v2067
  %v2069 = vpop.f32.mrb[0].mxu0
  %v2070 = vadd.f32 0.0, %v2069
  %v2071 = vpop.f32.mrb[0].mxu0
  %v2072 = vadd.f32 0.0, %v2071
  %v2073 = vpop.f32.mrb[0].mxu0
  %v2074 = vadd.f32 0.0, %v2073
  %2075 = vmatprep.mubr.bf16.mxu0 0
  %2076 = vmatmul.mubr.bf16.gmra.mrb[0].mxu0 %v1930
  %v2077 = vpop.f32.mrb[0].mxu0
  %v2078 = vadd.f32 0.0, %v2077
  %v2079 = vpop.f32.mrb[0].mxu0
  %v2080 = vadd.f32 0.0, %v2079
  %v2081 = vpop.f32.mrb[0].mxu0
  %v2082 = vadd.f32 0.0, %v2081
  %v2083 = vpop.f32.mrb[0].mxu0
  %v2084 = vadd.f32 0.0, %v2083
  %2085 = vmatprep.mubr.bf16.mxu0 0
  %2086 = vmatmul.mubr.bf16.gmra.mrb[0].mxu0 %v1931
  %v2087 = vpop.f32.mrb[0].mxu0
  %v2088 = vadd.f32 0.0, %v2087
  %v2089 = vpop.f32.mrb[0].mxu0
  %v2090 = vadd.f32 0.0, %v2089
  %v2091 = vpop.f32.mrb[0].mxu0
  %v2092 = vadd.f32 0.0, %v2091
  %v2093 = vpop.f32.mrb[0].mxu0
  %v2094 = vadd.f32 0.0, %v2093
  %2095 = vmatprep.mubr.bf16.mxu0 0
  %2096 = vmatmul.mubr.bf16.gmra.mrb[0].mxu0 %v1932
  %v2097 = vpop.f32.mrb[0].mxu0
  %v2098 = vadd.f32 0.0, %v2097
  %v2099 = vpop.f32.mrb[0].mxu0
  %v2100 = vadd.f32 0.0, %v2099
  %v2101 = vpop.f32.mrb[0].mxu0
  %v2102 = vadd.f32 0.0, %v2101
  %v2103 = vpop.f32.mrb[0].mxu0
  %v2104 = vadd.f32 0.0, %v2103
  %2105 = vmatprep.mubr.bf16.mxu0 0
  %2106 = vmatmul.mubr.bf16.gmra.mrb[0].mxu0 %v1933
  %v2107 = vpop.f32.mrb[0].mxu0
  %v2108 = vadd.f32 0.0, %v2107
  %v2109 = vpop.f32.mrb[0].mxu0
  %v2110 = vadd.f32 0.0, %v2109
  %v2111 = vpop.f32.mrb[0].mxu0
  %v2112 = vadd.f32 0.0, %v2111
  %v2113 = vpop.f32.mrb[0].mxu0
  %v2114 = vadd.f32 0.0, %v2113
  %2115 = vmatprep.mubr.bf16.mxu0 0
  %2116 = vmatmul.mubr.bf16.gmra.mrb[0].mxu0 %v1934
  %v2117 = vpop.f32.mrb[0].mxu0
  %v2118 = vadd.f32 0.0, %v2117
  %v2119 = vpop.f32.mrb[0].mxu0
  %v2120 = vadd.f32 0.0, %v2119
  %v2121 = vpop.f32.mrb[0].mxu0
  %v2122 = vadd.f32 0.0, %v2121
  %v2123 = vpop.f32.mrb[0].mxu0
  %v2124 = vadd.f32 0.0, %v2123
  %2125 = vmatprep.mubr.bf16.mxu0 0
  %2126 = vmatmul.mubr.bf16.gmra.mrb[0].mxu0 %v1935
  %v2127 = vpop.f32.mrb[0].mxu0
  %v2128 = vadd.f32 0.0, %v2127
  %v2129 = vpop.f32.mrb[0].mxu0
  %v2130 = vadd.f32 0.0, %v2129
  %v2131 = vpop.f32.mrb[0].mxu0
  %v2132 = vadd.f32 0.0, %v2131
  %v2133 = vpop.f32.mrb[0].mxu0
  %v2134 = vadd.f32 0.0, %v2133
  %2135 = vmatprep.mubr.bf16.mxu0 0
  %2136 = vmatmul.mubr.bf16.gmra.mrb[0].mxu0 %v1936
  %v2137 = vpop.f32.mrb[0].mxu0
  %v2138 = vadd.f32 0.0, %v2137
  %v2139 = vpop.f32.mrb[0].mxu0
  %v2140 = vadd.f32 0.0, %v2139
  %v2141 = vpop.f32.mrb[0].mxu0
  %v2142 = vadd.f32 0.0, %v2141
  %v2143 = vpop.f32.mrb[0].mxu0
  %v2144 = vadd.f32 0.0, %v2143
  %2145 = vdwg.mxu0
  %v2146 = vld [vmem:[%s8] sm:$0x3]
  %v2147 = vmul.f32 %v2068, 2.0
  %v2148 = vmul.f32 %v2070, 2.0
  %v2149 = vmul.f32 %v2072, 2.0
  %v2150 = vmul.f32 %v2074, 2.0
  %v2151 = vmul.f32 %v2078, 2.0
  %v2152 = vmul.f32 %v2080, 2.0
  %v2153 = vmul.f32 %v2082, 2.0
  %v2154 = vmul.f32 %v2084, 2.0
  %v2155 = vmul.f32 %v2088, 2.0
  %v2156 = vmul.f32 %v2090, 2.0
  %v2157 = vmul.f32 %v2092, 2.0
  %v2158 = vmul.f32 %v2094, 2.0
  %v2159 = vmul.f32 %v2098, 2.0
  %v2160 = vmul.f32 %v2100, 2.0
  %v2161 = vmul.f32 %v2102, 2.0
  %v2162 = vmul.f32 %v2104, 2.0
  %v2163 = vmul.f32 %v2108, 2.0
  %v2164 = vmul.f32 %v2110, 2.0
  %v2165 = vmul.f32 %v2112, 2.0
  %v2166 = vmul.f32 %v2114, 2.0
  %v2167 = vmul.f32 %v2118, 2.0
  %v2168 = vmul.f32 %v2120, 2.0
  %v2169 = vmul.f32 %v2122, 2.0
  %v2170 = vmul.f32 %v2124, 2.0
  %v2171 = vmul.f32 %v2128, 2.0
  %v2172 = vmul.f32 %v2130, 2.0
  %v2173 = vmul.f32 %v2132, 2.0
  %v2174 = vmul.f32 %v2134, 2.0
  %v2175 = vmul.f32 %v2138, 2.0
  %v2176 = vmul.f32 %v2140, 2.0
  %v2177 = vmul.f32 %v2142, 2.0
  %v2178 = vmul.f32 %v2144, 2.0
  %v2180 = vlaneseq
  %v2181 = vshrl.u32 %v2180, 7
  %v2182 = vsub.s32 0, %v2181
  %v2183 = vrot.slane %v2146, %v2182
  %v2184 = vlaneseq
  %v2185 = vshrl.u32 %v2184, 7
  %v2186 = vsub.s32 1, %v2185
  %v2187 = vrot.slane %v2146, %v2186
  %v2190 = vsub.f32 %v2183, %v2147
  %v2191 = vsub.f32 %v2187, %v2148
  %v2192 = vsub.f32 %v2183, %v2149
  %v2193 = vsub.f32 %v2187, %v2150
  %v2194 = vsub.f32 %v2183, %v2151
  %v2195 = vsub.f32 %v2187, %v2152
  %v2196 = vsub.f32 %v2183, %v2153
  %v2197 = vsub.f32 %v2187, %v2154
  %v2198 = vsub.f32 %v2183, %v2155
  %v2199 = vsub.f32 %v2187, %v2156
  %v2200 = vsub.f32 %v2183, %v2157
  %v2201 = vsub.f32 %v2187, %v2158
  %v2202 = vsub.f32 %v2183, %v2159
  %v2203 = vsub.f32 %v2187, %v2160
  %v2204 = vsub.f32 %v2183, %v2161
  %v2205 = vsub.f32 %v2187, %v2162
  %v2206 = vsub.f32 %v2183, %v2163
  %v2207 = vsub.f32 %v2187, %v2164
  %v2208 = vsub.f32 %v2183, %v2165
  %v2209 = vsub.f32 %v2187, %v2166
  %v2210 = vsub.f32 %v2183, %v2167
  %v2211 = vsub.f32 %v2187, %v2168
  %v2212 = vsub.f32 %v2183, %v2169
  %v2213 = vsub.f32 %v2187, %v2170
  %v2214 = vsub.f32 %v2183, %v2171
  %v2215 = vsub.f32 %v2187, %v2172
  %v2216 = vsub.f32 %v2183, %v2173
  %v2217 = vsub.f32 %v2187, %v2174
  %v2218 = vsub.f32 %v2183, %v2175
  %v2219 = vsub.f32 %v2187, %v2176
  %v2220 = vsub.f32 %v2183, %v2177
  %v2221 = vsub.f32 %v2187, %v2178
  %v2222 = vmin.f32 %v2190, %v2191
  %2223 = vmin.xlane.f32.xlu0 %v2222
  %v2224 = vpop.xlane.xlu0 %2223
  %v2225 = vmin.f32 %v2192, %v2193
  %2226 = vmin.xlane.f32.xlu0 %v2225
  %v2227 = vpop.xlane.xlu0 %2226
  %v2228 = vmin.f32 %v2194, %v2195
  %2229 = vmin.xlane.f32.xlu0 %v2228
  %v2230 = vpop.xlane.xlu0 %2229
  %v2231 = vmin.f32 %v2196, %v2197
  %2232 = vmin.xlane.f32.xlu0 %v2231
  %v2233 = vpop.xlane.xlu0 %2232
  %v2234 = vmin.f32 %v2198, %v2199
  %2235 = vmin.xlane.f32.xlu0 %v2234
  %v2236 = vpop.xlane.xlu0 %2235
  %v2237 = vmin.f32 %v2200, %v2201
  %2238 = vmin.xlane.f32.xlu0 %v2237
  %v2239 = vpop.xlane.xlu0 %2238
  %v2240 = vmin.f32 %v2202, %v2203
  %2241 = vmin.xlane.f32.xlu0 %v2240
  %v2242 = vpop.xlane.xlu0 %2241
  %v2243 = vmin.f32 %v2204, %v2205
  %2244 = vmin.xlane.f32.xlu0 %v2243
  %v2245 = vpop.xlane.xlu0 %2244
  %v2246 = vmin.f32 %v2206, %v2207
  %2247 = vmin.xlane.f32.xlu0 %v2246
  %v2248 = vpop.xlane.xlu0 %2247
  %v2249 = vmin.f32 %v2208, %v2209
  %2250 = vmin.xlane.f32.xlu0 %v2249
  %v2251 = vpop.xlane.xlu0 %2250
  %v2252 = vmin.f32 %v2210, %v2211
  %2253 = vmin.xlane.f32.xlu0 %v2252
  %v2254 = vpop.xlane.xlu0 %2253
  %v2255 = vmin.f32 %v2212, %v2213
  %2256 = vmin.xlane.f32.xlu0 %v2255
  %v2257 = vpop.xlane.xlu0 %2256
  %v2258 = vmin.f32 %v2214, %v2215
  %2259 = vmin.xlane.f32.xlu0 %v2258
  %v2260 = vpop.xlane.xlu0 %2259
  %v2261 = vmin.f32 %v2216, %v2217
  %2262 = vmin.xlane.f32.xlu0 %v2261
  %v2263 = vpop.xlane.xlu0 %2262
  %v2264 = vmin.f32 %v2218, %v2219
  %2265 = vmin.xlane.f32.xlu0 %v2264
  %v2266 = vpop.xlane.xlu0 %2265
  %v2267 = vmin.f32 %v2220, %v2221
  %2268 = vmin.xlane.f32.xlu0 %v2267
  %v2269 = vpop.xlane.xlu0 %2268
  %v2270 = vadd.s32 %v1192, 128
  %vm2271 = vcmp.le.f32.partialorder %v2190, %v2224
  %vm2272 = vcmp.le.f32.partialorder %v2191, %v2224
  %vm2273 = vcmp.le.f32.partialorder %v2192, %v2227
  %vm2274 = vcmp.le.f32.partialorder %v2193, %v2227
  %vm2275 = vcmp.le.f32.partialorder %v2194, %v2230
  %vm2276 = vcmp.le.f32.partialorder %v2195, %v2230
  %vm2277 = vcmp.le.f32.partialorder %v2196, %v2233
  %vm2278 = vcmp.le.f32.partialorder %v2197, %v2233
  %vm2279 = vcmp.le.f32.partialorder %v2198, %v2236
  %vm2280 = vcmp.le.f32.partialorder %v2199, %v2236
  %vm2281 = vcmp.le.f32.partialorder %v2200, %v2239
  %vm2282 = vcmp.le.f32.partialorder %v2201, %v2239
  %vm2283 = vcmp.le.f32.partialorder %v2202, %v2242
  %vm2284 = vcmp.le.f32.partialorder %v2203, %v2242
  %vm2285 = vcmp.le.f32.partialorder %v2204, %v2245
  %vm2286 = vcmp.le.f32.partialorder %v2205, %v2245
  %vm2287 = vcmp.le.f32.partialorder %v2206, %v2248
  %vm2288 = vcmp.le.f32.partialorder %v2207, %v2248
  %vm2289 = vcmp.le.f32.partialorder %v2208, %v2251
  %vm2290 = vcmp.le.f32.partialorder %v2209, %v2251
  %vm2291 = vcmp.le.f32.partialorder %v2210, %v2254
  %vm2292 = vcmp.le.f32.partialorder %v2211, %v2254
  %vm2293 = vcmp.le.f32.partialorder %v2212, %v2257
  %vm2294 = vcmp.le.f32.partialorder %v2213, %v2257
  %vm2295 = vcmp.le.f32.partialorder %v2214, %v2260
  %vm2296 = vcmp.le.f32.partialorder %v2215, %v2260
  %vm2297 = vcmp.le.f32.partialorder %v2216, %v2263
  %vm2298 = vcmp.le.f32.partialorder %v2217, %v2263
  %vm2299 = vcmp.le.f32.partialorder %v2218, %v2266
  %vm2300 = vcmp.le.f32.partialorder %v2219, %v2266
  %vm2301 = vcmp.le.f32.partialorder %v2220, %v2269
  %vm2302 = vcmp.le.f32.partialorder %v2221, %v2269
  %v2303 = vsel %vm2271, %v1192, 256
  %v2304 = vsel %vm2272, %v2270, 256
  %v2305 = vsel %vm2273, %v1192, 256
  %v2306 = vsel %vm2274, %v2270, 256
  %v2307 = vsel %vm2275, %v1192, 256
  %v2308 = vsel %vm2276, %v2270, 256
  %v2309 = vsel %vm2277, %v1192, 256
  %v2310 = vsel %vm2278, %v2270, 256
  %v2311 = vsel %vm2279, %v1192, 256
  %v2312 = vsel %vm2280, %v2270, 256
  %v2313 = vsel %vm2281, %v1192, 256
  %v2314 = vsel %vm2282, %v2270, 256
  %v2315 = vsel %vm2283, %v1192, 256
  %v2316 = vsel %vm2284, %v2270, 256
  %v2317 = vsel %vm2285, %v1192, 256
  %v2318 = vsel %vm2286, %v2270, 256
  %v2319 = vsel %vm2287, %v1192, 256
  %v2320 = vsel %vm2288, %v2270, 256
  %v2321 = vsel %vm2289, %v1192, 256
  %v2322 = vsel %vm2290, %v2270, 256
  %v2323 = vsel %vm2291, %v1192, 256
  %v2324 = vsel %vm2292, %v2270, 256
  %v2325 = vsel %vm2293, %v1192, 256
  %v2326 = vsel %vm2294, %v2270, 256
  %v2327 = vsel %vm2295, %v1192, 256
  %v2328 = vsel %vm2296, %v2270, 256
  %v2329 = vsel %vm2297, %v1192, 256
  %v2330 = vsel %vm2298, %v2270, 256
  %v2331 = vsel %vm2299, %v1192, 256
  %v2332 = vsel %vm2300, %v2270, 256
  %v2333 = vsel %vm2301, %v1192, 256
  %v2334 = vsel %vm2302, %v2270, 256
  %vm2335 = vcmp.lt.s32.totalorder %v2303, %v2304
  %v2336 = vsel %vm2335, %v2303, %v2304
  %v2337 = vand.u32 %v2336, 65535
  %v2338 = vshra.s32 %v2336, 16
  %v2339 = vcvt.s32.f32 %v2337
  %v2340 = vcvt.s32.f32 %v2338
  %2341 = vmin.xlane.f32.xlu0 %v2340
  %v2342 = vpop.xlane.xlu0 %2341
  %vm2343 = vcmp.eq.f32.partialorder %v2340, %v2342
  %v2344 = vsel %vm2343, %v2339, inf
  %2345 = vmin.xlane.f32.xlu0 %v2344
  %v2346 = vpop.xlane.xlu0 %2345
  %v2347 = vcvt.f32.s32 %v2346
  %v2348 = vcvt.f32.s32 %v2342
  %v2349 = vshll.u32 %v2348, 16
  %v2350 = vadd.s32 %v2349, %v2347
  %vm2351 = vcmp.lt.s32.totalorder %v2305, %v2306
  %v2352 = vsel %vm2351, %v2305, %v2306
  %v2353 = vand.u32 %v2352, 65535
  %v2354 = vshra.s32 %v2352, 16
  %v2355 = vcvt.s32.f32 %v2353
  %v2356 = vcvt.s32.f32 %v2354
  %2357 = vmin.xlane.f32.xlu0 %v2356
  %v2358 = vpop.xlane.xlu0 %2357
  %vm2359 = vcmp.eq.f32.partialorder %v2356, %v2358
  %v2360 = vsel %vm2359, %v2355, inf
  %2361 = vmin.xlane.f32.xlu0 %v2360
  %v2362 = vpop.xlane.xlu0 %2361
  %v2363 = vcvt.f32.s32 %v2362
  %v2364 = vcvt.f32.s32 %v2358
  %v2365 = vshll.u32 %v2364, 16
  %v2366 = vadd.s32 %v2365, %v2363
  %vm2367 = vcmp.lt.s32.totalorder %v2307, %v2308
  %v2368 = vsel %vm2367, %v2307, %v2308
  %v2369 = vand.u32 %v2368, 65535
  %v2370 = vshra.s32 %v2368, 16
  %v2371 = vcvt.s32.f32 %v2369
  %v2372 = vcvt.s32.f32 %v2370
  %2373 = vmin.xlane.f32.xlu0 %v2372
  %v2374 = vpop.xlane.xlu0 %2373
  %vm2375 = vcmp.eq.f32.partialorder %v2372, %v2374
  %v2376 = vsel %vm2375, %v2371, inf
  %2377 = vmin.xlane.f32.xlu0 %v2376
  %v2378 = vpop.xlane.xlu0 %2377
  %v2379 = vcvt.f32.s32 %v2378
  %v2380 = vcvt.f32.s32 %v2374
  %v2381 = vshll.u32 %v2380, 16
  %v2382 = vadd.s32 %v2381, %v2379
  %vm2383 = vcmp.lt.s32.totalorder %v2309, %v2310
  %v2384 = vsel %vm2383, %v2309, %v2310
  %v2385 = vand.u32 %v2384, 65535
  %v2386 = vshra.s32 %v2384, 16
  %v2387 = vcvt.s32.f32 %v2385
  %v2388 = vcvt.s32.f32 %v2386
  %2389 = vmin.xlane.f32.xlu0 %v2388
  %v2390 = vpop.xlane.xlu0 %2389
  %vm2391 = vcmp.eq.f32.partialorder %v2388, %v2390
  %v2392 = vsel %vm2391, %v2387, inf
  %2393 = vmin.xlane.f32.xlu0 %v2392
  %v2394 = vpop.xlane.xlu0 %2393
  %v2395 = vcvt.f32.s32 %v2394
  %v2396 = vcvt.f32.s32 %v2390
  %v2397 = vshll.u32 %v2396, 16
  %v2398 = vadd.s32 %v2397, %v2395
  %vm2399 = vcmp.lt.s32.totalorder %v2311, %v2312
  %v2400 = vsel %vm2399, %v2311, %v2312
  %v2401 = vand.u32 %v2400, 65535
  %v2402 = vshra.s32 %v2400, 16
  %v2403 = vcvt.s32.f32 %v2401
  %v2404 = vcvt.s32.f32 %v2402
  %2405 = vmin.xlane.f32.xlu0 %v2404
  %v2406 = vpop.xlane.xlu0 %2405
  %vm2407 = vcmp.eq.f32.partialorder %v2404, %v2406
  %v2408 = vsel %vm2407, %v2403, inf
  %2409 = vmin.xlane.f32.xlu0 %v2408
  %v2410 = vpop.xlane.xlu0 %2409
  %v2411 = vcvt.f32.s32 %v2410
  %v2412 = vcvt.f32.s32 %v2406
  %v2413 = vshll.u32 %v2412, 16
  %v2414 = vadd.s32 %v2413, %v2411
  %vm2415 = vcmp.lt.s32.totalorder %v2313, %v2314
  %v2416 = vsel %vm2415, %v2313, %v2314
  %v2417 = vand.u32 %v2416, 65535
  %v2418 = vshra.s32 %v2416, 16
  %v2419 = vcvt.s32.f32 %v2417
  %v2420 = vcvt.s32.f32 %v2418
  %2421 = vmin.xlane.f32.xlu0 %v2420
  %v2422 = vpop.xlane.xlu0 %2421
  %vm2423 = vcmp.eq.f32.partialorder %v2420, %v2422
  %v2424 = vsel %vm2423, %v2419, inf
  %2425 = vmin.xlane.f32.xlu0 %v2424
  %v2426 = vpop.xlane.xlu0 %2425
  %v2427 = vcvt.f32.s32 %v2426
  %v2428 = vcvt.f32.s32 %v2422
  %v2429 = vshll.u32 %v2428, 16
  %v2430 = vadd.s32 %v2429, %v2427
  %vm2431 = vcmp.lt.s32.totalorder %v2315, %v2316
  %v2432 = vsel %vm2431, %v2315, %v2316
  %v2433 = vand.u32 %v2432, 65535
  %v2434 = vshra.s32 %v2432, 16
  %v2435 = vcvt.s32.f32 %v2433
  %v2436 = vcvt.s32.f32 %v2434
  %2437 = vmin.xlane.f32.xlu0 %v2436
  %v2438 = vpop.xlane.xlu0 %2437
  %vm2439 = vcmp.eq.f32.partialorder %v2436, %v2438
  %v2440 = vsel %vm2439, %v2435, inf
  %2441 = vmin.xlane.f32.xlu0 %v2440
  %v2442 = vpop.xlane.xlu0 %2441
  %v2443 = vcvt.f32.s32 %v2442
  %v2444 = vcvt.f32.s32 %v2438
  %v2445 = vshll.u32 %v2444, 16
  %v2446 = vadd.s32 %v2445, %v2443
  %vm2447 = vcmp.lt.s32.totalorder %v2317, %v2318
  %v2448 = vsel %vm2447, %v2317, %v2318
  %v2449 = vand.u32 %v2448, 65535
  %v2450 = vshra.s32 %v2448, 16
  %v2451 = vcvt.s32.f32 %v2449
  %v2452 = vcvt.s32.f32 %v2450
  %2453 = vmin.xlane.f32.xlu0 %v2452
  %v2454 = vpop.xlane.xlu0 %2453
  %vm2455 = vcmp.eq.f32.partialorder %v2452, %v2454
  %v2456 = vsel %vm2455, %v2451, inf
  %2457 = vmin.xlane.f32.xlu0 %v2456
  %v2458 = vpop.xlane.xlu0 %2457
  %v2459 = vcvt.f32.s32 %v2458
  %v2460 = vcvt.f32.s32 %v2454
  %v2461 = vshll.u32 %v2460, 16
  %v2462 = vadd.s32 %v2461, %v2459
  %vm2463 = vcmp.lt.s32.totalorder %v2319, %v2320
  %v2464 = vsel %vm2463, %v2319, %v2320
  %v2465 = vand.u32 %v2464, 65535
  %v2466 = vshra.s32 %v2464, 16
  %v2467 = vcvt.s32.f32 %v2465
  %v2468 = vcvt.s32.f32 %v2466
  %2469 = vmin.xlane.f32.xlu0 %v2468
  %v2470 = vpop.xlane.xlu0 %2469
  %vm2471 = vcmp.eq.f32.partialorder %v2468, %v2470
  %v2472 = vsel %vm2471, %v2467, inf
  %2473 = vmin.xlane.f32.xlu0 %v2472
  %v2474 = vpop.xlane.xlu0 %2473
  %v2475 = vcvt.f32.s32 %v2474
  %v2476 = vcvt.f32.s32 %v2470
  %v2477 = vshll.u32 %v2476, 16
  %v2478 = vadd.s32 %v2477, %v2475
  %vm2479 = vcmp.lt.s32.totalorder %v2321, %v2322
  %v2480 = vsel %vm2479, %v2321, %v2322
  %v2481 = vand.u32 %v2480, 65535
  %v2482 = vshra.s32 %v2480, 16
  %v2483 = vcvt.s32.f32 %v2481
  %v2484 = vcvt.s32.f32 %v2482
  %2485 = vmin.xlane.f32.xlu0 %v2484
  %v2486 = vpop.xlane.xlu0 %2485
  %vm2487 = vcmp.eq.f32.partialorder %v2484, %v2486
  %v2488 = vsel %vm2487, %v2483, inf
  %2489 = vmin.xlane.f32.xlu0 %v2488
  %v2490 = vpop.xlane.xlu0 %2489
  %v2491 = vcvt.f32.s32 %v2490
  %v2492 = vcvt.f32.s32 %v2486
  %v2493 = vshll.u32 %v2492, 16
  %v2494 = vadd.s32 %v2493, %v2491
  %vm2495 = vcmp.lt.s32.totalorder %v2323, %v2324
  %v2496 = vsel %vm2495, %v2323, %v2324
  %v2497 = vand.u32 %v2496, 65535
  %v2498 = vshra.s32 %v2496, 16
  %v2499 = vcvt.s32.f32 %v2497
  %v2500 = vcvt.s32.f32 %v2498
  %2501 = vmin.xlane.f32.xlu0 %v2500
  %v2502 = vpop.xlane.xlu0 %2501
  %vm2503 = vcmp.eq.f32.partialorder %v2500, %v2502
  %v2504 = vsel %vm2503, %v2499, inf
  %2505 = vmin.xlane.f32.xlu0 %v2504
  %v2506 = vpop.xlane.xlu0 %2505
  %v2507 = vcvt.f32.s32 %v2506
  %v2508 = vcvt.f32.s32 %v2502
  %v2509 = vshll.u32 %v2508, 16
  %v2510 = vadd.s32 %v2509, %v2507
  %vm2511 = vcmp.lt.s32.totalorder %v2325, %v2326
  %v2512 = vsel %vm2511, %v2325, %v2326
  %v2513 = vand.u32 %v2512, 65535
  %v2514 = vshra.s32 %v2512, 16
  %v2515 = vcvt.s32.f32 %v2513
  %v2516 = vcvt.s32.f32 %v2514
  %2517 = vmin.xlane.f32.xlu0 %v2516
  %v2518 = vpop.xlane.xlu0 %2517
  %vm2519 = vcmp.eq.f32.partialorder %v2516, %v2518
  %v2520 = vsel %vm2519, %v2515, inf
  %2521 = vmin.xlane.f32.xlu0 %v2520
  %v2522 = vpop.xlane.xlu0 %2521
  %v2523 = vcvt.f32.s32 %v2522
  %v2524 = vcvt.f32.s32 %v2518
  %v2525 = vshll.u32 %v2524, 16
  %v2526 = vadd.s32 %v2525, %v2523
  %vm2527 = vcmp.lt.s32.totalorder %v2327, %v2328
  %v2528 = vsel %vm2527, %v2327, %v2328
  %v2529 = vand.u32 %v2528, 65535
  %v2530 = vshra.s32 %v2528, 16
  %v2531 = vcvt.s32.f32 %v2529
  %v2532 = vcvt.s32.f32 %v2530
  %2533 = vmin.xlane.f32.xlu0 %v2532
  %v2534 = vpop.xlane.xlu0 %2533
  %vm2535 = vcmp.eq.f32.partialorder %v2532, %v2534
  %v2536 = vsel %vm2535, %v2531, inf
  %2537 = vmin.xlane.f32.xlu0 %v2536
  %v2538 = vpop.xlane.xlu0 %2537
  %v2539 = vcvt.f32.s32 %v2538
  %v2540 = vcvt.f32.s32 %v2534
  %v2541 = vshll.u32 %v2540, 16
  %v2542 = vadd.s32 %v2541, %v2539
  %vm2543 = vcmp.lt.s32.totalorder %v2329, %v2330
  %v2544 = vsel %vm2543, %v2329, %v2330
  %v2545 = vand.u32 %v2544, 65535
  %v2546 = vshra.s32 %v2544, 16
  %v2547 = vcvt.s32.f32 %v2545
  %v2548 = vcvt.s32.f32 %v2546
  %2549 = vmin.xlane.f32.xlu0 %v2548
  %v2550 = vpop.xlane.xlu0 %2549
  %vm2551 = vcmp.eq.f32.partialorder %v2548, %v2550
  %v2552 = vsel %vm2551, %v2547, inf
  %2553 = vmin.xlane.f32.xlu0 %v2552
  %v2554 = vpop.xlane.xlu0 %2553
  %v2555 = vcvt.f32.s32 %v2554
  %v2556 = vcvt.f32.s32 %v2550
  %v2557 = vshll.u32 %v2556, 16
  %v2558 = vadd.s32 %v2557, %v2555
  %vm2559 = vcmp.lt.s32.totalorder %v2331, %v2332
  %v2560 = vsel %vm2559, %v2331, %v2332
  %v2561 = vand.u32 %v2560, 65535
  %v2562 = vshra.s32 %v2560, 16
  %v2563 = vcvt.s32.f32 %v2561
  %v2564 = vcvt.s32.f32 %v2562
  %2565 = vmin.xlane.f32.xlu0 %v2564
  %v2566 = vpop.xlane.xlu0 %2565
  %vm2567 = vcmp.eq.f32.partialorder %v2564, %v2566
  %v2568 = vsel %vm2567, %v2563, inf
  %2569 = vmin.xlane.f32.xlu0 %v2568
  %v2570 = vpop.xlane.xlu0 %2569
  %v2571 = vcvt.f32.s32 %v2570
  %v2572 = vcvt.f32.s32 %v2566
  %v2573 = vshll.u32 %v2572, 16
  %v2574 = vadd.s32 %v2573, %v2571
  %vm2575 = vcmp.lt.s32.totalorder %v2333, %v2334
  %v2576 = vsel %vm2575, %v2333, %v2334
  %v2577 = vand.u32 %v2576, 65535
  %v2578 = vshra.s32 %v2576, 16
  %v2579 = vcvt.s32.f32 %v2577
  %v2580 = vcvt.s32.f32 %v2578
  %2581 = vmin.xlane.f32.xlu0 %v2580
  %v2582 = vpop.xlane.xlu0 %2581
  %vm2583 = vcmp.eq.f32.partialorder %v2580, %v2582
  %v2584 = vsel %vm2583, %v2579, inf
  %2585 = vmin.xlane.f32.xlu0 %v2584
  %v2586 = vpop.xlane.xlu0 %2585
  %v2587 = vcvt.f32.s32 %v2586
  %v2588 = vcvt.f32.s32 %v2582
  %v2589 = vshll.u32 %v2588, 16
  %v2590 = vadd.s32 %v2589, %v2587
  %vm2591 = vcmp.eq.s32.totalorder %v1192, %v2350
  %vm2592 = vcmp.eq.s32.totalorder %v2270, %v2350
  %vm2593 = vcmp.eq.s32.totalorder %v1192, %v2366
  %vm2594 = vcmp.eq.s32.totalorder %v2270, %v2366
  %vm2595 = vcmp.eq.s32.totalorder %v1192, %v2382
  %vm2596 = vcmp.eq.s32.totalorder %v2270, %v2382
  %vm2597 = vcmp.eq.s32.totalorder %v1192, %v2398
  %vm2598 = vcmp.eq.s32.totalorder %v2270, %v2398
  %vm2599 = vcmp.eq.s32.totalorder %v1192, %v2414
  %vm2600 = vcmp.eq.s32.totalorder %v2270, %v2414
  %vm2601 = vcmp.eq.s32.totalorder %v1192, %v2430
  %vm2602 = vcmp.eq.s32.totalorder %v2270, %v2430
  %vm2603 = vcmp.eq.s32.totalorder %v1192, %v2446
  %vm2604 = vcmp.eq.s32.totalorder %v2270, %v2446
  %vm2605 = vcmp.eq.s32.totalorder %v1192, %v2462
  %vm2606 = vcmp.eq.s32.totalorder %v2270, %v2462
  %vm2607 = vcmp.eq.s32.totalorder %v1192, %v2478
  %vm2608 = vcmp.eq.s32.totalorder %v2270, %v2478
  %vm2609 = vcmp.eq.s32.totalorder %v1192, %v2494
  %vm2610 = vcmp.eq.s32.totalorder %v2270, %v2494
  %vm2611 = vcmp.eq.s32.totalorder %v1192, %v2510
  %vm2612 = vcmp.eq.s32.totalorder %v2270, %v2510
  %vm2613 = vcmp.eq.s32.totalorder %v1192, %v2526
  %vm2614 = vcmp.eq.s32.totalorder %v2270, %v2526
  %vm2615 = vcmp.eq.s32.totalorder %v1192, %v2542
  %vm2616 = vcmp.eq.s32.totalorder %v2270, %v2542
  %vm2617 = vcmp.eq.s32.totalorder %v1192, %v2558
  %vm2618 = vcmp.eq.s32.totalorder %v2270, %v2558
  %vm2619 = vcmp.eq.s32.totalorder %v1192, %v2574
  %vm2620 = vcmp.eq.s32.totalorder %v2270, %v2574
  %vm2621 = vcmp.eq.s32.totalorder %v1192, %v2590
  %vm2622 = vcmp.eq.s32.totalorder %v2270, %v2590
  %v2623 = vsel %vm2591, 1, 0
  %v2624 = vsel %vm2592, 1, 0
  %v2625 = vsel %vm2593, 1, 0
  %v2626 = vsel %vm2594, 1, 0
  %v2627 = vsel %vm2595, 1, 0
  %v2628 = vsel %vm2596, 1, 0
  %v2629 = vsel %vm2597, 1, 0
  %v2630 = vsel %vm2598, 1, 0
  %v2631 = vsel %vm2599, 1, 0
  %v2632 = vsel %vm2600, 1, 0
  %v2633 = vsel %vm2601, 1, 0
  %v2634 = vsel %vm2602, 1, 0
  %v2635 = vsel %vm2603, 1, 0
  %v2636 = vsel %vm2604, 1, 0
  %v2637 = vsel %vm2605, 1, 0
  %v2638 = vsel %vm2606, 1, 0
  %v2639 = vsel %vm2607, 1, 0
  %v2640 = vsel %vm2608, 1, 0
  %v2641 = vsel %vm2609, 1, 0
  %v2642 = vsel %vm2610, 1, 0
  %v2643 = vsel %vm2611, 1, 0
  %v2644 = vsel %vm2612, 1, 0
  %v2645 = vsel %vm2613, 1, 0
  %v2646 = vsel %vm2614, 1, 0
  %v2647 = vsel %vm2615, 1, 0
  %v2648 = vsel %vm2616, 1, 0
  %v2649 = vsel %vm2617, 1, 0
  %v2650 = vsel %vm2618, 1, 0
  %v2651 = vsel %vm2619, 1, 0
  %v2652 = vsel %vm2620, 1, 0
  %v2653 = vsel %vm2621, 1, 0
  %v2654 = vsel %vm2622, 1, 0
  %v2655 = vcvt.s32.f32 %v2623
  %v2656 = vcvt.s32.f32 %v2624
  %v2657 = vcvt.s32.f32 %v2625
  %v2658 = vcvt.s32.f32 %v2626
  %v2659 = vcvt.s32.f32 %v2627
  %v2660 = vcvt.s32.f32 %v2628
  %v2661 = vcvt.s32.f32 %v2629
  %v2662 = vcvt.s32.f32 %v2630
  %v2663 = vcvt.s32.f32 %v2631
  %v2664 = vcvt.s32.f32 %v2632
  %v2665 = vcvt.s32.f32 %v2633
  %v2666 = vcvt.s32.f32 %v2634
  %v2667 = vcvt.s32.f32 %v2635
  %v2668 = vcvt.s32.f32 %v2636
  %v2669 = vcvt.s32.f32 %v2637
  %v2670 = vcvt.s32.f32 %v2638
  %v2671 = vcvt.s32.f32 %v2639
  %v2672 = vcvt.s32.f32 %v2640
  %v2673 = vcvt.s32.f32 %v2641
  %v2674 = vcvt.s32.f32 %v2642
  %v2675 = vcvt.s32.f32 %v2643
  %v2676 = vcvt.s32.f32 %v2644
  %v2677 = vcvt.s32.f32 %v2645
  %v2678 = vcvt.s32.f32 %v2646
  %v2679 = vcvt.s32.f32 %v2647
  %v2680 = vcvt.s32.f32 %v2648
  %v2681 = vcvt.s32.f32 %v2649
  %v2682 = vcvt.s32.f32 %v2650
  %v2683 = vcvt.s32.f32 %v2651
  %v2684 = vcvt.s32.f32 %v2652
  %v2685 = vcvt.s32.f32 %v2653
  %v2686 = vcvt.s32.f32 %v2654
  %v2687 = vpack.c.bf16 %v2657, %v2655
  %v2688 = vpack.c.bf16 %v2658, %v2656
  %v2689 = vpack.c.bf16 %v2661, %v2659
  %v2690 = vpack.c.bf16 %v2662, %v2660
  %v2691 = vpack.c.bf16 %v2665, %v2663
  %v2692 = vpack.c.bf16 %v2666, %v2664
  %v2693 = vpack.c.bf16 %v2669, %v2667
  %v2694 = vpack.c.bf16 %v2670, %v2668
  %v2695 = vpack.c.bf16 %v2673, %v2671
  %v2696 = vpack.c.bf16 %v2674, %v2672
  %v2697 = vpack.c.bf16 %v2677, %v2675
  %v2698 = vpack.c.bf16 %v2678, %v2676
  %v2699 = vpack.c.bf16 %v2681, %v2679
  %v2700 = vpack.c.bf16 %v2682, %v2680
  %v2701 = vpack.c.bf16 %v2685, %v2683
  %v2702 = vpack.c.bf16 %v2686, %v2684
  %v2703 = vld [vmem:[%s9] sm:$0xf]
  %v2704 = vld [vmem:[%s9 + $0x4] sm:$0xf]
  %v2705 = vld [vmem:[%s9 + $0x8] sm:$0xf]
  %v2706 = vld [vmem:[%s9 + $0xc] sm:$0xf]
  %v2707 = vld [vmem:[%s9 + $0x10] sm:$0xf]
  %v2708 = vld [vmem:[%s9 + $0x14] sm:$0xf]
  %v2709 = vld [vmem:[%s9 + $0x18] sm:$0xf]
  %v2710 = vld [vmem:[%s9 + $0x1c] sm:$0xf]
  %v2711 = vld [vmem:[%s9 + $0x20] sm:$0xf]
  %v2712 = vld [vmem:[%s9 + $0x24] sm:$0xf]
  %v2713 = vld [vmem:[%s9 + $0x28] sm:$0xf]
  %v2714 = vld [vmem:[%s9 + $0x2c] sm:$0xf]
  %v2715 = vld [vmem:[%s9 + $0x30] sm:$0xf]
  %v2716 = vld [vmem:[%s9 + $0x34] sm:$0xf]
  %v2717 = vld [vmem:[%s9 + $0x38] sm:$0xf]
  %v2718 = vld [vmem:[%s9 + $0x3c] sm:$0xf]
  %v2719 = vld [vmem:[%s9 + $0x40] sm:$0xf]
  %v2720 = vld [vmem:[%s9 + $0x44] sm:$0xf]
  %v2721 = vld [vmem:[%s9 + $0x48] sm:$0xf]
  %v2722 = vld [vmem:[%s9 + $0x4c] sm:$0xf]
  %v2723 = vld [vmem:[%s9 + $0x50] sm:$0xf]
  %v2724 = vld [vmem:[%s9 + $0x54] sm:$0xf]
  %v2725 = vld [vmem:[%s9 + $0x58] sm:$0xf]
  %v2726 = vld [vmem:[%s9 + $0x5c] sm:$0xf]
  %v2727 = vld [vmem:[%s9 + $0x60] sm:$0xf]
  %v2728 = vld [vmem:[%s9 + $0x64] sm:$0xf]
  %v2729 = vld [vmem:[%s9 + $0x68] sm:$0xf]
  %v2730 = vld [vmem:[%s9 + $0x6c] sm:$0xf]
  %v2731 = vld [vmem:[%s9 + $0x70] sm:$0xf]
  %v2732 = vld [vmem:[%s9 + $0x74] sm:$0xf]
  %v2733 = vld [vmem:[%s9 + $0x78] sm:$0xf]
  %v2734 = vld [vmem:[%s9 + $0x7c] sm:$0xf]
  %v2767 = vunpack.c.l.b16 %v2703
  %v2768 = vunpack.c.l.b16 %v2704
  %v2769 = vunpack.c.l.b16 %v2705
  %v2770 = vunpack.c.l.b16 %v2706
  %v2771 = vunpack.c.l.b16 %v2707
  %v2772 = vunpack.c.l.b16 %v2708
  %v2773 = vunpack.c.l.b16 %v2709
  %v2774 = vunpack.c.l.b16 %v2710
  %v2775 = vunpack.c.l.b16 %v2711
  %v2776 = vunpack.c.l.b16 %v2712
  %v2777 = vunpack.c.l.b16 %v2713
  %v2778 = vunpack.c.l.b16 %v2714
  %v2779 = vunpack.c.l.b16 %v2715
  %v2780 = vunpack.c.l.b16 %v2716
  %v2781 = vunpack.c.l.b16 %v2717
  %v2782 = vunpack.c.l.b16 %v2718
  %v2783 = vunpack.c.l.b16 %v2719
  %v2784 = vunpack.c.l.b16 %v2720
  %v2785 = vunpack.c.l.b16 %v2721
  %v2786 = vunpack.c.l.b16 %v2722
  %v2787 = vunpack.c.l.b16 %v2723
  %v2788 = vunpack.c.l.b16 %v2724
  %v2789 = vunpack.c.l.b16 %v2725
  %v2790 = vunpack.c.l.b16 %v2726
  %v2791 = vunpack.c.l.b16 %v2727
  %v2792 = vunpack.c.l.b16 %v2728
  %v2793 = vunpack.c.l.b16 %v2729
  %v2794 = vunpack.c.l.b16 %v2730
  %v2795 = vunpack.c.l.b16 %v2731
  %v2796 = vunpack.c.l.b16 %v2732
  %v2797 = vunpack.c.l.b16 %v2733
  %v2798 = vunpack.c.l.b16 %v2734
  %v2799 = vpack.c.b16 %v2768, %v2767
  %v2800 = vpack.c.b16 %v2770, %v2769
  %v2801 = vpack.c.b16 %v2772, %v2771
  %v2802 = vpack.c.b16 %v2774, %v2773
  %v2803 = vpack.c.b16 %v2776, %v2775
  %v2804 = vpack.c.b16 %v2778, %v2777
  %v2805 = vpack.c.b16 %v2780, %v2779
  %v2806 = vpack.c.b16 %v2782, %v2781
  %v2807 = vpack.c.b16 %v2784, %v2783
  %v2808 = vpack.c.b16 %v2786, %v2785
  %v2809 = vpack.c.b16 %v2788, %v2787
  %v2810 = vpack.c.b16 %v2790, %v2789
  %v2811 = vpack.c.b16 %v2792, %v2791
  %v2812 = vpack.c.b16 %v2794, %v2793
  %v2813 = vpack.c.b16 %v2796, %v2795
  %v2814 = vpack.c.b16 %v2798, %v2797
  %2831 = vmatprep.subr.bf16.mxu0 0
  %2832 = vmatpush1.bf16.msra.mxu0 %v2799
  %2833 = vmatprep.subr.bf16.mxu0 0
  %2834 = vmatpush1.bf16.msra.mxu0 %v2800
  %2835 = vmatprep.subr.bf16.mxu0 0
  %2836 = vmatpush1.bf16.msra.mxu0 %v2801
  %2837 = vmatprep.subr.bf16.mxu0 0
  %2838 = vmatpush1.bf16.msra.mxu0 %v2802
  %2839 = vmatprep.subr.bf16.mxu0 0
  %2840 = vmatpush1.bf16.msra.mxu0 %v2803
  %2841 = vmatprep.subr.bf16.mxu0 0
  %2842 = vmatpush1.bf16.msra.mxu0 %v2804
  %2843 = vmatprep.subr.bf16.mxu0 0
  %2844 = vmatpush1.bf16.msra.mxu0 %v2805
  %2845 = vmatprep.subr.bf16.mxu0 0
  %2846 = vmatpush1.bf16.msra.mxu0 %v2806
  %2847 = vmatprep.subr.bf16.mxu0 0
  %2848 = vmatpush1.bf16.msra.mxu0 %v2807
  %2849 = vmatprep.subr.bf16.mxu0 0
  %2850 = vmatpush1.bf16.msra.mxu0 %v2808
  %2851 = vmatprep.subr.bf16.mxu0 0
  %2852 = vmatpush1.bf16.msra.mxu0 %v2809
  %2853 = vmatprep.subr.bf16.mxu0 0
  %2854 = vmatpush1.bf16.msra.mxu0 %v2810
  %2855 = vmatprep.subr.bf16.mxu0 0
  %2856 = vmatpush1.bf16.msra.mxu0 %v2811
  %2857 = vmatprep.subr.bf16.mxu0 0
  %2858 = vmatpush1.bf16.msra.mxu0 %v2812
  %2859 = vmatprep.subr.bf16.mxu0 0
  %2860 = vmatpush1.bf16.msra.mxu0 %v2813
  %2861 = vmatprep.subr.bf16.mxu0 0
  %2862 = vmatpush1.bf16.msra.mxu0 %v2814
  %2863 = vmatprep.mubr.bf16.mxu0 %v2688
  %2864 = vmatmul.mubr.bf16.gmra.mrb[0].mxu0 %v2687
  %v2865 = vpop.f32.mrb[0].mxu0
  %v2866 = vadd.f32 0.0, %v2865
  %v2867 = vpop.f32.mrb[0].mxu0
  %v2868 = vpop.f32.mrb[0].mxu0
  %v2869 = vadd.f32 0.0, %v2868
  %v2870 = vpop.f32.mrb[0].mxu0
  %2871 = vmatprep.mubr.bf16.mxu0 %v2690
  %2872 = vmatmul.mubr.bf16.gmra.mrb[0].mxu0 %v2689
  %v2873 = vpop.f32.mrb[0].mxu0
  %v2874 = vadd.f32 0.0, %v2873
  %v2875 = vpop.f32.mrb[0].mxu0
  %v2876 = vpop.f32.mrb[0].mxu0
  %v2877 = vadd.f32 0.0, %v2876
  %v2878 = vpop.f32.mrb[0].mxu0
  %2879 = vmatprep.mubr.bf16.mxu0 %v2692
  %2880 = vmatmul.mubr.bf16.gmra.mrb[0].mxu0 %v2691
  %v2881 = vpop.f32.mrb[0].mxu0
  %v2882 = vadd.f32 0.0, %v2881
  %v2883 = vpop.f32.mrb[0].mxu0
  %v2884 = vpop.f32.mrb[0].mxu0
  %v2885 = vadd.f32 0.0, %v2884
  %v2886 = vpop.f32.mrb[0].mxu0
  %2887 = vmatprep.mubr.bf16.mxu0 %v2694
  %2888 = vmatmul.mubr.bf16.gmra.mrb[0].mxu0 %v2693
  %v2889 = vpop.f32.mrb[0].mxu0
  %v2890 = vadd.f32 0.0, %v2889
  %v2891 = vpop.f32.mrb[0].mxu0
  %v2892 = vpop.f32.mrb[0].mxu0
  %v2893 = vadd.f32 0.0, %v2892
  %v2894 = vpop.f32.mrb[0].mxu0
  %2895 = vmatprep.mubr.bf16.mxu0 %v2696
  %2896 = vmatmul.mubr.bf16.gmra.mrb[0].mxu0 %v2695
  %v2897 = vpop.f32.mrb[0].mxu0
  %v2898 = vadd.f32 0.0, %v2897
  %v2899 = vpop.f32.mrb[0].mxu0
  %v2900 = vpop.f32.mrb[0].mxu0
  %v2901 = vadd.f32 0.0, %v2900
  %v2902 = vpop.f32.mrb[0].mxu0
  %2903 = vmatprep.mubr.bf16.mxu0 %v2698
  %2904 = vmatmul.mubr.bf16.gmra.mrb[0].mxu0 %v2697
  %v2905 = vpop.f32.mrb[0].mxu0
  %v2906 = vadd.f32 0.0, %v2905
  %v2907 = vpop.f32.mrb[0].mxu0
  %v2908 = vpop.f32.mrb[0].mxu0
  %v2909 = vadd.f32 0.0, %v2908
  %v2910 = vpop.f32.mrb[0].mxu0
  %2911 = vmatprep.mubr.bf16.mxu0 %v2700
  %2912 = vmatmul.mubr.bf16.gmra.mrb[0].mxu0 %v2699
  %v2913 = vpop.f32.mrb[0].mxu0
  %v2914 = vadd.f32 0.0, %v2913
  %v2915 = vpop.f32.mrb[0].mxu0
  %v2916 = vpop.f32.mrb[0].mxu0
  %v2917 = vadd.f32 0.0, %v2916
  %v2918 = vpop.f32.mrb[0].mxu0
  %2919 = vmatprep.mubr.bf16.mxu0 %v2702
  %2920 = vmatmul.mubr.bf16.gmra.mrb[0].mxu0 %v2701
  %v2921 = vpop.f32.mrb[0].mxu0
  %v2922 = vadd.f32 0.0, %v2921
  %v2923 = vpop.f32.mrb[0].mxu0
  %v2924 = vpop.f32.mrb[0].mxu0
  %v2925 = vadd.f32 0.0, %v2924
  %v2926 = vpop.f32.mrb[0].mxu0
  %2927 = vdwg.mxu0
  %v2928 = vsub.f32 %v2866, %v1867
  %v2929 = vsub.f32 %v2869, %v1870
  %v2930 = vsub.f32 %v2874, %v1875
  %v2931 = vsub.f32 %v2877, %v1878
  %v2932 = vsub.f32 %v2882, %v1883
  %v2933 = vsub.f32 %v2885, %v1886
  %v2934 = vsub.f32 %v2890, %v1891
  %v2935 = vsub.f32 %v2893, %v1894
  %v2936 = vsub.f32 %v2898, %v1899
  %v2937 = vsub.f32 %v2901, %v1902
  %v2938 = vsub.f32 %v2906, %v1907
  %v2939 = vsub.f32 %v2909, %v1910
  %v2940 = vsub.f32 %v2914, %v1915
  %v2941 = vsub.f32 %v2917, %v1918
  %v2942 = vsub.f32 %v2922, %v1923
  %v2943 = vsub.f32 %v2925, %v1926
  %v2944 = vmul.f32 %v2928, %v2928
  %v2945 = vmul.f32 %v2929, %v2929
  %v2946 = vmul.f32 %v2930, %v2930
  %v2947 = vmul.f32 %v2931, %v2931
  %v2948 = vmul.f32 %v2932, %v2932
  %v2949 = vmul.f32 %v2933, %v2933
  %v2950 = vmul.f32 %v2934, %v2934
  %v2951 = vmul.f32 %v2935, %v2935
  %v2952 = vmul.f32 %v2936, %v2936
  %v2953 = vmul.f32 %v2937, %v2937
  %v2954 = vmul.f32 %v2938, %v2938
  %v2955 = vmul.f32 %v2939, %v2939
  %v2956 = vmul.f32 %v2940, %v2940
  %v2957 = vmul.f32 %v2941, %v2941
  %v2958 = vmul.f32 %v2942, %v2942
  %v2959 = vmul.f32 %v2943, %v2943
  %2960 = vadd.xlane.f32.xlu0 %v2944
  %v2961 = vpop.xlane.xlu0 %2960
  %2962 = vadd.xlane.f32.xlu0 %v2945
  %v2963 = vpop.xlane.xlu0 %2962
  %2964 = vadd.xlane.f32.xlu0 %v2946
  %v2965 = vpop.xlane.xlu0 %2964
  %2966 = vadd.xlane.f32.xlu0 %v2947
  %v2967 = vpop.xlane.xlu0 %2966
  %2968 = vadd.xlane.f32.xlu0 %v2948
  %v2969 = vpop.xlane.xlu0 %2968
  %2970 = vadd.xlane.f32.xlu0 %v2949
  %v2971 = vpop.xlane.xlu0 %2970
  %2972 = vadd.xlane.f32.xlu0 %v2950
  %v2973 = vpop.xlane.xlu0 %2972
  %2974 = vadd.xlane.f32.xlu0 %v2951
  %v2975 = vpop.xlane.xlu0 %2974
  %2976 = vadd.xlane.f32.xlu0 %v2952
  %v2977 = vpop.xlane.xlu0 %2976
  %2978 = vadd.xlane.f32.xlu0 %v2953
  %v2979 = vpop.xlane.xlu0 %2978
  %2980 = vadd.xlane.f32.xlu0 %v2954
  %v2981 = vpop.xlane.xlu0 %2980
  %2982 = vadd.xlane.f32.xlu0 %v2955
  %v2983 = vpop.xlane.xlu0 %2982
  %2984 = vadd.xlane.f32.xlu0 %v2956
  %v2985 = vpop.xlane.xlu0 %2984
  %2986 = vadd.xlane.f32.xlu0 %v2957
  %v2987 = vpop.xlane.xlu0 %2986
  %2988 = vadd.xlane.f32.xlu0 %v2958
  %v2989 = vpop.xlane.xlu0 %2988
  %2990 = vadd.xlane.f32.xlu0 %v2959
  %v2991 = vpop.xlane.xlu0 %2990
  %v2992 = vmul.f32 %v1737, %v2961
  %v2993 = vmul.f32 %v1738, %v2963
  %v2994 = vmul.f32 %v1739, %v2965
  %v2995 = vmul.f32 %v1740, %v2967
  %v2996 = vmul.f32 %v1741, %v2969
  %v2997 = vmul.f32 %v1742, %v2971
  %v2998 = vmul.f32 %v1743, %v2973
  %v2999 = vmul.f32 %v1744, %v2975
  %v3000 = vmul.f32 %v1745, %v2977
  %v3001 = vmul.f32 %v1746, %v2979
  %v3002 = vmul.f32 %v1747, %v2981
  %v3003 = vmul.f32 %v1748, %v2983
  %v3004 = vmul.f32 %v1749, %v2985
  %v3005 = vmul.f32 %v1750, %v2987
  %v3006 = vmul.f32 %v1751, %v2989
  %v3007 = vmul.f32 %v1752, %v2991
  %v3008 = vmul.f32 %v2992, 7.6293945e-05
  %v3009 = vmul.f32 %v2993, 7.6293945e-05
  %v3010 = vmul.f32 %v2994, 7.6293945e-05
  %v3011 = vmul.f32 %v2995, 7.6293945e-05
  %v3012 = vmul.f32 %v2996, 7.6293945e-05
  %v3013 = vmul.f32 %v2997, 7.6293945e-05
  %v3014 = vmul.f32 %v2998, 7.6293945e-05
  %v3015 = vmul.f32 %v2999, 7.6293945e-05
  %v3016 = vmul.f32 %v3000, 7.6293945e-05
  %v3017 = vmul.f32 %v3001, 7.6293945e-05
  %v3018 = vmul.f32 %v3002, 7.6293945e-05
  %v3019 = vmul.f32 %v3003, 7.6293945e-05
  %v3020 = vmul.f32 %v3004, 7.6293945e-05
  %v3021 = vmul.f32 %v3005, 7.6293945e-05
  %v3022 = vmul.f32 %v3006, 7.6293945e-05
  %v3023 = vmul.f32 %v3007, 7.6293945e-05
  %vm3024 = vcmask 7168
  %3025 = vst.msk [vmem:[%s17] sm:$0xff] %vm3024, %v3008
  %3026 = vst.msk [vmem:[%s17 + $0x8] sm:$0xff] %vm3024, %v3009
  %3027 = vst.msk [vmem:[%s17 + $0x10] sm:$0xff] %vm3024, %v3010
  %3028 = vst.msk [vmem:[%s17 + $0x18] sm:$0xff] %vm3024, %v3011
  %3029 = vst.msk [vmem:[%s17 + $0x20] sm:$0xff] %vm3024, %v3012
  %3030 = vst.msk [vmem:[%s17 + $0x28] sm:$0xff] %vm3024, %v3013
  %3031 = vst.msk [vmem:[%s17 + $0x30] sm:$0xff] %vm3024, %v3014
  %3032 = vst.msk [vmem:[%s17 + $0x38] sm:$0xff] %vm3024, %v3015
  %3033 = vst.msk [vmem:[%s17 + $0x40] sm:$0xff] %vm3024, %v3016
  %3034 = vst.msk [vmem:[%s17 + $0x48] sm:$0xff] %vm3024, %v3017
  %3035 = vst.msk [vmem:[%s17 + $0x50] sm:$0xff] %vm3024, %v3018
  %3036 = vst.msk [vmem:[%s17 + $0x58] sm:$0xff] %vm3024, %v3019
  %3037 = vst.msk [vmem:[%s17 + $0x60] sm:$0xff] %vm3024, %v3020
  %3038 = vst.msk [vmem:[%s17 + $0x68] sm:$0xff] %vm3024, %v3021
  %3039 = vst.msk [vmem:[%s17 + $0x70] sm:$0xff] %vm3024, %v3022
  %3040 = vst.msk [vmem:[%s17 + $0x78] sm:$0xff] %vm3024, %v3023
  %v3041 = vpack.c.bf16 %v2869, %v2866
  %v3042 = vpack.c.bf16 %v2877, %v2874
  %v3043 = vpack.c.bf16 %v2885, %v2882
  %v3044 = vpack.c.bf16 %v2893, %v2890
  %v3045 = vpack.c.bf16 %v2901, %v2898
  %v3046 = vpack.c.bf16 %v2909, %v2906
  %v3047 = vpack.c.bf16 %v2917, %v2914
  %v3048 = vpack.c.bf16 %v2925, %v2922
  %v3049 = vld [vmem:[%s10] sm:$0xf]
  %v3050 = vld [vmem:[%s10 + $0x4] sm:$0xf]
  %v3051 = vld [vmem:[%s10 + $0x8] sm:$0xf]
  %v3052 = vld [vmem:[%s10 + $0xc] sm:$0xf]
  %v3053 = vld [vmem:[%s10 + $0x10] sm:$0xf]
  %v3054 = vld [vmem:[%s10 + $0x14] sm:$0xf]
  %v3055 = vld [vmem:[%s10 + $0x18] sm:$0xf]
  %v3056 = vld [vmem:[%s10 + $0x1c] sm:$0xf]
  %v3057 = vld [vmem:[%s10 + $0x20] sm:$0xf]
  %v3058 = vld [vmem:[%s10 + $0x24] sm:$0xf]
  %v3059 = vld [vmem:[%s10 + $0x28] sm:$0xf]
  %v3060 = vld [vmem:[%s10 + $0x2c] sm:$0xf]
  %v3061 = vld [vmem:[%s10 + $0x30] sm:$0xf]
  %v3062 = vld [vmem:[%s10 + $0x34] sm:$0xf]
  %v3063 = vld [vmem:[%s10 + $0x38] sm:$0xf]
  %v3064 = vld [vmem:[%s10 + $0x3c] sm:$0xf]
  %v3065 = vld [vmem:[%s11] sm:$0x1]
  %v3067 = vlaneseq
  %v3068 = vshrl.u32 %v3067, 7
  %v3069 = vsub.s32 0, %v3068
  %v3070 = vrot.slane %v3065, %v3069
  %v3088 = vunpack.c.l.b16 %v3049
  %v3089 = vunpack.c.l.b16 %v3050
  %v3090 = vunpack.c.l.b16 %v3051
  %v3091 = vunpack.c.l.b16 %v3052
  %v3092 = vunpack.c.l.b16 %v3053
  %v3093 = vunpack.c.l.b16 %v3054
  %v3094 = vunpack.c.l.b16 %v3055
  %v3095 = vunpack.c.l.b16 %v3056
  %v3096 = vunpack.c.l.b16 %v3057
  %v3097 = vunpack.c.l.b16 %v3058
  %v3098 = vunpack.c.l.b16 %v3059
  %v3099 = vunpack.c.l.b16 %v3060
  %v3100 = vunpack.c.l.b16 %v3061
  %v3101 = vunpack.c.l.b16 %v3062
  %v3102 = vunpack.c.l.b16 %v3063
  %v3103 = vunpack.c.l.b16 %v3064
  %v3104 = vpack.c.b16 %v3089, %v3088
  %v3105 = vpack.c.b16 %v3091, %v3090
  %v3106 = vpack.c.b16 %v3093, %v3092
  %v3107 = vpack.c.b16 %v3095, %v3094
  %v3108 = vpack.c.b16 %v3097, %v3096
  %v3109 = vpack.c.b16 %v3099, %v3098
  %v3110 = vpack.c.b16 %v3101, %v3100
  %v3111 = vpack.c.b16 %v3103, %v3102
  %3120 = vmatprep.subr.bf16.mxu0 0
  %3121 = vmatpush1.bf16.msra.mxu0 %v3104
  %3122 = vmatprep.subr.bf16.mxu0 0
  %3123 = vmatpush1.bf16.msra.mxu0 %v3105
  %3124 = vmatprep.subr.bf16.mxu0 0
  %3125 = vmatpush1.bf16.msra.mxu0 %v3106
  %3126 = vmatprep.subr.bf16.mxu0 0
  %3127 = vmatpush1.bf16.msra.mxu0 %v3107
  %3128 = vmatprep.subr.bf16.mxu0 0
  %3129 = vmatpush1.bf16.msra.mxu0 %v3108
  %3130 = vmatprep.subr.bf16.mxu0 0
  %3131 = vmatpush1.bf16.msra.mxu0 %v3109
  %3132 = vmatprep.subr.bf16.mxu0 0
  %3133 = vmatpush1.bf16.msra.mxu0 %v3110
  %3134 = vmatprep.subr.bf16.mxu0 0
  %3135 = vmatpush1.bf16.msra.mxu0 %v3111
  %3136 = vmatprep.subr.bf16.mxu0 0
  %3137 = vmatpush1.bf16.msra.mxu0 0
  %3138 = vmatprep.subr.bf16.mxu0 0
  %3139 = vmatpush1.bf16.msra.mxu0 0
  %3140 = vmatprep.subr.bf16.mxu0 0
  %3141 = vmatpush1.bf16.msra.mxu0 0
  %3142 = vmatprep.subr.bf16.mxu0 0
  %3143 = vmatpush1.bf16.msra.mxu0 0
  %3144 = vmatprep.subr.bf16.mxu0 0
  %3145 = vmatpush1.bf16.msra.mxu0 0
  %3146 = vmatprep.subr.bf16.mxu0 0
  %3147 = vmatpush1.bf16.msra.mxu0 0
  %3148 = vmatprep.subr.bf16.mxu0 0
  %3149 = vmatpush1.bf16.msra.mxu0 0
  %3150 = vmatprep.subr.bf16.mxu0 0
  %3151 = vmatpush1.bf16.msra.mxu0 0
  %3152 = vmatprep.mubr.bf16.mxu0 0
  %3153 = vmatmul.mubr.bf16.gmra.mrb[0].mxu0 %v3041
  %v3154 = vpop.f32.mrb[0].mxu0
  %v3155 = vadd.f32 %v3070, %v3154
  %v3156 = vpop.f32.mrb[0].mxu0
  %v3157 = vpop.f32.mrb[0].mxu0
  %v3158 = vadd.f32 %v3070, %v3157
  %v3159 = vpop.f32.mrb[0].mxu0
  %3160 = vmatprep.mubr.bf16.mxu0 0
  %3161 = vmatmul.mubr.bf16.gmra.mrb[0].mxu0 %v3042
  %v3162 = vpop.f32.mrb[0].mxu0
  %v3163 = vadd.f32 %v3070, %v3162
  %v3164 = vpop.f32.mrb[0].mxu0
  %v3165 = vpop.f32.mrb[0].mxu0
  %v3166 = vadd.f32 %v3070, %v3165
  %v3167 = vpop.f32.mrb[0].mxu0
  %3168 = vmatprep.mubr.bf16.mxu0 0
  %3169 = vmatmul.mubr.bf16.gmra.mrb[0].mxu0 %v3043
  %v3170 = vpop.f32.mrb[0].mxu0
  %v3171 = vadd.f32 %v3070, %v3170
  %v3172 = vpop.f32.mrb[0].mxu0
  %v3173 = vpop.f32.mrb[0].mxu0
  %v3174 = vadd.f32 %v3070, %v3173
  %v3175 = vpop.f32.mrb[0].mxu0
  %3176 = vmatprep.mubr.bf16.mxu0 0
  %3177 = vmatmul.mubr.bf16.gmra.mrb[0].mxu0 %v3044
  %v3178 = vpop.f32.mrb[0].mxu0
  %v3179 = vadd.f32 %v3070, %v3178
  %v3180 = vpop.f32.mrb[0].mxu0
  %v3181 = vpop.f32.mrb[0].mxu0
  %v3182 = vadd.f32 %v3070, %v3181
  %v3183 = vpop.f32.mrb[0].mxu0
  %3184 = vmatprep.mubr.bf16.mxu0 0
  %3185 = vmatmul.mubr.bf16.gmra.mrb[0].mxu0 %v3045
  %v3186 = vpop.f32.mrb[0].mxu0
  %v3187 = vadd.f32 %v3070, %v3186
  %v3188 = vpop.f32.mrb[0].mxu0
  %v3189 = vpop.f32.mrb[0].mxu0
  %v3190 = vadd.f32 %v3070, %v3189
  %v3191 = vpop.f32.mrb[0].mxu0
  %3192 = vmatprep.mubr.bf16.mxu0 0
  %3193 = vmatmul.mubr.bf16.gmra.mrb[0].mxu0 %v3046
  %v3194 = vpop.f32.mrb[0].mxu0
  %v3195 = vadd.f32 %v3070, %v3194
  %v3196 = vpop.f32.mrb[0].mxu0
  %v3197 = vpop.f32.mrb[0].mxu0
  %v3198 = vadd.f32 %v3070, %v3197
  %v3199 = vpop.f32.mrb[0].mxu0
  %3200 = vmatprep.mubr.bf16.mxu0 0
  %3201 = vmatmul.mubr.bf16.gmra.mrb[0].mxu0 %v3047
  %v3202 = vpop.f32.mrb[0].mxu0
  %v3203 = vadd.f32 %v3070, %v3202
  %v3204 = vpop.f32.mrb[0].mxu0
  %v3205 = vpop.f32.mrb[0].mxu0
  %v3206 = vadd.f32 %v3070, %v3205
  %v3207 = vpop.f32.mrb[0].mxu0
  %3208 = vmatprep.mubr.bf16.mxu0 0
  %3209 = vmatmul.mubr.bf16.gmra.mrb[0].mxu0 %v3048
  %v3210 = vpop.f32.mrb[0].mxu0
  %v3211 = vadd.f32 %v3070, %v3210
  %v3212 = vpop.f32.mrb[0].mxu0
  %v3213 = vpop.f32.mrb[0].mxu0
  %v3214 = vadd.f32 %v3070, %v3213
  %v3215 = vpop.f32.mrb[0].mxu0
  %3216 = vdwg.mxu0
  %v3217 = vxor.u32 %v3155, 2147483648
  %v3218 = vxor.u32 %v3158, 2147483648
  %v3219 = vxor.u32 %v3163, 2147483648
  %v3220 = vxor.u32 %v3166, 2147483648
  %v3221 = vxor.u32 %v3171, 2147483648
  %v3222 = vxor.u32 %v3174, 2147483648
  %v3223 = vxor.u32 %v3179, 2147483648
  %v3224 = vxor.u32 %v3182, 2147483648
  %v3225 = vxor.u32 %v3187, 2147483648
  %v3226 = vxor.u32 %v3190, 2147483648
  %v3227 = vxor.u32 %v3195, 2147483648
  %v3228 = vxor.u32 %v3198, 2147483648
  %v3229 = vxor.u32 %v3203, 2147483648
  %v3230 = vxor.u32 %v3206, 2147483648
  %v3231 = vxor.u32 %v3211, 2147483648
  %v3232 = vxor.u32 %v3214, 2147483648
  %v3233 = vmul.f32 %v3217, 1.442695
  %v3234 = vpow.pop %v3233
  %v3235 = vmul.f32 %v3218, 1.442695
  %v3236 = vpow.pop %v3235
  %v3237 = vmul.f32 %v3219, 1.442695
  %v3238 = vpow.pop %v3237
  %v3239 = vmul.f32 %v3220, 1.442695
  %v3240 = vpow.pop %v3239
  %v3241 = vmul.f32 %v3221, 1.442695
  %v3242 = vpow.pop %v3241
  %v3243 = vmul.f32 %v3222, 1.442695
  %v3244 = vpow.pop %v3243
  %v3245 = vmul.f32 %v3223, 1.442695
  %v3246 = vpow.pop %v3245
  %v3247 = vmul.f32 %v3224, 1.442695
  %v3248 = vpow.pop %v3247
  %v3249 = vmul.f32 %v3225, 1.442695
  %v3250 = vpow.pop %v3249
  %v3251 = vmul.f32 %v3226, 1.442695
  %v3252 = vpow.pop %v3251
  %v3253 = vmul.f32 %v3227, 1.442695
  %v3254 = vpow.pop %v3253
  %v3255 = vmul.f32 %v3228, 1.442695
  %v3256 = vpow.pop %v3255
  %v3257 = vmul.f32 %v3229, 1.442695
  %v3258 = vpow.pop %v3257
  %v3259 = vmul.f32 %v3230, 1.442695
  %v3260 = vpow.pop %v3259
  %v3261 = vmul.f32 %v3231, 1.442695
  %v3262 = vpow.pop %v3261
  %v3263 = vmul.f32 %v3232, 1.442695
  %v3264 = vpow.pop %v3263
  %v3265 = vadd.f32 %v3234, 1.0
  %v3266 = vadd.f32 %v3236, 1.0
  %v3267 = vadd.f32 %v3238, 1.0
  %v3268 = vadd.f32 %v3240, 1.0
  %v3269 = vadd.f32 %v3242, 1.0
  %v3270 = vadd.f32 %v3244, 1.0
  %v3271 = vadd.f32 %v3246, 1.0
  %v3272 = vadd.f32 %v3248, 1.0
  %v3273 = vadd.f32 %v3250, 1.0
  %v3274 = vadd.f32 %v3252, 1.0
  %v3275 = vadd.f32 %v3254, 1.0
  %v3276 = vadd.f32 %v3256, 1.0
  %v3277 = vadd.f32 %v3258, 1.0
  %v3278 = vadd.f32 %v3260, 1.0
  %v3279 = vadd.f32 %v3262, 1.0
  %v3280 = vadd.f32 %v3264, 1.0
  %v3281 = vrcp.pop %v3265
  %v3282 = vmul.f32 1.0, %v3281
  %v3283 = vrcp.pop %v3266
  %v3284 = vmul.f32 1.0, %v3283
  %v3285 = vrcp.pop %v3267
  %v3286 = vmul.f32 1.0, %v3285
  %v3287 = vrcp.pop %v3268
  %v3288 = vmul.f32 1.0, %v3287
  %v3289 = vrcp.pop %v3269
  %v3290 = vmul.f32 1.0, %v3289
  %v3291 = vrcp.pop %v3270
  %v3292 = vmul.f32 1.0, %v3291
  %v3293 = vrcp.pop %v3271
  %v3294 = vmul.f32 1.0, %v3293
  %v3295 = vrcp.pop %v3272
  %v3296 = vmul.f32 1.0, %v3295
  %v3297 = vrcp.pop %v3273
  %v3298 = vmul.f32 1.0, %v3297
  %v3299 = vrcp.pop %v3274
  %v3300 = vmul.f32 1.0, %v3299
  %v3301 = vrcp.pop %v3275
  %v3302 = vmul.f32 1.0, %v3301
  %v3303 = vrcp.pop %v3276
  %v3304 = vmul.f32 1.0, %v3303
  %v3305 = vrcp.pop %v3277
  %v3306 = vmul.f32 1.0, %v3305
  %v3307 = vrcp.pop %v3278
  %v3308 = vmul.f32 1.0, %v3307
  %v3309 = vrcp.pop %v3279
  %v3310 = vmul.f32 1.0, %v3309
  %v3311 = vrcp.pop %v3280
  %v3312 = vmul.f32 1.0, %v3311
  %v3313 = vmul.f32 %v3155, %v3282
  %v3314 = vmul.f32 %v3158, %v3284
  %v3315 = vmul.f32 %v3163, %v3286
  %v3316 = vmul.f32 %v3166, %v3288
  %v3317 = vmul.f32 %v3171, %v3290
  %v3318 = vmul.f32 %v3174, %v3292
  %v3319 = vmul.f32 %v3179, %v3294
  %v3320 = vmul.f32 %v3182, %v3296
  %v3321 = vmul.f32 %v3187, %v3298
  %v3322 = vmul.f32 %v3190, %v3300
  %v3323 = vmul.f32 %v3195, %v3302
  %v3324 = vmul.f32 %v3198, %v3304
  %v3325 = vmul.f32 %v3203, %v3306
  %v3326 = vmul.f32 %v3206, %v3308
  %v3327 = vmul.f32 %v3211, %v3310
  %v3328 = vmul.f32 %v3214, %v3312
  %v3329 = vpack.c.bf16 %v3314, %v3313
  %v3330 = vpack.c.bf16 %v3316, %v3315
  %v3331 = vpack.c.bf16 %v3318, %v3317
  %v3332 = vpack.c.bf16 %v3320, %v3319
  %v3333 = vpack.c.bf16 %v3322, %v3321
  %v3334 = vpack.c.bf16 %v3324, %v3323
  %v3335 = vpack.c.bf16 %v3326, %v3325
  %v3336 = vpack.c.bf16 %v3328, %v3327
  %v3337 = vld [vmem:[%s12] sm:$0xf]
  %v3338 = vld [vmem:[%s12 + $0x4] sm:$0xf]
  %v3339 = vld [vmem:[%s12 + $0x8] sm:$0xf]
  %v3340 = vld [vmem:[%s12 + $0xc] sm:$0xf]
  %v3341 = vld [vmem:[%s12 + $0x10] sm:$0xf]
  %v3342 = vld [vmem:[%s12 + $0x14] sm:$0xf]
  %v3343 = vld [vmem:[%s12 + $0x18] sm:$0xf]
  %v3344 = vld [vmem:[%s12 + $0x1c] sm:$0xf]
  %v3345 = vld [vmem:[%s12 + $0x20] sm:$0xf]
  %v3346 = vld [vmem:[%s12 + $0x24] sm:$0xf]
  %v3347 = vld [vmem:[%s12 + $0x28] sm:$0xf]
  %v3348 = vld [vmem:[%s12 + $0x2c] sm:$0xf]
  %v3349 = vld [vmem:[%s12 + $0x30] sm:$0xf]
  %v3350 = vld [vmem:[%s12 + $0x34] sm:$0xf]
  %v3351 = vld [vmem:[%s12 + $0x38] sm:$0xf]
  %v3352 = vld [vmem:[%s12 + $0x3c] sm:$0xf]
  %v3353 = vld [vmem:[%s13] sm:$0x1]
  %v3355 = vlaneseq
  %v3356 = vshrl.u32 %v3355, 7
  %v3357 = vsub.s32 0, %v3356
  %v3358 = vrot.slane %v3353, %v3357
  %v3376 = vunpack.c.l.b16 %v3337
  %v3377 = vunpack.c.l.b16 %v3338
  %v3378 = vunpack.c.l.b16 %v3339
  %v3379 = vunpack.c.l.b16 %v3340
  %v3380 = vunpack.c.l.b16 %v3341
  %v3381 = vunpack.c.l.b16 %v3342
  %v3382 = vunpack.c.l.b16 %v3343
  %v3383 = vunpack.c.l.b16 %v3344
  %v3384 = vunpack.c.l.b16 %v3345
  %v3385 = vunpack.c.l.b16 %v3346
  %v3386 = vunpack.c.l.b16 %v3347
  %v3387 = vunpack.c.l.b16 %v3348
  %v3388 = vunpack.c.l.b16 %v3349
  %v3389 = vunpack.c.l.b16 %v3350
  %v3390 = vunpack.c.l.b16 %v3351
  %v3391 = vunpack.c.l.b16 %v3352
  %v3392 = vpack.c.b16 %v3377, %v3376
  %v3393 = vpack.c.b16 %v3379, %v3378
  %v3394 = vpack.c.b16 %v3381, %v3380
  %v3395 = vpack.c.b16 %v3383, %v3382
  %v3396 = vpack.c.b16 %v3385, %v3384
  %v3397 = vpack.c.b16 %v3387, %v3386
  %v3398 = vpack.c.b16 %v3389, %v3388
  %v3399 = vpack.c.b16 %v3391, %v3390
  %3408 = vmatprep.subr.bf16.mxu0 0
  %3409 = vmatpush1.bf16.msra.mxu0 %v3392
  %3410 = vmatprep.subr.bf16.mxu0 0
  %3411 = vmatpush1.bf16.msra.mxu0 %v3393
  %3412 = vmatprep.subr.bf16.mxu0 0
  %3413 = vmatpush1.bf16.msra.mxu0 %v3394
  %3414 = vmatprep.subr.bf16.mxu0 0
  %3415 = vmatpush1.bf16.msra.mxu0 %v3395
  %3416 = vmatprep.subr.bf16.mxu0 0
  %3417 = vmatpush1.bf16.msra.mxu0 %v3396
  %3418 = vmatprep.subr.bf16.mxu0 0
  %3419 = vmatpush1.bf16.msra.mxu0 %v3397
  %3420 = vmatprep.subr.bf16.mxu0 0
  %3421 = vmatpush1.bf16.msra.mxu0 %v3398
  %3422 = vmatprep.subr.bf16.mxu0 0
  %3423 = vmatpush1.bf16.msra.mxu0 %v3399
  %3424 = vmatprep.subr.bf16.mxu0 0
  %3425 = vmatpush1.bf16.msra.mxu0 0
  %3426 = vmatprep.subr.bf16.mxu0 0
  %3427 = vmatpush1.bf16.msra.mxu0 0
  %3428 = vmatprep.subr.bf16.mxu0 0
  %3429 = vmatpush1.bf16.msra.mxu0 0
  %3430 = vmatprep.subr.bf16.mxu0 0
  %3431 = vmatpush1.bf16.msra.mxu0 0
  %3432 = vmatprep.subr.bf16.mxu0 0
  %3433 = vmatpush1.bf16.msra.mxu0 0
  %3434 = vmatprep.subr.bf16.mxu0 0
  %3435 = vmatpush1.bf16.msra.mxu0 0
  %3436 = vmatprep.subr.bf16.mxu0 0
  %3437 = vmatpush1.bf16.msra.mxu0 0
  %3438 = vmatprep.subr.bf16.mxu0 0
  %3439 = vmatpush1.bf16.msra.mxu0 0
  %3440 = vmatprep.mubr.bf16.mxu0 0
  %3441 = vmatmul.mubr.bf16.gmra.mrb[0].mxu0 %v3329
  %v3442 = vpop.f32.mrb[0].mxu0
  %v3443 = vadd.f32 %v3358, %v3442
  %v3444 = vpop.f32.mrb[0].mxu0
  %v3445 = vpop.f32.mrb[0].mxu0
  %v3446 = vadd.f32 %v3358, %v3445
  %v3447 = vpop.f32.mrb[0].mxu0
  %3448 = vmatprep.mubr.bf16.mxu0 0
  %3449 = vmatmul.mubr.bf16.gmra.mrb[0].mxu0 %v3330
  %v3450 = vpop.f32.mrb[0].mxu0
  %v3451 = vadd.f32 %v3358, %v3450
  %v3452 = vpop.f32.mrb[0].mxu0
  %v3453 = vpop.f32.mrb[0].mxu0
  %v3454 = vadd.f32 %v3358, %v3453
  %v3455 = vpop.f32.mrb[0].mxu0
  %3456 = vmatprep.mubr.bf16.mxu0 0
  %3457 = vmatmul.mubr.bf16.gmra.mrb[0].mxu0 %v3331
  %v3458 = vpop.f32.mrb[0].mxu0
  %v3459 = vadd.f32 %v3358, %v3458
  %v3460 = vpop.f32.mrb[0].mxu0
  %v3461 = vpop.f32.mrb[0].mxu0
  %v3462 = vadd.f32 %v3358, %v3461
  %v3463 = vpop.f32.mrb[0].mxu0
  %3464 = vmatprep.mubr.bf16.mxu0 0
  %3465 = vmatmul.mubr.bf16.gmra.mrb[0].mxu0 %v3332
  %v3466 = vpop.f32.mrb[0].mxu0
  %v3467 = vadd.f32 %v3358, %v3466
  %v3468 = vpop.f32.mrb[0].mxu0
  %v3469 = vpop.f32.mrb[0].mxu0
  %v3470 = vadd.f32 %v3358, %v3469
  %v3471 = vpop.f32.mrb[0].mxu0
  %3472 = vmatprep.mubr.bf16.mxu0 0
  %3473 = vmatmul.mubr.bf16.gmra.mrb[0].mxu0 %v3333
  %v3474 = vpop.f32.mrb[0].mxu0
  %v3475 = vadd.f32 %v3358, %v3474
  %v3476 = vpop.f32.mrb[0].mxu0
  %v3477 = vpop.f32.mrb[0].mxu0
  %v3478 = vadd.f32 %v3358, %v3477
  %v3479 = vpop.f32.mrb[0].mxu0
  %3480 = vmatprep.mubr.bf16.mxu0 0
  %3481 = vmatmul.mubr.bf16.gmra.mrb[0].mxu0 %v3334
  %v3482 = vpop.f32.mrb[0].mxu0
  %v3483 = vadd.f32 %v3358, %v3482
  %v3484 = vpop.f32.mrb[0].mxu0
  %v3485 = vpop.f32.mrb[0].mxu0
  %v3486 = vadd.f32 %v3358, %v3485
  %v3487 = vpop.f32.mrb[0].mxu0
  %3488 = vmatprep.mubr.bf16.mxu0 0
  %3489 = vmatmul.mubr.bf16.gmra.mrb[0].mxu0 %v3335
  %v3490 = vpop.f32.mrb[0].mxu0
  %v3491 = vadd.f32 %v3358, %v3490
  %v3492 = vpop.f32.mrb[0].mxu0
  %v3493 = vpop.f32.mrb[0].mxu0
  %v3494 = vadd.f32 %v3358, %v3493
  %v3495 = vpop.f32.mrb[0].mxu0
  %3496 = vmatprep.mubr.bf16.mxu0 0
  %3497 = vmatmul.mubr.bf16.gmra.mrb[0].mxu0 %v3336
  %v3498 = vpop.f32.mrb[0].mxu0
  %v3499 = vadd.f32 %v3358, %v3498
  %v3500 = vpop.f32.mrb[0].mxu0
  %v3501 = vpop.f32.mrb[0].mxu0
  %v3502 = vadd.f32 %v3358, %v3501
  %v3503 = vpop.f32.mrb[0].mxu0
  %3504 = vdwg.mxu0
  %3505 = vst.msk [vmem:[%s14] sm:$0xff] %vm950, %v3443
  %3506 = vst.msk [vmem:[%s14 + $0x8] sm:$0xff] %vm950, %v3446
  %3507 = vst.msk [vmem:[%s14 + $0x10] sm:$0xff] %vm950, %v3451
  %3508 = vst.msk [vmem:[%s14 + $0x18] sm:$0xff] %vm950, %v3454
  %3509 = vst.msk [vmem:[%s14 + $0x20] sm:$0xff] %vm950, %v3459
  %3510 = vst.msk [vmem:[%s14 + $0x28] sm:$0xff] %vm950, %v3462
  %3511 = vst.msk [vmem:[%s14 + $0x30] sm:$0xff] %vm950, %v3467
  %3512 = vst.msk [vmem:[%s14 + $0x38] sm:$0xff] %vm950, %v3470
  %3513 = vst.msk [vmem:[%s14 + $0x40] sm:$0xff] %vm950, %v3475
  %3514 = vst.msk [vmem:[%s14 + $0x48] sm:$0xff] %vm950, %v3478
  %3515 = vst.msk [vmem:[%s14 + $0x50] sm:$0xff] %vm950, %v3483
  %3516 = vst.msk [vmem:[%s14 + $0x58] sm:$0xff] %vm950, %v3486
  %3517 = vst.msk [vmem:[%s14 + $0x60] sm:$0xff] %vm950, %v3491
  %3518 = vst.msk [vmem:[%s14 + $0x68] sm:$0xff] %vm950, %v3494
  %3519 = vst.msk [vmem:[%s14 + $0x70] sm:$0xff] %vm950, %v3499
  %3520 = vst.msk [vmem:[%s14 + $0x78] sm:$0xff] %vm950, %v3502
  %3521 = vst.msk [vmem:[%s15] sm:$0xff] %vm950, %v1127
  %3522 = vst.msk [vmem:[%s15 + $0x8] sm:$0xff] %vm950, %v1128
  %3523 = vst.msk [vmem:[%s15 + $0x10] sm:$0xff] %vm950, %v1129
  %3524 = vst.msk [vmem:[%s15 + $0x18] sm:$0xff] %vm950, %v1130
  %3525 = vst.msk [vmem:[%s15 + $0x20] sm:$0xff] %vm950, %v1131
  %3526 = vst.msk [vmem:[%s15 + $0x28] sm:$0xff] %vm950, %v1132
  %3527 = vst.msk [vmem:[%s15 + $0x30] sm:$0xff] %vm950, %v1133
  %3528 = vst.msk [vmem:[%s15 + $0x38] sm:$0xff] %vm950, %v1134
  %3529 = vst.msk [vmem:[%s15 + $0x40] sm:$0xff] %vm950, %v1135
  %3530 = vst.msk [vmem:[%s15 + $0x48] sm:$0xff] %vm950, %v1136
  %3531 = vst.msk [vmem:[%s15 + $0x50] sm:$0xff] %vm950, %v1137
  %3532 = vst.msk [vmem:[%s15 + $0x58] sm:$0xff] %vm950, %v1138
  %3533 = vst.msk [vmem:[%s15 + $0x60] sm:$0xff] %vm950, %v1139
  %3534 = vst.msk [vmem:[%s15 + $0x68] sm:$0xff] %vm950, %v1140
  %3535 = vst.msk [vmem:[%s15 + $0x70] sm:$0xff] %vm950, %v1141
  %3536 = vst.msk [vmem:[%s15 + $0x78] sm:$0xff] %vm950, %v1142
  %3537 = vst.msk [vmem:[%s16] sm:$0xff] %vm3024, %v1239
  %3538 = vst.msk [vmem:[%s16 + $0x8] sm:$0xff] %vm3024, %v1254
  %3539 = vst.msk [vmem:[%s16 + $0x10] sm:$0xff] %vm3024, %v1269
  %3540 = vst.msk [vmem:[%s16 + $0x18] sm:$0xff] %vm3024, %v1284
  %3541 = vst.msk [vmem:[%s16 + $0x20] sm:$0xff] %vm3024, %v1299
  %3542 = vst.msk [vmem:[%s16 + $0x28] sm:$0xff] %vm3024, %v1314
  %3543 = vst.msk [vmem:[%s16 + $0x30] sm:$0xff] %vm3024, %v1329
  %3544 = vst.msk [vmem:[%s16 + $0x38] sm:$0xff] %vm3024, %v1344
  %3545 = vst.msk [vmem:[%s16 + $0x40] sm:$0xff] %vm3024, %v1359
  %3546 = vst.msk [vmem:[%s16 + $0x48] sm:$0xff] %vm3024, %v1374
  %3547 = vst.msk [vmem:[%s16 + $0x50] sm:$0xff] %vm3024, %v1389
  %3548 = vst.msk [vmem:[%s16 + $0x58] sm:$0xff] %vm3024, %v1404
  %3549 = vst.msk [vmem:[%s16 + $0x60] sm:$0xff] %vm3024, %v1419
  %3550 = vst.msk [vmem:[%s16 + $0x68] sm:$0xff] %vm3024, %v1434
  %3551 = vst.msk [vmem:[%s16 + $0x70] sm:$0xff] %vm3024, %v1449
  %3552 = vst.msk [vmem:[%s16 + $0x78] sm:$0xff] %vm3024, %v1464
  // Predicated region
  $region58: #{triple_grain_vq_forward.1} parent=0 // pred_check
    _
  $region59: #{triple_grain_vq_forward.1} parent=0 // pred_check_branch
    %3554 = sbr.rel (0) target = $region61
  $region60: #{triple_grain_vq_forward.1} parent=0 // pred_region
    _
  $region61: #{triple_grain_vq_forward.1} parent=0 // pred_fallthru
    _
  // Predicated region
  $region62: #{triple_grain_vq_forward.1} parent=0 // pred_check
    _
  $region63: #{triple_grain_vq_forward.1} parent=0 // pred_check_branch
    %3556 = sbr.rel (0) target = $region65
  $region64: #{triple_grain_vq_forward.1} parent=0 // pred_region
    _
  $region65: #{triple_grain_vq_forward.1} parent=0 // pred_fallthru
    _
  // Predicated region
  $region66: #{triple_grain_vq_forward.1} parent=0 // pred_check
    _
  $region67: #{triple_grain_vq_forward.1} parent=0 // pred_check_branch
    %3558 = sbr.rel (0) target = $region69
  $region68: #{triple_grain_vq_forward.1} parent=0 // pred_region
    _
  $region69: #{triple_grain_vq_forward.1} parent=0 // pred_fallthru
    _
  // Predicated region
  $region70: #{triple_grain_vq_forward.1} parent=0 // pred_check
    _
  $region71: #{triple_grain_vq_forward.1} parent=0 // pred_check_branch
    %3560 = sbr.rel (0) target = $region73
  $region72: #{triple_grain_vq_forward.1} parent=0 // pred_region
    _
  $region73: #{triple_grain_vq_forward.1} parent=0 // pred_fallthru
    _
  // Predicated region
  $region74: #{triple_grain_vq_forward.1} parent=0 // pred_check
    _
  $region75: #{triple_grain_vq_forward.1} parent=0 // pred_check_branch
    %3562 = sbr.rel (0) target = $region77
  $region76: #{triple_grain_vq_forward.1} parent=0 // pred_region
    _
  $region77: #{triple_grain_vq_forward.1} parent=0 // pred_fallthru
    _
  // Predicated region
  $region78: #{triple_grain_vq_forward.1} parent=0 // pred_check
    _
  $region79: #{triple_grain_vq_forward.1} parent=0 // pred_check_branch
    %3564 = sbr.rel (0) target = $region81
  $region80: #{triple_grain_vq_forward.1} parent=0 // pred_region
    _
  $region81: #{triple_grain_vq_forward.1} parent=0 // pred_fallthru
    _
  // Predicated region
  $region82: #{triple_grain_vq_forward.1} parent=0 // pred_check
    _
  $region83: #{triple_grain_vq_forward.1} parent=0 // pred_check_branch
    %3566 = sbr.rel (0) target = $region85
  $region84: #{triple_grain_vq_forward.1} parent=0 // pred_region
    _
  $region85: #{triple_grain_vq_forward.1} parent=0 // pred_fallthru
    _
  // Predicated region
  $region86: #{triple_grain_vq_forward.1} parent=0 // pred_check
    _
  $region87: #{triple_grain_vq_forward.1} parent=0 // pred_check_branch
    %3568 = sbr.rel (0) target = $region89
  $region88: #{triple_grain_vq_forward.1} parent=0 // pred_region
    _
  $region89: #{triple_grain_vq_forward.1} parent=0 // pred_fallthru
    _

</llo_original>
